<compile_context>
chip_gen: v5e
topology: v5e:2x2
jax: 0.10.0
libtpu: 0.0.40
codegen_flags: <defaults>
</compile_context>

<pallas_src>
import jax
import jax.numpy as jnp
from jax.experimental import pallas as pl
from jax.experimental.pallas import tpu as pltpu


# ----------------------------------------------------------------------------
# Fused Pallas kernel: conv3x3+ReLU -> conv3x3+ReLU -> conv1x1+sigmoid (per image)
# ----------------------------------------------------------------------------
def fused_seg_kernel(x_ref, w1_ref, b1_ref, w2_ref, b2_ref, w3_ref, b3_ref,
                     o_ref, xp_ref, hp_ref):
    """
    x_ref:  (1, H, W, Cin)      f32  unpadded NHWC image
    w1_ref: (9*Cin,  Chid)      bf16 (im2col-reshaped 3x3 weights, (dh, dw, cin) order)
    b1_ref: (1, Chid)           f32
    w2_ref: (9*Chid, Chid)      bf16
    b2_ref: (1, Chid)           f32
    w3_ref: (Chid, Cls)         bf16 (1x1 head)
    b3_ref: (1, Cls)            f32
    o_ref:  (1, H, W, Cls)      f32
    xp_ref: (H+2, W+2, Cin)     f32 VMEM scratch (zero-padded input)
    hp_ref: (H+2, W+2, Chid)    f32 VMEM scratch (zero-padded hidden activation)
    """
    H, W, Cls = o_ref.shape[1], o_ref.shape[2], o_ref.shape[3]
    Chid = b1_ref.shape[1]

    def im2col(padded):
        # padded: (H+2, W+2, C) -> (H*W, 9*C), taps ordered (dh, dw, c) to match the
        # row-major reshape of the (3, 3, C, Cout) weights.
        taps = [padded[dh:dh + H, dw:dw + W, :]
                for dh in range(3) for dw in range(3)]
        C = padded.shape[-1]
        return jnp.concatenate(taps, axis=-1).reshape(H * W, 9 * C)

    # ---- stage 0: zero-pad the input inside VMEM (no extra HBM pad pass) ----
    xp_ref[...] = jnp.zeros_like(xp_ref)
    xp_ref[1:H + 1, 1:W + 1, :] = x_ref[0]

    # ---- encoder stage: 3x3 conv + bias + ReLU as ONE MXU matmul ----
    p1 = im2col(xp_ref[...]).astype(jnp.bfloat16)          # (H*W, 9*Cin)
    h1 = jnp.dot(p1, w1_ref[...], preferred_element_type=jnp.float32)
    h1 = jnp.maximum(h1 + b1_ref[0], 0.0)                  # f32 epilogue

    # intermediate activation stays in VMEM, re-padded for the next conv
    hp_ref[...] = jnp.zeros_like(hp_ref)
    hp_ref[1:H + 1, 1:W + 1, :] = h1.reshape(H, W, Chid)

    # ---- decoder stage: 3x3 conv + bias + ReLU ----
    p2 = im2col(hp_ref[...]).astype(jnp.bfloat16)          # (H*W, 9*Chid)
    h2 = jnp.dot(p2, w2_ref[...], preferred_element_type=jnp.float32)
    h2 = jnp.maximum(h2 + b2_ref[0], 0.0)

    # ---- segmentation head: 1x1 conv + bias + sigmoid ----
    y = jnp.dot(h2.astype(jnp.bfloat16), w3_ref[...],
                preferred_element_type=jnp.float32) + b3_ref[0]
    y = jax.nn.sigmoid(y)
    # TODO(synk): Cls=3 makes this store lane-sparse; at scale pack (W, Cls) into a
    #             lane-dense last dim. The head output is tiny here (6 KB total).
    o_ref[...] = y.reshape(1, H, W, Cls).astype(o_ref.dtype)


# ----------------------------------------------------------------------------
# pallas_call wrapper (NHWC in, NHWC out)
# ----------------------------------------------------------------------------
def fused_forward_nhwc(x_nhwc, params):
    N, H, W, Cin = x_nhwc.shape
    Chid = params["b1"].shape[1]
    Cls = params["b3"].shape[1]

    # im2col-layout weights, cast to bf16 (halves weight DMA, MXU-native on all gens).
    w1 = params["w1"].reshape(9 * Cin, Chid).astype(jnp.bfloat16)
    w2 = params["w2"].reshape(9 * Chid, Chid).astype(jnp.bfloat16)
    w3 = params["w3"].astype(jnp.bfloat16)

    return pl.pallas_call(
        fused_seg_kernel,
        out_shape=jax.ShapeDtypeStruct((N, H, W, Cls), jnp.float32),
        grid=(N,),
        in_specs=[
            pl.BlockSpec((1, H, W, Cin), lambda n: (n, 0, 0, 0)),
            pl.BlockSpec((9 * Cin, Chid), lambda n: (0, 0)),
            pl.BlockSpec((1, Chid), lambda n: (0, 0)),
            pl.BlockSpec((9 * Chid, Chid), lambda n: (0, 0)),
            pl.BlockSpec((1, Chid), lambda n: (0, 0)),
            pl.BlockSpec((Chid, Cls), lambda n: (0, 0)),
            pl.BlockSpec((1, Cls), lambda n: (0, 0)),
        ],
        out_specs=pl.BlockSpec((1, H, W, Cls), lambda n: (n, 0, 0, 0)),
        scratch_shapes=[
            pltpu.VMEM((H + 2, W + 2, Cin), jnp.float32),
            pltpu.VMEM((H + 2, W + 2, Chid), jnp.float32),
        ],
        compiler_params=pltpu.CompilerParams(
            dimension_semantics=("parallel",)),   # batch shards across v7x's 2 TCs
    )(x_nhwc, w1, params["b1"], w2, params["b2"], w3, params["b3"])


# ----------------------------------------------------------------------------
# Model: deterministic params + forward (NCHW in, NCHW out, like PyTorch)
# ----------------------------------------------------------------------------
def init_params(key, in_channels, hidden, classes):
    k1, k2, k3 = jax.random.split(key, 3)
    scale = 0.1
    return {
        "w1": scale * jax.random.normal(k1, (3, 3, in_channels, hidden), jnp.float32),
        "b1": jnp.zeros((1, hidden), jnp.float32),
        "w2": scale * jax.random.normal(k2, (3, 3, hidden, hidden), jnp.float32),
        "b2": jnp.zeros((1, hidden), jnp.float32),
        "w3": scale * jax.random.normal(k3, (hidden, classes), jnp.float32),
        "b3": jnp.zeros((1, classes), jnp.float32),
    }


@jax.jit
def my_model_forward(params, x_nchw):
    # NCHW -> NHWC (channels on the 128-lane axis).
    # TODO(synk): accept/emit NHWC at the model boundary to drop both transposes.
    x = jnp.transpose(x_nchw, (0, 2, 3, 1)).astype(jnp.float32)
    out = fused_forward_nhwc(x, params)                      # fused encoder/decoder/head
    return jnp.transpose(out, (0, 3, 1, 2))                  # NHWC -> NCHW (N, classes, H, W)


# Pure-JAX reference (mirrors the kernel's bf16 MXU operands / f32 accumulation).
def _reference_forward(params, x_nchw):
    x = jnp.transpose(x_nchw, (0, 2, 3, 1)).astype(jnp.float32)

    def conv3x3(h, w, b):
        y = jax.lax.conv_general_dilated(
            h.astype(jnp.bfloat16), w.astype(jnp.bfloat16),
            window_strides=(1, 1), padding="SAME",
            dimension_numbers=("NHWC", "HWIO", "NHWC"),
            preferred_element_type=jnp.float32)
        return jnp.maximum(y + b[0], 0.0)

    h = conv3x3(x, params["w1"], params["b1"])
    h = conv3x3(h, params["w2"], params["b2"])
    w3 = params["w3"].astype(jnp.bfloat16)[None, None]       # (1,1,Chid,Cls)
    y = jax.lax.conv_general_dilated(
        h.astype(jnp.bfloat16), w3, (1, 1), "VALID",
        dimension_numbers=("NHWC", "HWIO", "NHWC"),
        preferred_element_type=jnp.float32)
    y = jax.nn.sigmoid(y + params["b3"][0])
    return jnp.transpose(y, (0, 3, 1, 2))


if __name__ == "__main__":
    key = jax.random.PRNGKey(0)
    k_param, k_x = jax.random.split(key)

    batch, in_channels, H, W = 2, 4, 16, 16
    hidden, classes = 32, 3

    params = init_params(k_param, in_channels, hidden, classes)
    x = jax.random.normal(k_x, (batch, in_channels, H, W), jnp.float32)

    out = my_model_forward(params, x)
    out = jax.block_until_ready(out)

    ref = _reference_forward(params, x)
    assert out.shape == (batch, classes, H, W), out.shape
    err = float(jnp.max(jnp.abs(out - ref)))
    assert err < 2e-3, f"mismatch vs reference: {err}"

    print("KERNEL_OK")
</pallas_src>

<mosaic_0001>
module attributes {stable_mosaic.version = 11 : i64} {
  func.func @fused_seg_kernel(%arg0: i32, %arg1: memref<1x16x16x4xf32, #tpu.memory_space<vmem>>, %arg2: memref<36x32xbf16, #tpu.memory_space<vmem>>, %arg3: memref<1x32xf32, #tpu.memory_space<vmem>>, %arg4: memref<288x32xbf16, #tpu.memory_space<vmem>>, %arg5: memref<1x32xf32, #tpu.memory_space<vmem>>, %arg6: memref<32x3xbf16, #tpu.memory_space<vmem>>, %arg7: memref<1x3xf32, #tpu.memory_space<vmem>>, %arg8: memref<1x16x16x3xf32, #tpu.memory_space<vmem>>, %arg9: memref<18x18x4xf32, #tpu.memory_space<vmem>>, %arg10: memref<18x18x32xf32, #tpu.memory_space<vmem>>) attributes {dimension_semantics = [#tpu.dimension_semantics<parallel>], iteration_bounds = array<i64: 2>, scalar_prefetch = 0 : i64, scratch_operands = 2 : i64, tpu.core_type = #tpu.core_type<tc>, window_params = [{transform_indices = @transform_0, window_bounds = array<i64: 1, 16, 16, 4>}, {pipeline_mode = #tpu.pipeline_mode<synchronous>, transform_indices = @transform_1, window_bounds = array<i64: 36, 32>}, {pipeline_mode = #tpu.pipeline_mode<synchronous>, transform_indices = @transform_2, window_bounds = array<i64: 1, 32>}, {pipeline_mode = #tpu.pipeline_mode<synchronous>, transform_indices = @transform_3, window_bounds = array<i64: 288, 32>}, {pipeline_mode = #tpu.pipeline_mode<synchronous>, transform_indices = @transform_4, window_bounds = array<i64: 1, 32>}, {pipeline_mode = #tpu.pipeline_mode<synchronous>, transform_indices = @transform_5, window_bounds = array<i64: 32, 3>}, {pipeline_mode = #tpu.pipeline_mode<synchronous>, transform_indices = @transform_6, window_bounds = array<i64: 1, 3>}, {transform_indices = @transform_7, window_bounds = array<i64: 1, 16, 16, 3>}]} {
    %cst = arith.constant 0.000000e+00 : f32
    %0 = vector.broadcast %cst : f32 to vector<18x18x4xf32>
    %c0 = arith.constant 0 : index
    %c0_0 = arith.constant 0 : index
    %c0_1 = arith.constant 0 : index
    %1 = vector.load %arg9[%c0, %c0_0, %c0_1] : memref<18x18x4xf32, #tpu.memory_space<vmem>>, vector<18x18x4xf32>
    tpu.vector_store %arg9[%c0, %c0_0, %c0_1], %0 {strides = array<i32>} : memref<18x18x4xf32, #tpu.memory_space<vmem>>, vector<18x18x4xf32>,
    %c0_2 = arith.constant 0 : index
    %c0_3 = arith.constant 0 : index
    %c0_4 = arith.constant 0 : index
    %c0_5 = arith.constant 0 : index
    %2 = vector.load %arg1[%c0_2, %c0_3, %c0_4, %c0_5] : memref<1x16x16x4xf32, #tpu.memory_space<vmem>>, vector<1x16x16x4xf32>
    %3 = vector.shape_cast %2 : vector<1x16x16x4xf32> to vector<16x16x4xf32>
    %c1 = arith.constant 1 : index
    %c1_6 = arith.constant 1 : index
    %c0_7 = arith.constant 0 : index
    %4 = vector.load %arg9[%c1, %c1_6, %c0_7] : memref<18x18x4xf32, #tpu.memory_space<vmem>>, vector<16x16x4xf32>
    tpu.vector_store %arg9[%c1, %c1_6, %c0_7], %3 {strides = array<i32>} : memref<18x18x4xf32, #tpu.memory_space<vmem>>, vector<16x16x4xf32>,
    %c0_8 = arith.constant 0 : index
    %c0_9 = arith.constant 0 : index
    %c0_10 = arith.constant 0 : index
    %5 = vector.load %arg9[%c0_8, %c0_9, %c0_10] : memref<18x18x4xf32, #tpu.memory_space<vmem>>, vector<18x18x4xf32>
    %6 = vector.extract_strided_slice %5 {offsets = [0, 0, 0], sizes = [16, 16, 4], strides = [1, 1, 1]} : vector<18x18x4xf32> to vector<16x16x4xf32>
    %7 = vector.extract_strided_slice %5 {offsets = [0, 1, 0], sizes = [16, 16, 4], strides = [1, 1, 1]} : vector<18x18x4xf32> to vector<16x16x4xf32>
    %8 = vector.extract_strided_slice %5 {offsets = [0, 2, 0], sizes = [16, 16, 4], strides = [1, 1, 1]} : vector<18x18x4xf32> to vector<16x16x4xf32>
    %9 = vector.extract_strided_slice %5 {offsets = [1, 0, 0], sizes = [16, 16, 4], strides = [1, 1, 1]} : vector<18x18x4xf32> to vector<16x16x4xf32>
    %10 = vector.extract_strided_slice %5 {offsets = [1, 1, 0], sizes = [16, 16, 4], strides = [1, 1, 1]} : vector<18x18x4xf32> to vector<16x16x4xf32>
    %11 = vector.extract_strided_slice %5 {offsets = [1, 2, 0], sizes = [16, 16, 4], strides = [1, 1, 1]} : vector<18x18x4xf32> to vector<16x16x4xf32>
    %12 = vector.extract_strided_slice %5 {offsets = [2, 0, 0], sizes = [16, 16, 4], strides = [1, 1, 1]} : vector<18x18x4xf32> to vector<16x16x4xf32>
    %13 = vector.extract_strided_slice %5 {offsets = [2, 1, 0], sizes = [16, 16, 4], strides = [1, 1, 1]} : vector<18x18x4xf32> to vector<16x16x4xf32>
    %14 = vector.extract_strided_slice %5 {offsets = [2, 2, 0], sizes = [16, 16, 4], strides = [1, 1, 1]} : vector<18x18x4xf32> to vector<16x16x4xf32>
    %15 = tpu.concatenate %6, %7, %8, %9, %10, %11, %12, %13, %14 in 2 : vector<16x16x4xf32>, vector<16x16x4xf32>, vector<16x16x4xf32>, vector<16x16x4xf32>, vector<16x16x4xf32>, vector<16x16x4xf32>, vector<16x16x4xf32>, vector<16x16x4xf32>, vector<16x16x4xf32> -> vector<16x16x36xf32>
    %16 = vector.shape_cast %15 : vector<16x16x36xf32> to vector<256x36xf32>
    %17 = arith.truncf %16 : vector<256x36xf32> to vector<256x36xbf16>
    %c0_11 = arith.constant 0 : index
    %c0_12 = arith.constant 0 : index
    %18 = vector.load %arg2[%c0_11, %c0_12] : memref<36x32xbf16, #tpu.memory_space<vmem>>, vector<36x32xbf16>
    %cst_13 = arith.constant dense<0.000000e+00> : vector<256x32xf32>
    %19 = tpu.matmul %17, %18, %cst_13 {dimension_numbers = #tpu.dot_dimension_numbers<[1], [0], [0], [1], [0, 0, 1, 1], [], []>} : vector<256x36xbf16>, vector<36x32xbf16>, vector<256x32xf32> -> vector<256x32xf32>
    %c0_14 = arith.constant 0 : index
    %c0_15 = arith.constant 0 : index
    %20 = vector.load %arg3[%c0_14, %c0_15] : memref<1x32xf32, #tpu.memory_space<vmem>>, vector<1x32xf32>
    %21 = vector.shape_cast %20 : vector<1x32xf32> to vector<32xf32>
    %22 = vector.shape_cast %21 : vector<32xf32> to vector<1x32xf32>
    %23 = vector.broadcast %22 : vector<1x32xf32> to vector<256x32xf32>
    %24 = arith.addf %19, %23 : vector<256x32xf32>
    %cst_16 = arith.constant 0.000000e+00 : f32
    %25 = vector.broadcast %cst_16 : f32 to vector<256x32xf32>
    %26 = arith.maximumf %24, %25 : vector<256x32xf32>
    %cst_17 = arith.constant 0.000000e+00 : f32
    %27 = vector.broadcast %cst_17 : f32 to vector<18x18x32xf32>
    %c0_18 = arith.constant 0 : index
    %c0_19 = arith.constant 0 : index
    %c0_20 = arith.constant 0 : index
    %28 = vector.load %arg10[%c0_18, %c0_19, %c0_20] : memref<18x18x32xf32, #tpu.memory_space<vmem>>, vector<18x18x32xf32>
    tpu.vector_store %arg10[%c0_18, %c0_19, %c0_20], %27 {strides = array<i32>} : memref<18x18x32xf32, #tpu.memory_space<vmem>>, vector<18x18x32xf32>,
    %29 = vector.shape_cast %26 : vector<256x32xf32> to vector<16x16x32xf32>
    %c1_21 = arith.constant 1 : index
    %c1_22 = arith.constant 1 : index
    %c0_23 = arith.constant 0 : index
    %30 = vector.load %arg10[%c1_21, %c1_22, %c0_23] : memref<18x18x32xf32, #tpu.memory_space<vmem>>, vector<16x16x32xf32>
    tpu.vector_store %arg10[%c1_21, %c1_22, %c0_23], %29 {strides = array<i32>} : memref<18x18x32xf32, #tpu.memory_space<vmem>>, vector<16x16x32xf32>,
    %c0_24 = arith.constant 0 : index
    %c0_25 = arith.constant 0 : index
    %c0_26 = arith.constant 0 : index
    %31 = vector.load %arg10[%c0_24, %c0_25, %c0_26] : memref<18x18x32xf32, #tpu.memory_space<vmem>>, vector<18x18x32xf32>
    %32 = vector.extract_strided_slice %31 {offsets = [0, 0, 0], sizes = [16, 16, 32], strides = [1, 1, 1]} : vector<18x18x32xf32> to vector<16x16x32xf32>
    %33 = vector.extract_strided_slice %31 {offsets = [0, 1, 0], sizes = [16, 16, 32], strides = [1, 1, 1]} : vector<18x18x32xf32> to vector<16x16x32xf32>
    %34 = vector.extract_strided_slice %31 {offsets = [0, 2, 0], sizes = [16, 16, 32], strides = [1, 1, 1]} : vector<18x18x32xf32> to vector<16x16x32xf32>
    %35 = vector.extract_strided_slice %31 {offsets = [1, 0, 0], sizes = [16, 16, 32], strides = [1, 1, 1]} : vector<18x18x32xf32> to vector<16x16x32xf32>
    %36 = vector.extract_strided_slice %31 {offsets = [1, 1, 0], sizes = [16, 16, 32], strides = [1, 1, 1]} : vector<18x18x32xf32> to vector<16x16x32xf32>
    %37 = vector.extract_strided_slice %31 {offsets = [1, 2, 0], sizes = [16, 16, 32], strides = [1, 1, 1]} : vector<18x18x32xf32> to vector<16x16x32xf32>
    %38 = vector.extract_strided_slice %31 {offsets = [2, 0, 0], sizes = [16, 16, 32], strides = [1, 1, 1]} : vector<18x18x32xf32> to vector<16x16x32xf32>
    %39 = vector.extract_strided_slice %31 {offsets = [2, 1, 0], sizes = [16, 16, 32], strides = [1, 1, 1]} : vector<18x18x32xf32> to vector<16x16x32xf32>
    %40 = vector.extract_strided_slice %31 {offsets = [2, 2, 0], sizes = [16, 16, 32], strides = [1, 1, 1]} : vector<18x18x32xf32> to vector<16x16x32xf32>
    %41 = tpu.concatenate %32, %33, %34, %35, %36, %37, %38, %39, %40 in 2 : vector<16x16x32xf32>, vector<16x16x32xf32>, vector<16x16x32xf32>, vector<16x16x32xf32>, vector<16x16x32xf32>, vector<16x16x32xf32>, vector<16x16x32xf32>, vector<16x16x32xf32>, vector<16x16x32xf32> -> vector<16x16x288xf32>
    %42 = vector.shape_cast %41 : vector<16x16x288xf32> to vector<256x288xf32>
    %43 = arith.truncf %42 : vector<256x288xf32> to vector<256x288xbf16>
    %c0_27 = arith.constant 0 : index
    %c0_28 = arith.constant 0 : index
    %44 = vector.load %arg4[%c0_27, %c0_28] : memref<288x32xbf16, #tpu.memory_space<vmem>>, vector<288x32xbf16>
    %cst_29 = arith.constant dense<0.000000e+00> : vector<256x32xf32>
    %45 = tpu.matmul %43, %44, %cst_29 {dimension_numbers = #tpu.dot_dimension_numbers<[1], [0], [0], [1], [0, 0, 1, 1], [], []>} : vector<256x288xbf16>, vector<288x32xbf16>, vector<256x32xf32> -> vector<256x32xf32>
    %c0_30 = arith.constant 0 : index
    %c0_31 = arith.constant 0 : index
    %46 = vector.load %arg5[%c0_30, %c0_31] : memref<1x32xf32, #tpu.memory_space<vmem>>, vector<1x32xf32>
    %47 = vector.shape_cast %46 : vector<1x32xf32> to vector<32xf32>
    %48 = vector.shape_cast %47 : vector<32xf32> to vector<1x32xf32>
    %49 = vector.broadcast %48 : vector<1x32xf32> to vector<256x32xf32>
    %50 = arith.addf %45, %49 : vector<256x32xf32>
    %cst_32 = arith.constant 0.000000e+00 : f32
    %51 = vector.broadcast %cst_32 : f32 to vector<256x32xf32>
    %52 = arith.maximumf %50, %51 : vector<256x32xf32>
    %53 = arith.truncf %52 : vector<256x32xf32> to vector<256x32xbf16>
    %c0_33 = arith.constant 0 : index
    %c0_34 = arith.constant 0 : index
    %54 = vector.load %arg6[%c0_33, %c0_34] : memref<32x3xbf16, #tpu.memory_space<vmem>>, vector<32x3xbf16>
    %cst_35 = arith.constant dense<0.000000e+00> : vector<256x3xf32>
    %55 = tpu.matmul %53, %54, %cst_35 {dimension_numbers = #tpu.dot_dimension_numbers<[1], [0], [0], [1], [0, 0, 1, 1], [], []>} : vector<256x32xbf16>, vector<32x3xbf16>, vector<256x3xf32> -> vector<256x3xf32>
    %c0_36 = arith.constant 0 : index
    %c0_37 = arith.constant 0 : index
    %56 = vector.load %arg7[%c0_36, %c0_37] : memref<1x3xf32, #tpu.memory_space<vmem>>, vector<1x3xf32>
    %57 = vector.shape_cast %56 : vector<1x3xf32> to vector<3xf32>
    %58 = vector.shape_cast %57 : vector<3xf32> to vector<1x3xf32>
    %59 = vector.broadcast %58 : vector<1x3xf32> to vector<256x3xf32>
    %60 = arith.addf %55, %59 : vector<256x3xf32>
    %61 = arith.negf %60 : vector<256x3xf32>
    %62 = math.exp %61 : vector<256x3xf32>
    %cst_38 = arith.constant 1.000000e+00 : f32
    %63 = vector.broadcast %cst_38 : f32 to vector<256x3xf32>
    %64 = arith.addf %63, %62 : vector<256x3xf32>
    %65 = arith.divf %63, %64 : vector<256x3xf32>
    %66 = vector.shape_cast %65 : vector<256x3xf32> to vector<1x16x16x3xf32>
    %c0_39 = arith.constant 0 : index
    %c0_40 = arith.constant 0 : index
    %c0_41 = arith.constant 0 : index
    %c0_42 = arith.constant 0 : index
    %67 = vector.load %arg8[%c0_39, %c0_40, %c0_41, %c0_42] : memref<1x16x16x3xf32, #tpu.memory_space<vmem>>, vector<1x16x16x3xf32>
    tpu.vector_store %arg8[%c0_39, %c0_40, %c0_41, %c0_42], %66 {strides = array<i32>} : memref<1x16x16x3xf32, #tpu.memory_space<vmem>>, vector<1x16x16x3xf32>,
    return
  }
  func.func @transform_0(%arg0: i32) -> (i32, i32, i32, i32) {
    %c0_i32 = arith.constant 0 : i32
    %c0_i32_0 = arith.constant 0 : i32
    %c0_i32_1 = arith.constant 0 : i32
    %c0_i32_2 = arith.constant 0 : i32
    return %arg0, %c0_i32, %c0_i32_0, %c0_i32_1 : i32, i32, i32, i32
  }
  func.func @transform_1(%arg0: i32) -> (i32, i32) {
    %c0_i32 = arith.constant 0 : i32
    %c0_i32_0 = arith.constant 0 : i32
    %c0_i32_1 = arith.constant 0 : i32
    return %c0_i32, %c0_i32_0 : i32, i32
  }
  func.func @transform_2(%arg0: i32) -> (i32, i32) {
    %c0_i32 = arith.constant 0 : i32
    %c0_i32_0 = arith.constant 0 : i32
    %c0_i32_1 = arith.constant 0 : i32
    return %c0_i32, %c0_i32_0 : i32, i32
  }
  func.func @transform_3(%arg0: i32) -> (i32, i32) {
    %c0_i32 = arith.constant 0 : i32
    %c0_i32_0 = arith.constant 0 : i32
    %c0_i32_1 = arith.constant 0 : i32
    return %c0_i32, %c0_i32_0 : i32, i32
  }
  func.func @transform_4(%arg0: i32) -> (i32, i32) {
    %c0_i32 = arith.constant 0 : i32
    %c0_i32_0 = arith.constant 0 : i32
    %c0_i32_1 = arith.constant 0 : i32
    return %c0_i32, %c0_i32_0 : i32, i32
  }
  func.func @transform_5(%arg0: i32) -> (i32, i32) {
    %c0_i32 = arith.constant 0 : i32
    %c0_i32_0 = arith.constant 0 : i32
    %c0_i32_1 = arith.constant 0 : i32
    return %c0_i32, %c0_i32_0 : i32, i32
  }
  func.func @transform_6(%arg0: i32) -> (i32, i32) {
    %c0_i32 = arith.constant 0 : i32
    %c0_i32_0 = arith.constant 0 : i32
    %c0_i32_1 = arith.constant 0 : i32
    return %c0_i32, %c0_i32_0 : i32, i32
  }
  func.func @transform_7(%arg0: i32) -> (i32, i32, i32, i32) {
    %c0_i32 = arith.constant 0 : i32
    %c0_i32_0 = arith.constant 0 : i32
    %c0_i32_1 = arith.constant 0 : i32
    %c0_i32_2 = arith.constant 0 : i32
    return %arg0, %c0_i32, %c0_i32_0, %c0_i32_1 : i32, i32, i32, i32
  }
}

</mosaic_0001>

<llo_original>
// kernel: my_model_forward.1
$region0: #{my_model_forward.1}
  #allocation0 [shape = 'u32[]', space=smem, size = 0x4, offset = 0x4, fixed_abs, tag = 'smem constant byte address 0x4 - core index']
  #allocation1 [shape = 'u32[72,128]{1,0:T(1,128)}', space=vmem, size = 0x9000, scoped, tag = 'internal scratch']
  #allocation2 [shape = 'f32[18,18,4]{2,1,0:T(8,128)}', space=vmem, size = 0x36000, scoped, tag = 'scratch operand']
  #allocation3 [shape = 'f32[18,18,32]{2,1,0:T(8,128)}', space=vmem, size = 0x36000, scoped, tag = 'scratch operand']
  %s0 = inlined_call_operand.vmem [shape: f32[2,16,16,4], index: 0, kind: input, shape index: {}]
  %s1 = inlined_call_operand.vmem [shape: bf16[36,32], index: 1, kind: input, shape index: {}]
  %s2 = inlined_call_operand.vmem [shape: f32[1,32], index: 2, kind: input, shape index: {}]
  %s3 = inlined_call_operand.vmem [shape: bf16[288,32], index: 3, kind: input, shape index: {}]
  %s4 = inlined_call_operand.vmem [shape: f32[1,32], index: 4, kind: input, shape index: {}]
  %s5 = inlined_call_operand.vmem [shape: bf16[32,3], index: 5, kind: input, shape index: {}]
  %s6 = inlined_call_operand.vmem [shape: f32[1,3], index: 6, kind: input, shape index: {}]
  %s7 = inlined_call_operand.vmem [shape: f32[2,16,16,3], index: 7, kind: output, shape index: {}]
  %s8 = sld [smem:[#allocation0]]
  $region61: #{my_model_forward.1} parent=0
    _
  %s10 = ssub.s32 1, %s8
  %s11 = scalar_select 0, %s10, %s8
  loop: start=0, step=1, limit=4
  $region2: #{my_model_forward.1} parent=0 // loop_pre_header
    _
  $region3: #{my_model_forward.1} parent=0 // loop_header
    %s13 = sphi 0, %s17
    %p14 = scmp.ge.s32.totalorder %s13, 4
    %s23 = sphi 0, %s25
    %s26 = sphi 0, %s23
    %s27 = sphi 0, %s26
    %s43 = sphi 0, %s27
    %s47 = sphi 0, %s47
    %s49 = sphi 0, %s47
    %s50 = sphi 0, %s49
    %s64 = sphi 0, %s50
    %s68 = sphi 0, %s68
    %s70 = sphi 0, %s68
    %s71 = sphi 0, %s70
    %s85 = sphi 0, %s71
    %s89 = sphi 0, %s89
    %s91 = sphi 0, %s89
    %s92 = sphi 0, %s91
    %s106 = sphi 0, %s92
    %s110 = sphi 0, %s110
    %s112 = sphi 0, %s110
    %s113 = sphi 0, %s112
    %s127 = sphi 0, %s113
    %s131 = sphi 0, %s131
    %s133 = sphi 0, %s131
    %s134 = sphi 0, %s133
    %s148 = sphi 0, %s134
    %s152 = sphi 0, %s152
    %s154 = sphi 0, %s152
    %s155 = sphi 0, %s154
    %s169 = sphi 0, %s155
    %s175 = sphi 0, %s177
    %s178 = sphi 0, %s175
    %s179 = sphi 0, %s178
    %s195 = sphi 0, %s179
  $region4: #{my_model_forward.1} parent=0 // loop_header_branch
    %16 = sbr.rel (%p14) target = $region8
  $region5: #{my_model_forward.1} parent=0 // loop_body
    %s18 = ssub.s32 %s13, 1
    %s19 = ssub.s32 %s13, 2
    %s20 = sadd.s32 %s13, 1
    %s21 = ssub.s32 %s13, %s20
    %p22 = scmp.eq.s32.totalorder %s21, 0
    %s24 = sadd.s32 %s23, 1
    %s25 = scalar_select %p22, %s23, %s24
    %p28 = pneg %p22
    %p29 = scmp.eq.s32.totalorder %s13, 1
    %p30 = por %p28, %p29
    %p31 = scmp.ne.s32.totalorder %s23, %s26
    %p32 = scmp.eq.s32.totalorder %s13, 0
    %p33 = por %p31, %p32
    %p34 = scmp.ne.s32.totalorder %s23, %s26
    %p35 = scmp.eq.s32.totalorder %s18, 1
    %p36 = por %p34, %p35
    %p37 = scmp.ne.s32.totalorder %s26, %s27
    %p38 = scmp.eq.s32.totalorder %s18, 0
    %p39 = por %p37, %p38
    %p40 = scmp.ne.s32.totalorder %s26, %s27
    %p41 = scmp.eq.s32.totalorder %s19, 1
    %p42 = por %p40, %p41
    %p44 = scmp.ne.s32.totalorder %s27, %s43
    %p45 = scmp.eq.s32.totalorder %s19, 0
    %p46 = por %p44, %p45
    %s48 = sadd.s32 %s47, 1
    %p51 = scmp.eq.s32.totalorder %s13, 1
    %p52 = scmp.ne.s32.totalorder %s47, %s49
    %p53 = scmp.eq.s32.totalorder %s13, 0
    %p54 = por %p52, %p53
    %p55 = scmp.ne.s32.totalorder %s47, %s49
    %p56 = scmp.eq.s32.totalorder %s18, 1
    %p57 = por %p55, %p56
    %p58 = scmp.ne.s32.totalorder %s49, %s50
    %p59 = scmp.eq.s32.totalorder %s18, 0
    %p60 = por %p58, %p59
    %p61 = scmp.ne.s32.totalorder %s49, %s50
    %p62 = scmp.eq.s32.totalorder %s19, 1
    %p63 = por %p61, %p62
    %p65 = scmp.ne.s32.totalorder %s50, %s64
    %p66 = scmp.eq.s32.totalorder %s19, 0
    %p67 = por %p65, %p66
    %s69 = sadd.s32 %s68, 1
    %p72 = scmp.eq.s32.totalorder %s13, 1
    %p73 = scmp.ne.s32.totalorder %s68, %s70
    %p74 = scmp.eq.s32.totalorder %s13, 0
    %p75 = por %p73, %p74
    %p76 = scmp.ne.s32.totalorder %s68, %s70
    %p77 = scmp.eq.s32.totalorder %s18, 1
    %p78 = por %p76, %p77
    %p79 = scmp.ne.s32.totalorder %s70, %s71
    %p80 = scmp.eq.s32.totalorder %s18, 0
    %p81 = por %p79, %p80
    %p82 = scmp.ne.s32.totalorder %s70, %s71
    %p83 = scmp.eq.s32.totalorder %s19, 1
    %p84 = por %p82, %p83
    %p86 = scmp.ne.s32.totalorder %s71, %s85
    %p87 = scmp.eq.s32.totalorder %s19, 0
    %p88 = por %p86, %p87
    %s90 = sadd.s32 %s89, 1
    %p93 = scmp.eq.s32.totalorder %s13, 1
    %p94 = scmp.ne.s32.totalorder %s89, %s91
    %p95 = scmp.eq.s32.totalorder %s13, 0
    %p96 = por %p94, %p95
    %p97 = scmp.ne.s32.totalorder %s89, %s91
    %p98 = scmp.eq.s32.totalorder %s18, 1
    %p99 = por %p97, %p98
    %p100 = scmp.ne.s32.totalorder %s91, %s92
    %p101 = scmp.eq.s32.totalorder %s18, 0
    %p102 = por %p100, %p101
    %p103 = scmp.ne.s32.totalorder %s91, %s92
    %p104 = scmp.eq.s32.totalorder %s19, 1
    %p105 = por %p103, %p104
    %p107 = scmp.ne.s32.totalorder %s92, %s106
    %p108 = scmp.eq.s32.totalorder %s19, 0
    %p109 = por %p107, %p108
    %s111 = sadd.s32 %s110, 1
    %p114 = scmp.eq.s32.totalorder %s13, 1
    %p115 = scmp.ne.s32.totalorder %s110, %s112
    %p116 = scmp.eq.s32.totalorder %s13, 0
    %p117 = por %p115, %p116
    %p118 = scmp.ne.s32.totalorder %s110, %s112
    %p119 = scmp.eq.s32.totalorder %s18, 1
    %p120 = por %p118, %p119
    %p121 = scmp.ne.s32.totalorder %s112, %s113
    %p122 = scmp.eq.s32.totalorder %s18, 0
    %p123 = por %p121, %p122
    %p124 = scmp.ne.s32.totalorder %s112, %s113
    %p125 = scmp.eq.s32.totalorder %s19, 1
    %p126 = por %p124, %p125
    %p128 = scmp.ne.s32.totalorder %s113, %s127
    %p129 = scmp.eq.s32.totalorder %s19, 0
    %p130 = por %p128, %p129
    %s132 = sadd.s32 %s131, 1
    %p135 = scmp.eq.s32.totalorder %s13, 1
    %p136 = scmp.ne.s32.totalorder %s131, %s133
    %p137 = scmp.eq.s32.totalorder %s13, 0
    %p138 = por %p136, %p137
    %p139 = scmp.ne.s32.totalorder %s131, %s133
    %p140 = scmp.eq.s32.totalorder %s18, 1
    %p141 = por %p139, %p140
    %p142 = scmp.ne.s32.totalorder %s133, %s134
    %p143 = scmp.eq.s32.totalorder %s18, 0
    %p144 = por %p142, %p143
    %p145 = scmp.ne.s32.totalorder %s133, %s134
    %p146 = scmp.eq.s32.totalorder %s19, 1
    %p147 = por %p145, %p146
    %p149 = scmp.ne.s32.totalorder %s134, %s148
    %p150 = scmp.eq.s32.totalorder %s19, 0
    %p151 = por %p149, %p150
    %s153 = sadd.s32 %s152, 1
    %p156 = scmp.eq.s32.totalorder %s13, 1
    %p157 = scmp.ne.s32.totalorder %s152, %s154
    %p158 = scmp.eq.s32.totalorder %s13, 0
    %p159 = por %p157, %p158
    %p160 = scmp.ne.s32.totalorder %s152, %s154
    %p161 = scmp.eq.s32.totalorder %s18, 1
    %p162 = por %p160, %p161
    %p163 = scmp.ne.s32.totalorder %s154, %s155
    %p164 = scmp.eq.s32.totalorder %s18, 0
    %p165 = por %p163, %p164
    %p166 = scmp.ne.s32.totalorder %s154, %s155
    %p167 = scmp.eq.s32.totalorder %s19, 1
    %p168 = por %p166, %p167
    %p170 = scmp.ne.s32.totalorder %s155, %s169
    %p171 = scmp.eq.s32.totalorder %s19, 0
    %p172 = por %p170, %p171
    %s173 = ssub.s32 %s13, %s20
    %p174 = scmp.eq.s32.totalorder %s173, 0
    %s176 = sadd.s32 %s175, 1
    %s177 = scalar_select %p174, %s175, %s176
    %p180 = pneg %p174
    %p181 = scmp.eq.s32.totalorder %s13, 1
    %p182 = por %p180, %p181
    %p183 = scmp.ne.s32.totalorder %s175, %s178
    %p184 = scmp.eq.s32.totalorder %s13, 0
    %p185 = por %p183, %p184
    %p186 = scmp.ne.s32.totalorder %s175, %s178
    %p187 = scmp.eq.s32.totalorder %s18, 1
    %p188 = por %p186, %p187
    %p189 = scmp.ne.s32.totalorder %s178, %s179
    %p190 = scmp.eq.s32.totalorder %s18, 0
    %p191 = por %p189, %p190
    %p192 = scmp.ne.s32.totalorder %s178, %s179
    %p193 = scmp.eq.s32.totalorder %s19, 1
    %p194 = por %p192, %p193
    %p196 = scmp.ne.s32.totalorder %s179, %s195
    %p197 = scmp.eq.s32.totalorder %s19, 0
    %p198 = por %p196, %p197
    %p199 = scmp.le.s32.totalorder 1, %s13
    %p200 = scmp.lt.s32.totalorder %s13, 3
    %p201 = pnand %p199, %p200
    %p202 = pneg %p201
    // Predicated region
    $region9: #{my_model_forward.1} parent=5 // pred_check
      _
    $region10: #{my_model_forward.1} parent=5 // pred_check_branch
      %204 = sbr.rel (%p201) target = $region12
    $region11: #{my_model_forward.1} parent=5 // pred_region
      %s205 = ssub.s32 %s13, 1
      // Predicated region
      $region13: #{my_model_forward.1} parent=11 // pred_check
        %p206 = pneg %p60
      $region14: #{my_model_forward.1} parent=11 // pred_check_branch
        %208 = sbr.rel (%p206) target = $region16
      $region15: #{my_model_forward.1} parent=11 // pred_region
        _
      $region16: #{my_model_forward.1} parent=11 // pred_fallthru
        _
      // Predicated region
      $region17: #{my_model_forward.1} parent=11 // pred_check
        %p209 = pneg %p81
      $region18: #{my_model_forward.1} parent=11 // pred_check_branch
        %211 = sbr.rel (%p209) target = $region20
      $region19: #{my_model_forward.1} parent=11 // pred_region
        _
      $region20: #{my_model_forward.1} parent=11 // pred_fallthru
        _
      // Predicated region
      $region21: #{my_model_forward.1} parent=11 // pred_check
        %p212 = pneg %p102
      $region22: #{my_model_forward.1} parent=11 // pred_check_branch
        %214 = sbr.rel (%p212) target = $region24
      $region23: #{my_model_forward.1} parent=11 // pred_region
        _
      $region24: #{my_model_forward.1} parent=11 // pred_fallthru
        _
      // Predicated region
      $region25: #{my_model_forward.1} parent=11 // pred_check
        %p215 = pneg %p123
      $region26: #{my_model_forward.1} parent=11 // pred_check_branch
        %217 = sbr.rel (%p215) target = $region28
      $region27: #{my_model_forward.1} parent=11 // pred_region
        _
      $region28: #{my_model_forward.1} parent=11 // pred_fallthru
        _
      // Predicated region
      $region29: #{my_model_forward.1} parent=11 // pred_check
        %p218 = pneg %p144
      $region30: #{my_model_forward.1} parent=11 // pred_check_branch
        %220 = sbr.rel (%p218) target = $region32
      $region31: #{my_model_forward.1} parent=11 // pred_region
        _
      $region32: #{my_model_forward.1} parent=11 // pred_fallthru
        _
      // Predicated region
      $region33: #{my_model_forward.1} parent=11 // pred_check
        %p221 = pneg %p165
      $region34: #{my_model_forward.1} parent=11 // pred_check_branch
        %223 = sbr.rel (%p221) target = $region36
      $region35: #{my_model_forward.1} parent=11 // pred_region
        _
      $region36: #{my_model_forward.1} parent=11 // pred_fallthru
        _
    $region12: #{my_model_forward.1} parent=5 // pred_fallthru
      _
    %p224 = scmp.lt.s32.totalorder %s13, 2
    // Predicated region
    $region37: #{my_model_forward.1} parent=5 // pred_check
      %p225 = pneg %p224
    $region38: #{my_model_forward.1} parent=5 // pred_check_branch
      %227 = sbr.rel (%p225) target = $region40
    $region39: #{my_model_forward.1} parent=5 // pred_region
      // Predicated region
      $region41: #{my_model_forward.1} parent=39 // pred_check
        %p228 = pneg %p33
      $region42: #{my_model_forward.1} parent=39 // pred_check_branch
        %230 = sbr.rel (%p228) target = $region44
      $region43: #{my_model_forward.1} parent=39 // pred_region
        %p231 = scmp.lt.s32.totalorder %s13, 1
        %s232 = scalar_select %p231, %s13, 1
        %s233 = smul.addr %s232, 32
        %s234 = smul.addr %s233, 8
        %s235 = scalar_lea.vmem %s0, %s234
      $region44: #{my_model_forward.1} parent=39 // pred_fallthru
        _
    $region40: #{my_model_forward.1} parent=5 // pred_fallthru
      _
    %p236 = scmp.le.s32.totalorder 1, %s13
    %p237 = scmp.lt.s32.totalorder %s13, 3
    %p238 = pnand %p236, %p237
    %p239 = pneg %p238
    // Predicated region
    $region45: #{my_model_forward.1} parent=5 // pred_check
      _
    $region46: #{my_model_forward.1} parent=5 // pred_check_branch
      %241 = sbr.rel (%p238) target = $region48
    $region47: #{my_model_forward.1} parent=5 // pred_region
      %s242 = ssub.s32 %s13, 1
      %p243 = scmp.lt.s32.totalorder %s18, 1
      %s244 = scalar_select %p243, %s18, 1
      %s245 = smul.addr %s244, 32
      %s246 = smul.addr %s245, 8
      %s247 = scalar_lea.vmem %s0, %s246
      %p248 = pneg %p39
      %p249 = pneg %p36
      %p250 = pneg %p60
      %p251 = pneg %p57
      %p252 = pneg %p81
      %p253 = pneg %p78
      %p254 = pneg %p102
      %p255 = pneg %p99
      %p256 = pneg %p123
      %p257 = pneg %p120
      %p258 = pneg %p144
      %p259 = pneg %p141
      %p260 = pneg %p165
      %p261 = pneg %p162
      %p262 = pneg %p191
      %p263 = pneg %p188
      %p264 = scmp.lt.s32.totalorder %s18, 1
      %s265 = scalar_select %p264, %s18, 1
      %s266 = smul.addr %s265, 32
      %s267 = smul.addr %s266, 8
      %s268 = scalar_lea.vmem %s7, %s267
      %p269 = scmp.lt.s32.totalorder %s18, 1
      %s270 = scalar_select %p269, %s18, 1
      %s271 = smul.addr %s270, 32
      %s272 = smul.addr %s271, 8
      %s273 = scalar_lea.vmem %s0, %s272
      %p274 = scmp.lt.s32.totalorder %s18, 1
      %s275 = scalar_select %p274, %s18, 1
      %s276 = smul.addr %s275, 32
      %s277 = smul.addr %s276, 8
      %s278 = scalar_lea.vmem %s7, %s277
      %vm280 = vcmask 31744
      %281 = vst.msk [vmem:[#allocation2] sm:$0xff] %vm280, 0.0
      %282 = vst.msk [vmem:[#allocation2 + $0x8] sm:$0xff] %vm280, 0.0
      %vm283 = vcmask 25600
      %284 = vst.msk [vmem:[#allocation2 + $0x10] sm:$0x3] %vm283, 0.0
      %285 = vst.msk [vmem:[#allocation2 + $0x18] sm:$0xff] %vm280, 0.0
      %286 = vst.msk [vmem:[#allocation2 + $0x20] sm:$0xff] %vm280, 0.0
      %287 = vst.msk [vmem:[#allocation2 + $0x28] sm:$0x3] %vm283, 0.0
      %288 = vst.msk [vmem:[#allocation2 + $0x30] sm:$0xff] %vm280, 0.0
      %289 = vst.msk [vmem:[#allocation2 + $0x38] sm:$0xff] %vm280, 0.0
      %290 = vst.msk [vmem:[#allocation2 + $0x40] sm:$0x3] %vm283, 0.0
      %291 = vst.msk [vmem:[#allocation2 + $0x48] sm:$0xff] %vm280, 0.0
      %292 = vst.msk [vmem:[#allocation2 + $0x50] sm:$0xff] %vm280, 0.0
      %293 = vst.msk [vmem:[#allocation2 + $0x58] sm:$0x3] %vm283, 0.0
      %294 = vst.msk [vmem:[#allocation2 + $0x60] sm:$0xff] %vm280, 0.0
      %295 = vst.msk [vmem:[#allocation2 + $0x68] sm:$0xff] %vm280, 0.0
      %296 = vst.msk [vmem:[#allocation2 + $0x70] sm:$0x3] %vm283, 0.0
      %297 = vst.msk [vmem:[#allocation2 + $0x78] sm:$0xff] %vm280, 0.0
      %298 = vst.msk [vmem:[#allocation2 + $0x80] sm:$0xff] %vm280, 0.0
      %299 = vst.msk [vmem:[#allocation2 + $0x88] sm:$0x3] %vm283, 0.0
      %300 = vst.msk [vmem:[#allocation2 + $0x90] sm:$0xff] %vm280, 0.0
      %301 = vst.msk [vmem:[#allocation2 + $0x98] sm:$0xff] %vm280, 0.0
      %302 = vst.msk [vmem:[#allocation2 + $0xa0] sm:$0x3] %vm283, 0.0
      %303 = vst.msk [vmem:[#allocation2 + $0xa8] sm:$0xff] %vm280, 0.0
      %304 = vst.msk [vmem:[#allocation2 + $0xb0] sm:$0xff] %vm280, 0.0
      %305 = vst.msk [vmem:[#allocation2 + $0xb8] sm:$0x3] %vm283, 0.0
      %306 = vst.msk [vmem:[#allocation2 + $0xc0] sm:$0xff] %vm280, 0.0
      %307 = vst.msk [vmem:[#allocation2 + $0xc8] sm:$0xff] %vm280, 0.0
      %308 = vst.msk [vmem:[#allocation2 + $0xd0] sm:$0x3] %vm283, 0.0
      %309 = vst.msk [vmem:[#allocation2 + $0xd8] sm:$0xff] %vm280, 0.0
      %310 = vst.msk [vmem:[#allocation2 + $0xe0] sm:$0xff] %vm280, 0.0
      %311 = vst.msk [vmem:[#allocation2 + $0xe8] sm:$0x3] %vm283, 0.0
      %312 = vst.msk [vmem:[#allocation2 + $0xf0] sm:$0xff] %vm280, 0.0
      %313 = vst.msk [vmem:[#allocation2 + $0xf8] sm:$0xff] %vm280, 0.0
      %314 = vst.msk [vmem:[#allocation2 + $0x100] sm:$0x3] %vm283, 0.0
      %315 = vst.msk [vmem:[#allocation2 + $0x108] sm:$0xff] %vm280, 0.0
      %316 = vst.msk [vmem:[#allocation2 + $0x110] sm:$0xff] %vm280, 0.0
      %317 = vst.msk [vmem:[#allocation2 + $0x118] sm:$0x3] %vm283, 0.0
      %318 = vst.msk [vmem:[#allocation2 + $0x120] sm:$0xff] %vm280, 0.0
      %319 = vst.msk [vmem:[#allocation2 + $0x128] sm:$0xff] %vm280, 0.0
      %320 = vst.msk [vmem:[#allocation2 + $0x130] sm:$0x3] %vm283, 0.0
      %321 = vst.msk [vmem:[#allocation2 + $0x138] sm:$0xff] %vm280, 0.0
      %322 = vst.msk [vmem:[#allocation2 + $0x140] sm:$0xff] %vm280, 0.0
      %323 = vst.msk [vmem:[#allocation2 + $0x148] sm:$0x3] %vm283, 0.0
      %324 = vst.msk [vmem:[#allocation2 + $0x150] sm:$0xff] %vm280, 0.0
      %325 = vst.msk [vmem:[#allocation2 + $0x158] sm:$0xff] %vm280, 0.0
      %326 = vst.msk [vmem:[#allocation2 + $0x160] sm:$0x3] %vm283, 0.0
      %327 = vst.msk [vmem:[#allocation2 + $0x168] sm:$0xff] %vm280, 0.0
      %328 = vst.msk [vmem:[#allocation2 + $0x170] sm:$0xff] %vm280, 0.0
      %329 = vst.msk [vmem:[#allocation2 + $0x178] sm:$0x3] %vm283, 0.0
      %330 = vst.msk [vmem:[#allocation2 + $0x180] sm:$0xff] %vm280, 0.0
      %331 = vst.msk [vmem:[#allocation2 + $0x188] sm:$0xff] %vm280, 0.0
      %332 = vst.msk [vmem:[#allocation2 + $0x190] sm:$0x3] %vm283, 0.0
      %333 = vst.msk [vmem:[#allocation2 + $0x198] sm:$0xff] %vm280, 0.0
      %334 = vst.msk [vmem:[#allocation2 + $0x1a0] sm:$0xff] %vm280, 0.0
      %335 = vst.msk [vmem:[#allocation2 + $0x1a8] sm:$0x3] %vm283, 0.0
      %v336 = vld [vmem:[%s273] sm:$0xff]
      %v337 = vld [vmem:[%s273 + $0x8] sm:$0xff]
      %v338 = vld [vmem:[%s273 + $0x10] sm:$0xff]
      %v339 = vld [vmem:[%s273 + $0x18] sm:$0xff]
      %v340 = vld [vmem:[%s273 + $0x20] sm:$0xff]
      %v341 = vld [vmem:[%s273 + $0x28] sm:$0xff]
      %v342 = vld [vmem:[%s273 + $0x30] sm:$0xff]
      %v343 = vld [vmem:[%s273 + $0x38] sm:$0xff]
      %v344 = vld [vmem:[%s273 + $0x40] sm:$0xff]
      %v345 = vld [vmem:[%s273 + $0x48] sm:$0xff]
      %v346 = vld [vmem:[%s273 + $0x50] sm:$0xff]
      %v347 = vld [vmem:[%s273 + $0x58] sm:$0xff]
      %v348 = vld [vmem:[%s273 + $0x60] sm:$0xff]
      %v349 = vld [vmem:[%s273 + $0x68] sm:$0xff]
      %v350 = vld [vmem:[%s273 + $0x70] sm:$0xff]
      %v351 = vld [vmem:[%s273 + $0x78] sm:$0xff]
      %v352 = vld [vmem:[%s273 + $0x80] sm:$0xff]
      %v353 = vld [vmem:[%s273 + $0x88] sm:$0xff]
      %v354 = vld [vmem:[%s273 + $0x90] sm:$0xff]
      %v355 = vld [vmem:[%s273 + $0x98] sm:$0xff]
      %v356 = vld [vmem:[%s273 + $0xa0] sm:$0xff]
      %v357 = vld [vmem:[%s273 + $0xa8] sm:$0xff]
      %v358 = vld [vmem:[%s273 + $0xb0] sm:$0xff]
      %v359 = vld [vmem:[%s273 + $0xb8] sm:$0xff]
      %v360 = vld [vmem:[%s273 + $0xc0] sm:$0xff]
      %v361 = vld [vmem:[%s273 + $0xc8] sm:$0xff]
      %v362 = vld [vmem:[%s273 + $0xd0] sm:$0xff]
      %v363 = vld [vmem:[%s273 + $0xd8] sm:$0xff]
      %v364 = vld [vmem:[%s273 + $0xe0] sm:$0xff]
      %v365 = vld [vmem:[%s273 + $0xe8] sm:$0xff]
      %v366 = vld [vmem:[%s273 + $0xf0] sm:$0xff]
      %v367 = vld [vmem:[%s273 + $0xf8] sm:$0xff]
      %s368 = scalar_lea.vmem [#allocation2], 24
      %369 = vst.msk [vmem:[%s368 + $0x1] sm:$0xff] %vm280, %v336
      %370 = vst.msk [vmem:[%s368 + $0x9] sm:$0xff] %vm280, %v337
      %371 = vst.msk [vmem:[%s368 + $0x19] sm:$0xff] %vm280, %v338
      %372 = vst.msk [vmem:[%s368 + $0x21] sm:$0xff] %vm280, %v339
      %373 = vst.msk [vmem:[%s368 + $0x31] sm:$0xff] %vm280, %v340
      %374 = vst.msk [vmem:[%s368 + $0x39] sm:$0xff] %vm280, %v341
      %375 = vst.msk [vmem:[%s368 + $0x49] sm:$0xff] %vm280, %v342
      %376 = vst.msk [vmem:[%s368 + $0x51] sm:$0xff] %vm280, %v343
      %377 = vst.msk [vmem:[%s368 + $0x61] sm:$0xff] %vm280, %v344
      %378 = vst.msk [vmem:[%s368 + $0x69] sm:$0xff] %vm280, %v345
      %379 = vst.msk [vmem:[%s368 + $0x79] sm:$0xff] %vm280, %v346
      %380 = vst.msk [vmem:[%s368 + $0x81] sm:$0xff] %vm280, %v347
      %381 = vst.msk [vmem:[%s368 + $0x91] sm:$0xff] %vm280, %v348
      %382 = vst.msk [vmem:[%s368 + $0x99] sm:$0xff] %vm280, %v349
      %383 = vst.msk [vmem:[%s368 + $0xa9] sm:$0xff] %vm280, %v350
      %384 = vst.msk [vmem:[%s368 + $0xb1] sm:$0xff] %vm280, %v351
      %385 = vst.msk [vmem:[%s368 + $0xc1] sm:$0xff] %vm280, %v352
      %386 = vst.msk [vmem:[%s368 + $0xc9] sm:$0xff] %vm280, %v353
      %387 = vst.msk [vmem:[%s368 + $0xd9] sm:$0xff] %vm280, %v354
      %388 = vst.msk [vmem:[%s368 + $0xe1] sm:$0xff] %vm280, %v355
      %389 = vst.msk [vmem:[%s368 + $0xf1] sm:$0xff] %vm280, %v356
      %390 = vst.msk [vmem:[%s368 + $0xf9] sm:$0xff] %vm280, %v357
      %391 = vst.msk [vmem:[%s368 + $0x109] sm:$0xff] %vm280, %v358
      %392 = vst.msk [vmem:[%s368 + $0x111] sm:$0xff] %vm280, %v359
      %393 = vst.msk [vmem:[%s368 + $0x121] sm:$0xff] %vm280, %v360
      %394 = vst.msk [vmem:[%s368 + $0x129] sm:$0xff] %vm280, %v361
      %395 = vst.msk [vmem:[%s368 + $0x139] sm:$0xff] %vm280, %v362
      %396 = vst.msk [vmem:[%s368 + $0x141] sm:$0xff] %vm280, %v363
      %397 = vst.msk [vmem:[%s368 + $0x151] sm:$0xff] %vm280, %v364
      %398 = vst.msk [vmem:[%s368 + $0x159] sm:$0xff] %vm280, %v365
      %399 = vst.msk [vmem:[%s368 + $0x169] sm:$0xff] %vm280, %v366
      %400 = vst.msk [vmem:[%s368 + $0x171] sm:$0xff] %vm280, %v367
      %v401 = vld [vmem:[#allocation2] sm:$0xff]
      %v402 = vld [vmem:[#allocation2 + $0x8] sm:$0xff]
      %v403 = vld [vmem:[#allocation2 + $0x10] sm:$0x3]
      %v404 = vld [vmem:[#allocation2 + $0x18] sm:$0xff]
      %v405 = vld [vmem:[#allocation2 + $0x20] sm:$0xff]
      %v406 = vld [vmem:[#allocation2 + $0x28] sm:$0x3]
      %v407 = vld [vmem:[#allocation2 + $0x30] sm:$0xff]
      %v408 = vld [vmem:[#allocation2 + $0x38] sm:$0xff]
      %v409 = vld [vmem:[#allocation2 + $0x40] sm:$0x3]
      %v410 = vld [vmem:[#allocation2 + $0x48] sm:$0xff]
      %v411 = vld [vmem:[#allocation2 + $0x50] sm:$0xff]
      %v412 = vld [vmem:[#allocation2 + $0x58] sm:$0x3]
      %v413 = vld [vmem:[#allocation2 + $0x60] sm:$0xff]
      %v414 = vld [vmem:[#allocation2 + $0x68] sm:$0xff]
      %v415 = vld [vmem:[#allocation2 + $0x70] sm:$0x3]
      %v416 = vld [vmem:[#allocation2 + $0x78] sm:$0xff]
      %v417 = vld [vmem:[#allocation2 + $0x80] sm:$0xff]
      %v418 = vld [vmem:[#allocation2 + $0x88] sm:$0x3]
      %v419 = vld [vmem:[#allocation2 + $0x90] sm:$0xff]
      %v420 = vld [vmem:[#allocation2 + $0x98] sm:$0xff]
      %v421 = vld [vmem:[#allocation2 + $0xa0] sm:$0x3]
      %v422 = vld [vmem:[#allocation2 + $0xa8] sm:$0xff]
      %v423 = vld [vmem:[#allocation2 + $0xb0] sm:$0xff]
      %v424 = vld [vmem:[#allocation2 + $0xb8] sm:$0x3]
      %v425 = vld [vmem:[#allocation2 + $0xc0] sm:$0xff]
      %v426 = vld [vmem:[#allocation2 + $0xc8] sm:$0xff]
      %v427 = vld [vmem:[#allocation2 + $0xd0] sm:$0x3]
      %v428 = vld [vmem:[#allocation2 + $0xd8] sm:$0xff]
      %v429 = vld [vmem:[#allocation2 + $0xe0] sm:$0xff]
      %v430 = vld [vmem:[#allocation2 + $0xe8] sm:$0x3]
      %v431 = vld [vmem:[#allocation2 + $0xf0] sm:$0xff]
      %v432 = vld [vmem:[#allocation2 + $0xf8] sm:$0xff]
      %v433 = vld [vmem:[#allocation2 + $0x100] sm:$0x3]
      %v434 = vld [vmem:[#allocation2 + $0x108] sm:$0xff]
      %v435 = vld [vmem:[#allocation2 + $0x110] sm:$0xff]
      %v436 = vld [vmem:[#allocation2 + $0x118] sm:$0x3]
      %v437 = vld [vmem:[#allocation2 + $0x120] sm:$0xff]
      %v438 = vld [vmem:[#allocation2 + $0x128] sm:$0xff]
      %v439 = vld [vmem:[#allocation2 + $0x130] sm:$0x3]
      %v440 = vld [vmem:[#allocation2 + $0x138] sm:$0xff]
      %v441 = vld [vmem:[#allocation2 + $0x140] sm:$0xff]
      %v442 = vld [vmem:[#allocation2 + $0x148] sm:$0x3]
      %v443 = vld [vmem:[#allocation2 + $0x150] sm:$0xff]
      %v444 = vld [vmem:[#allocation2 + $0x158] sm:$0xff]
      %v445 = vld [vmem:[#allocation2 + $0x160] sm:$0x3]
      %v446 = vld [vmem:[#allocation2 + $0x168] sm:$0xff]
      %v447 = vld [vmem:[#allocation2 + $0x170] sm:$0xff]
      %v448 = vld [vmem:[#allocation2 + $0x178] sm:$0x3]
      %v449 = vld [vmem:[#allocation2 + $0x180] sm:$0xff]
      %v450 = vld [vmem:[#allocation2 + $0x188] sm:$0xff]
      %v451 = vld [vmem:[#allocation2 + $0x190] sm:$0x3]
      %v452 = vld [vmem:[#allocation2 + $0x198] sm:$0xff]
      %v453 = vld [vmem:[#allocation2 + $0x1a0] sm:$0xff]
      %v454 = vld [vmem:[#allocation2 + $0x1a8] sm:$0x3]
      %vm503 = vcmask 1046528
      %v504 = vrot.slane %v401, 1
      %v505 = vrot.slane %v402, 1
      %v506 = vsel %vm503, %v504, %v505
      %v507 = vrot.slane %v403, 1
      %v508 = vsel %vm503, %v505, %v507
      %v509 = vrot.slane %v404, 1
      %v510 = vrot.slane %v405, 1
      %v511 = vsel %vm503, %v509, %v510
      %v512 = vrot.slane %v406, 1
      %v513 = vsel %vm503, %v510, %v512
      %v514 = vrot.slane %v407, 1
      %v515 = vrot.slane %v408, 1
      %v516 = vsel %vm503, %v514, %v515
      %v517 = vrot.slane %v409, 1
      %v518 = vsel %vm503, %v515, %v517
      %v519 = vrot.slane %v410, 1
      %v520 = vrot.slane %v411, 1
      %v521 = vsel %vm503, %v519, %v520
      %v522 = vrot.slane %v412, 1
      %v523 = vsel %vm503, %v520, %v522
      %v524 = vrot.slane %v413, 1
      %v525 = vrot.slane %v414, 1
      %v526 = vsel %vm503, %v524, %v525
      %v527 = vrot.slane %v415, 1
      %v528 = vsel %vm503, %v525, %v527
      %v529 = vrot.slane %v416, 1
      %v530 = vrot.slane %v417, 1
      %v531 = vsel %vm503, %v529, %v530
      %v532 = vrot.slane %v418, 1
      %v533 = vsel %vm503, %v530, %v532
      %v534 = vrot.slane %v419, 1
      %v535 = vrot.slane %v420, 1
      %v536 = vsel %vm503, %v534, %v535
      %v537 = vrot.slane %v421, 1
      %v538 = vsel %vm503, %v535, %v537
      %v539 = vrot.slane %v422, 1
      %v540 = vrot.slane %v423, 1
      %v541 = vsel %vm503, %v539, %v540
      %v542 = vrot.slane %v424, 1
      %v543 = vsel %vm503, %v540, %v542
      %v544 = vrot.slane %v425, 1
      %v545 = vrot.slane %v426, 1
      %v546 = vsel %vm503, %v544, %v545
      %v547 = vrot.slane %v427, 1
      %v548 = vsel %vm503, %v545, %v547
      %v549 = vrot.slane %v428, 1
      %v550 = vrot.slane %v429, 1
      %v551 = vsel %vm503, %v549, %v550
      %v552 = vrot.slane %v430, 1
      %v553 = vsel %vm503, %v550, %v552
      %v554 = vrot.slane %v431, 1
      %v555 = vrot.slane %v432, 1
      %v556 = vsel %vm503, %v554, %v555
      %v557 = vrot.slane %v433, 1
      %v558 = vsel %vm503, %v555, %v557
      %v559 = vrot.slane %v434, 1
      %v560 = vrot.slane %v435, 1
      %v561 = vsel %vm503, %v559, %v560
      %v562 = vrot.slane %v436, 1
      %v563 = vsel %vm503, %v560, %v562
      %v564 = vrot.slane %v437, 1
      %v565 = vrot.slane %v438, 1
      %v566 = vsel %vm503, %v564, %v565
      %v567 = vrot.slane %v439, 1
      %v568 = vsel %vm503, %v565, %v567
      %v569 = vrot.slane %v440, 1
      %v570 = vrot.slane %v441, 1
      %v571 = vsel %vm503, %v569, %v570
      %v572 = vrot.slane %v442, 1
      %v573 = vsel %vm503, %v570, %v572
      %v574 = vrot.slane %v443, 1
      %v575 = vrot.slane %v444, 1
      %v576 = vsel %vm503, %v574, %v575
      %v577 = vrot.slane %v445, 1
      %v578 = vsel %vm503, %v575, %v577
      %v579 = vrot.slane %v446, 1
      %v580 = vrot.slane %v447, 1
      %v581 = vsel %vm503, %v579, %v580
      %v582 = vrot.slane %v448, 1
      %v583 = vsel %vm503, %v580, %v582
      %584 = vrot.lane.b32.xlu0 %v506, 4
      %v585 = vpop.permute.xlu0 %584
      %586 = vrot.lane.b32.xlu0 %v508, 4
      %v587 = vpop.permute.xlu0 %586
      %588 = vrot.lane.b32.xlu0 %v511, 4
      %v589 = vpop.permute.xlu0 %588
      %590 = vrot.lane.b32.xlu0 %v513, 4
      %v591 = vpop.permute.xlu0 %590
      %592 = vrot.lane.b32.xlu0 %v516, 4
      %v593 = vpop.permute.xlu0 %592
      %594 = vrot.lane.b32.xlu0 %v518, 4
      %v595 = vpop.permute.xlu0 %594
      %596 = vrot.lane.b32.xlu0 %v521, 4
      %v597 = vpop.permute.xlu0 %596
      %598 = vrot.lane.b32.xlu0 %v523, 4
      %v599 = vpop.permute.xlu0 %598
      %600 = vrot.lane.b32.xlu0 %v526, 4
      %v601 = vpop.permute.xlu0 %600
      %602 = vrot.lane.b32.xlu0 %v528, 4
      %v603 = vpop.permute.xlu0 %602
      %604 = vrot.lane.b32.xlu0 %v531, 4
      %v605 = vpop.permute.xlu0 %604
      %606 = vrot.lane.b32.xlu0 %v533, 4
      %v607 = vpop.permute.xlu0 %606
      %608 = vrot.lane.b32.xlu0 %v536, 4
      %v609 = vpop.permute.xlu0 %608
      %610 = vrot.lane.b32.xlu0 %v538, 4
      %v611 = vpop.permute.xlu0 %610
      %612 = vrot.lane.b32.xlu0 %v541, 4
      %v613 = vpop.permute.xlu0 %612
      %614 = vrot.lane.b32.xlu0 %v543, 4
      %v615 = vpop.permute.xlu0 %614
      %616 = vrot.lane.b32.xlu0 %v546, 4
      %v617 = vpop.permute.xlu0 %616
      %618 = vrot.lane.b32.xlu0 %v548, 4
      %v619 = vpop.permute.xlu0 %618
      %620 = vrot.lane.b32.xlu0 %v551, 4
      %v621 = vpop.permute.xlu0 %620
      %622 = vrot.lane.b32.xlu0 %v553, 4
      %v623 = vpop.permute.xlu0 %622
      %624 = vrot.lane.b32.xlu0 %v556, 4
      %v625 = vpop.permute.xlu0 %624
      %626 = vrot.lane.b32.xlu0 %v558, 4
      %v627 = vpop.permute.xlu0 %626
      %628 = vrot.lane.b32.xlu0 %v561, 4
      %v629 = vpop.permute.xlu0 %628
      %630 = vrot.lane.b32.xlu0 %v563, 4
      %v631 = vpop.permute.xlu0 %630
      %632 = vrot.lane.b32.xlu0 %v566, 4
      %v633 = vpop.permute.xlu0 %632
      %634 = vrot.lane.b32.xlu0 %v568, 4
      %v635 = vpop.permute.xlu0 %634
      %636 = vrot.lane.b32.xlu0 %v571, 4
      %v637 = vpop.permute.xlu0 %636
      %638 = vrot.lane.b32.xlu0 %v573, 4
      %v639 = vpop.permute.xlu0 %638
      %640 = vrot.lane.b32.xlu0 %v576, 4
      %v641 = vpop.permute.xlu0 %640
      %642 = vrot.lane.b32.xlu0 %v578, 4
      %v643 = vpop.permute.xlu0 %642
      %644 = vrot.lane.b32.xlu0 %v581, 4
      %v645 = vpop.permute.xlu0 %644
      %646 = vrot.lane.b32.xlu0 %v583, 4
      %v647 = vpop.permute.xlu0 %646
      %vm680 = vcmask 1045504
      %v681 = vrot.slane %v401, 2
      %v682 = vrot.slane %v402, 2
      %v683 = vsel %vm680, %v681, %v682
      %v684 = vrot.slane %v403, 2
      %v685 = vsel %vm680, %v682, %v684
      %v686 = vrot.slane %v404, 2
      %v687 = vrot.slane %v405, 2
      %v688 = vsel %vm680, %v686, %v687
      %v689 = vrot.slane %v406, 2
      %v690 = vsel %vm680, %v687, %v689
      %v691 = vrot.slane %v407, 2
      %v692 = vrot.slane %v408, 2
      %v693 = vsel %vm680, %v691, %v692
      %v694 = vrot.slane %v409, 2
      %v695 = vsel %vm680, %v692, %v694
      %v696 = vrot.slane %v410, 2
      %v697 = vrot.slane %v411, 2
      %v698 = vsel %vm680, %v696, %v697
      %v699 = vrot.slane %v412, 2
      %v700 = vsel %vm680, %v697, %v699
      %v701 = vrot.slane %v413, 2
      %v702 = vrot.slane %v414, 2
      %v703 = vsel %vm680, %v701, %v702
      %v704 = vrot.slane %v415, 2
      %v705 = vsel %vm680, %v702, %v704
      %v706 = vrot.slane %v416, 2
      %v707 = vrot.slane %v417, 2
      %v708 = vsel %vm680, %v706, %v707
      %v709 = vrot.slane %v418, 2
      %v710 = vsel %vm680, %v707, %v709
      %v711 = vrot.slane %v419, 2
      %v712 = vrot.slane %v420, 2
      %v713 = vsel %vm680, %v711, %v712
      %v714 = vrot.slane %v421, 2
      %v715 = vsel %vm680, %v712, %v714
      %v716 = vrot.slane %v422, 2
      %v717 = vrot.slane %v423, 2
      %v718 = vsel %vm680, %v716, %v717
      %v719 = vrot.slane %v424, 2
      %v720 = vsel %vm680, %v717, %v719
      %v721 = vrot.slane %v425, 2
      %v722 = vrot.slane %v426, 2
      %v723 = vsel %vm680, %v721, %v722
      %v724 = vrot.slane %v427, 2
      %v725 = vsel %vm680, %v722, %v724
      %v726 = vrot.slane %v428, 2
      %v727 = vrot.slane %v429, 2
      %v728 = vsel %vm680, %v726, %v727
      %v729 = vrot.slane %v430, 2
      %v730 = vsel %vm680, %v727, %v729
      %v731 = vrot.slane %v431, 2
      %v732 = vrot.slane %v432, 2
      %v733 = vsel %vm680, %v731, %v732
      %v734 = vrot.slane %v433, 2
      %v735 = vsel %vm680, %v732, %v734
      %v736 = vrot.slane %v434, 2
      %v737 = vrot.slane %v435, 2
      %v738 = vsel %vm680, %v736, %v737
      %v739 = vrot.slane %v436, 2
      %v740 = vsel %vm680, %v737, %v739
      %v741 = vrot.slane %v437, 2
      %v742 = vrot.slane %v438, 2
      %v743 = vsel %vm680, %v741, %v742
      %v744 = vrot.slane %v439, 2
      %v745 = vsel %vm680, %v742, %v744
      %v746 = vrot.slane %v440, 2
      %v747 = vrot.slane %v441, 2
      %v748 = vsel %vm680, %v746, %v747
      %v749 = vrot.slane %v442, 2
      %v750 = vsel %vm680, %v747, %v749
      %v751 = vrot.slane %v443, 2
      %v752 = vrot.slane %v444, 2
      %v753 = vsel %vm680, %v751, %v752
      %v754 = vrot.slane %v445, 2
      %v755 = vsel %vm680, %v752, %v754
      %v756 = vrot.slane %v446, 2
      %v757 = vrot.slane %v447, 2
      %v758 = vsel %vm680, %v756, %v757
      %v759 = vrot.slane %v448, 2
      %v760 = vsel %vm680, %v757, %v759
      %761 = vrot.lane.b32.xlu0 %v683, 8
      %v762 = vpop.permute.xlu0 %761
      %763 = vrot.lane.b32.xlu0 %v685, 8
      %v764 = vpop.permute.xlu0 %763
      %765 = vrot.lane.b32.xlu0 %v688, 8
      %v766 = vpop.permute.xlu0 %765
      %767 = vrot.lane.b32.xlu0 %v690, 8
      %v768 = vpop.permute.xlu0 %767
      %769 = vrot.lane.b32.xlu0 %v693, 8
      %v770 = vpop.permute.xlu0 %769
      %771 = vrot.lane.b32.xlu0 %v695, 8
      %v772 = vpop.permute.xlu0 %771
      %773 = vrot.lane.b32.xlu0 %v698, 8
      %v774 = vpop.permute.xlu0 %773
      %775 = vrot.lane.b32.xlu0 %v700, 8
      %v776 = vpop.permute.xlu0 %775
      %777 = vrot.lane.b32.xlu0 %v703, 8
      %v778 = vpop.permute.xlu0 %777
      %779 = vrot.lane.b32.xlu0 %v705, 8
      %v780 = vpop.permute.xlu0 %779
      %781 = vrot.lane.b32.xlu0 %v708, 8
      %v782 = vpop.permute.xlu0 %781
      %783 = vrot.lane.b32.xlu0 %v710, 8
      %v784 = vpop.permute.xlu0 %783
      %785 = vrot.lane.b32.xlu0 %v713, 8
      %v786 = vpop.permute.xlu0 %785
      %787 = vrot.lane.b32.xlu0 %v715, 8
      %v788 = vpop.permute.xlu0 %787
      %789 = vrot.lane.b32.xlu0 %v718, 8
      %v790 = vpop.permute.xlu0 %789
      %791 = vrot.lane.b32.xlu0 %v720, 8
      %v792 = vpop.permute.xlu0 %791
      %793 = vrot.lane.b32.xlu0 %v723, 8
      %v794 = vpop.permute.xlu0 %793
      %795 = vrot.lane.b32.xlu0 %v725, 8
      %v796 = vpop.permute.xlu0 %795
      %797 = vrot.lane.b32.xlu0 %v728, 8
      %v798 = vpop.permute.xlu0 %797
      %799 = vrot.lane.b32.xlu0 %v730, 8
      %v800 = vpop.permute.xlu0 %799
      %801 = vrot.lane.b32.xlu0 %v733, 8
      %v802 = vpop.permute.xlu0 %801
      %803 = vrot.lane.b32.xlu0 %v735, 8
      %v804 = vpop.permute.xlu0 %803
      %805 = vrot.lane.b32.xlu0 %v738, 8
      %v806 = vpop.permute.xlu0 %805
      %807 = vrot.lane.b32.xlu0 %v740, 8
      %v808 = vpop.permute.xlu0 %807
      %809 = vrot.lane.b32.xlu0 %v743, 8
      %v810 = vpop.permute.xlu0 %809
      %811 = vrot.lane.b32.xlu0 %v745, 8
      %v812 = vpop.permute.xlu0 %811
      %813 = vrot.lane.b32.xlu0 %v748, 8
      %v814 = vpop.permute.xlu0 %813
      %815 = vrot.lane.b32.xlu0 %v750, 8
      %v816 = vpop.permute.xlu0 %815
      %817 = vrot.lane.b32.xlu0 %v753, 8
      %v818 = vpop.permute.xlu0 %817
      %819 = vrot.lane.b32.xlu0 %v755, 8
      %v820 = vpop.permute.xlu0 %819
      %821 = vrot.lane.b32.xlu0 %v758, 8
      %v822 = vpop.permute.xlu0 %821
      %823 = vrot.lane.b32.xlu0 %v760, 8
      %v824 = vpop.permute.xlu0 %823
      %859 = vrot.lane.b32.xlu0 %v404, 12
      %v860 = vpop.permute.xlu0 %859
      %861 = vrot.lane.b32.xlu0 %v405, 12
      %v862 = vpop.permute.xlu0 %861
      %863 = vrot.lane.b32.xlu0 %v407, 12
      %v864 = vpop.permute.xlu0 %863
      %865 = vrot.lane.b32.xlu0 %v408, 12
      %v866 = vpop.permute.xlu0 %865
      %867 = vrot.lane.b32.xlu0 %v410, 12
      %v868 = vpop.permute.xlu0 %867
      %869 = vrot.lane.b32.xlu0 %v411, 12
      %v870 = vpop.permute.xlu0 %869
      %871 = vrot.lane.b32.xlu0 %v413, 12
      %v872 = vpop.permute.xlu0 %871
      %873 = vrot.lane.b32.xlu0 %v414, 12
      %v874 = vpop.permute.xlu0 %873
      %875 = vrot.lane.b32.xlu0 %v416, 12
      %v876 = vpop.permute.xlu0 %875
      %877 = vrot.lane.b32.xlu0 %v417, 12
      %v878 = vpop.permute.xlu0 %877
      %879 = vrot.lane.b32.xlu0 %v419, 12
      %v880 = vpop.permute.xlu0 %879
      %881 = vrot.lane.b32.xlu0 %v420, 12
      %v882 = vpop.permute.xlu0 %881
      %883 = vrot.lane.b32.xlu0 %v422, 12
      %v884 = vpop.permute.xlu0 %883
      %885 = vrot.lane.b32.xlu0 %v423, 12
      %v886 = vpop.permute.xlu0 %885
      %887 = vrot.lane.b32.xlu0 %v425, 12
      %v888 = vpop.permute.xlu0 %887
      %889 = vrot.lane.b32.xlu0 %v426, 12
      %v890 = vpop.permute.xlu0 %889
      %891 = vrot.lane.b32.xlu0 %v428, 12
      %v892 = vpop.permute.xlu0 %891
      %893 = vrot.lane.b32.xlu0 %v429, 12
      %v894 = vpop.permute.xlu0 %893
      %895 = vrot.lane.b32.xlu0 %v431, 12
      %v896 = vpop.permute.xlu0 %895
      %897 = vrot.lane.b32.xlu0 %v432, 12
      %v898 = vpop.permute.xlu0 %897
      %899 = vrot.lane.b32.xlu0 %v434, 12
      %v900 = vpop.permute.xlu0 %899
      %901 = vrot.lane.b32.xlu0 %v435, 12
      %v902 = vpop.permute.xlu0 %901
      %903 = vrot.lane.b32.xlu0 %v437, 12
      %v904 = vpop.permute.xlu0 %903
      %905 = vrot.lane.b32.xlu0 %v438, 12
      %v906 = vpop.permute.xlu0 %905
      %907 = vrot.lane.b32.xlu0 %v440, 12
      %v908 = vpop.permute.xlu0 %907
      %909 = vrot.lane.b32.xlu0 %v441, 12
      %v910 = vpop.permute.xlu0 %909
      %911 = vrot.lane.b32.xlu0 %v443, 12
      %v912 = vpop.permute.xlu0 %911
      %913 = vrot.lane.b32.xlu0 %v444, 12
      %v914 = vpop.permute.xlu0 %913
      %915 = vrot.lane.b32.xlu0 %v446, 12
      %v916 = vpop.permute.xlu0 %915
      %917 = vrot.lane.b32.xlu0 %v447, 12
      %v918 = vpop.permute.xlu0 %917
      %919 = vrot.lane.b32.xlu0 %v449, 12
      %v920 = vpop.permute.xlu0 %919
      %921 = vrot.lane.b32.xlu0 %v450, 12
      %v922 = vpop.permute.xlu0 %921
      %v956 = vrot.slane %v449, 1
      %v957 = vrot.slane %v450, 1
      %v958 = vsel %vm503, %v956, %v957
      %v959 = vrot.slane %v451, 1
      %v960 = vsel %vm503, %v957, %v959
      %961 = vrot.lane.b32.xlu0 %v511, 16
      %v962 = vpop.permute.xlu0 %961
      %963 = vrot.lane.b32.xlu0 %v513, 16
      %v964 = vpop.permute.xlu0 %963
      %965 = vrot.lane.b32.xlu0 %v516, 16
      %v966 = vpop.permute.xlu0 %965
      %967 = vrot.lane.b32.xlu0 %v518, 16
      %v968 = vpop.permute.xlu0 %967
      %969 = vrot.lane.b32.xlu0 %v521, 16
      %v970 = vpop.permute.xlu0 %969
      %971 = vrot.lane.b32.xlu0 %v523, 16
      %v972 = vpop.permute.xlu0 %971
      %973 = vrot.lane.b32.xlu0 %v526, 16
      %v974 = vpop.permute.xlu0 %973
      %975 = vrot.lane.b32.xlu0 %v528, 16
      %v976 = vpop.permute.xlu0 %975
      %977 = vrot.lane.b32.xlu0 %v531, 16
      %v978 = vpop.permute.xlu0 %977
      %979 = vrot.lane.b32.xlu0 %v533, 16
      %v980 = vpop.permute.xlu0 %979
      %981 = vrot.lane.b32.xlu0 %v536, 16
      %v982 = vpop.permute.xlu0 %981
      %983 = vrot.lane.b32.xlu0 %v538, 16
      %v984 = vpop.permute.xlu0 %983
      %985 = vrot.lane.b32.xlu0 %v541, 16
      %v986 = vpop.permute.xlu0 %985
      %987 = vrot.lane.b32.xlu0 %v543, 16
      %v988 = vpop.permute.xlu0 %987
      %989 = vrot.lane.b32.xlu0 %v546, 16
      %v990 = vpop.permute.xlu0 %989
      %991 = vrot.lane.b32.xlu0 %v548, 16
      %v992 = vpop.permute.xlu0 %991
      %993 = vrot.lane.b32.xlu0 %v551, 16
      %v994 = vpop.permute.xlu0 %993
      %995 = vrot.lane.b32.xlu0 %v553, 16
      %v996 = vpop.permute.xlu0 %995
      %997 = vrot.lane.b32.xlu0 %v556, 16
      %v998 = vpop.permute.xlu0 %997
      %999 = vrot.lane.b32.xlu0 %v558, 16
      %v1000 = vpop.permute.xlu0 %999
      %1001 = vrot.lane.b32.xlu0 %v561, 16
      %v1002 = vpop.permute.xlu0 %1001
      %1003 = vrot.lane.b32.xlu0 %v563, 16
      %v1004 = vpop.permute.xlu0 %1003
      %1005 = vrot.lane.b32.xlu0 %v566, 16
      %v1006 = vpop.permute.xlu0 %1005
      %1007 = vrot.lane.b32.xlu0 %v568, 16
      %v1008 = vpop.permute.xlu0 %1007
      %1009 = vrot.lane.b32.xlu0 %v571, 16
      %v1010 = vpop.permute.xlu0 %1009
      %1011 = vrot.lane.b32.xlu0 %v573, 16
      %v1012 = vpop.permute.xlu0 %1011
      %1013 = vrot.lane.b32.xlu0 %v576, 16
      %v1014 = vpop.permute.xlu0 %1013
      %1015 = vrot.lane.b32.xlu0 %v578, 16
      %v1016 = vpop.permute.xlu0 %1015
      %1017 = vrot.lane.b32.xlu0 %v581, 16
      %v1018 = vpop.permute.xlu0 %1017
      %1019 = vrot.lane.b32.xlu0 %v583, 16
      %v1020 = vpop.permute.xlu0 %1019
      %1021 = vrot.lane.b32.xlu0 %v958, 16
      %v1022 = vpop.permute.xlu0 %1021
      %1023 = vrot.lane.b32.xlu0 %v960, 16
      %v1024 = vpop.permute.xlu0 %1023
      %v1057 = vrot.slane %v449, 2
      %v1058 = vrot.slane %v450, 2
      %v1059 = vsel %vm680, %v1057, %v1058
      %v1060 = vrot.slane %v451, 2
      %v1061 = vsel %vm680, %v1058, %v1060
      %1062 = vrot.lane.b32.xlu0 %v688, 20
      %v1063 = vpop.permute.xlu0 %1062
      %1064 = vrot.lane.b32.xlu0 %v690, 20
      %v1065 = vpop.permute.xlu0 %1064
      %1066 = vrot.lane.b32.xlu0 %v693, 20
      %v1067 = vpop.permute.xlu0 %1066
      %1068 = vrot.lane.b32.xlu0 %v695, 20
      %v1069 = vpop.permute.xlu0 %1068
      %1070 = vrot.lane.b32.xlu0 %v698, 20
      %v1071 = vpop.permute.xlu0 %1070
      %1072 = vrot.lane.b32.xlu0 %v700, 20
      %v1073 = vpop.permute.xlu0 %1072
      %1074 = vrot.lane.b32.xlu0 %v703, 20
      %v1075 = vpop.permute.xlu0 %1074
      %1076 = vrot.lane.b32.xlu0 %v705, 20
      %v1077 = vpop.permute.xlu0 %1076
      %1078 = vrot.lane.b32.xlu0 %v708, 20
      %v1079 = vpop.permute.xlu0 %1078
      %1080 = vrot.lane.b32.xlu0 %v710, 20
      %v1081 = vpop.permute.xlu0 %1080
      %1082 = vrot.lane.b32.xlu0 %v713, 20
      %v1083 = vpop.permute.xlu0 %1082
      %1084 = vrot.lane.b32.xlu0 %v715, 20
      %v1085 = vpop.permute.xlu0 %1084
      %1086 = vrot.lane.b32.xlu0 %v718, 20
      %v1087 = vpop.permute.xlu0 %1086
      %1088 = vrot.lane.b32.xlu0 %v720, 20
      %v1089 = vpop.permute.xlu0 %1088
      %1090 = vrot.lane.b32.xlu0 %v723, 20
      %v1091 = vpop.permute.xlu0 %1090
      %1092 = vrot.lane.b32.xlu0 %v725, 20
      %v1093 = vpop.permute.xlu0 %1092
      %1094 = vrot.lane.b32.xlu0 %v728, 20
      %v1095 = vpop.permute.xlu0 %1094
      %1096 = vrot.lane.b32.xlu0 %v730, 20
      %v1097 = vpop.permute.xlu0 %1096
      %1098 = vrot.lane.b32.xlu0 %v733, 20
      %v1099 = vpop.permute.xlu0 %1098
      %1100 = vrot.lane.b32.xlu0 %v735, 20
      %v1101 = vpop.permute.xlu0 %1100
      %1102 = vrot.lane.b32.xlu0 %v738, 20
      %v1103 = vpop.permute.xlu0 %1102
      %1104 = vrot.lane.b32.xlu0 %v740, 20
      %v1105 = vpop.permute.xlu0 %1104
      %1106 = vrot.lane.b32.xlu0 %v743, 20
      %v1107 = vpop.permute.xlu0 %1106
      %1108 = vrot.lane.b32.xlu0 %v745, 20
      %v1109 = vpop.permute.xlu0 %1108
      %1110 = vrot.lane.b32.xlu0 %v748, 20
      %v1111 = vpop.permute.xlu0 %1110
      %1112 = vrot.lane.b32.xlu0 %v750, 20
      %v1113 = vpop.permute.xlu0 %1112
      %1114 = vrot.lane.b32.xlu0 %v753, 20
      %v1115 = vpop.permute.xlu0 %1114
      %1116 = vrot.lane.b32.xlu0 %v755, 20
      %v1117 = vpop.permute.xlu0 %1116
      %1118 = vrot.lane.b32.xlu0 %v758, 20
      %v1119 = vpop.permute.xlu0 %1118
      %1120 = vrot.lane.b32.xlu0 %v760, 20
      %v1121 = vpop.permute.xlu0 %1120
      %1122 = vrot.lane.b32.xlu0 %v1059, 20
      %v1123 = vpop.permute.xlu0 %1122
      %1124 = vrot.lane.b32.xlu0 %v1061, 20
      %v1125 = vpop.permute.xlu0 %1124
      %1160 = vrot.lane.b32.xlu0 %v407, 24
      %v1161 = vpop.permute.xlu0 %1160
      %1162 = vrot.lane.b32.xlu0 %v408, 24
      %v1163 = vpop.permute.xlu0 %1162
      %1164 = vrot.lane.b32.xlu0 %v410, 24
      %v1165 = vpop.permute.xlu0 %1164
      %1166 = vrot.lane.b32.xlu0 %v411, 24
      %v1167 = vpop.permute.xlu0 %1166
      %1168 = vrot.lane.b32.xlu0 %v413, 24
      %v1169 = vpop.permute.xlu0 %1168
      %1170 = vrot.lane.b32.xlu0 %v414, 24
      %v1171 = vpop.permute.xlu0 %1170
      %1172 = vrot.lane.b32.xlu0 %v416, 24
      %v1173 = vpop.permute.xlu0 %1172
      %1174 = vrot.lane.b32.xlu0 %v417, 24
      %v1175 = vpop.permute.xlu0 %1174
      %1176 = vrot.lane.b32.xlu0 %v419, 24
      %v1177 = vpop.permute.xlu0 %1176
      %1178 = vrot.lane.b32.xlu0 %v420, 24
      %v1179 = vpop.permute.xlu0 %1178
      %1180 = vrot.lane.b32.xlu0 %v422, 24
      %v1181 = vpop.permute.xlu0 %1180
      %1182 = vrot.lane.b32.xlu0 %v423, 24
      %v1183 = vpop.permute.xlu0 %1182
      %1184 = vrot.lane.b32.xlu0 %v425, 24
      %v1185 = vpop.permute.xlu0 %1184
      %1186 = vrot.lane.b32.xlu0 %v426, 24
      %v1187 = vpop.permute.xlu0 %1186
      %1188 = vrot.lane.b32.xlu0 %v428, 24
      %v1189 = vpop.permute.xlu0 %1188
      %1190 = vrot.lane.b32.xlu0 %v429, 24
      %v1191 = vpop.permute.xlu0 %1190
      %1192 = vrot.lane.b32.xlu0 %v431, 24
      %v1193 = vpop.permute.xlu0 %1192
      %1194 = vrot.lane.b32.xlu0 %v432, 24
      %v1195 = vpop.permute.xlu0 %1194
      %1196 = vrot.lane.b32.xlu0 %v434, 24
      %v1197 = vpop.permute.xlu0 %1196
      %1198 = vrot.lane.b32.xlu0 %v435, 24
      %v1199 = vpop.permute.xlu0 %1198
      %1200 = vrot.lane.b32.xlu0 %v437, 24
      %v1201 = vpop.permute.xlu0 %1200
      %1202 = vrot.lane.b32.xlu0 %v438, 24
      %v1203 = vpop.permute.xlu0 %1202
      %1204 = vrot.lane.b32.xlu0 %v440, 24
      %v1205 = vpop.permute.xlu0 %1204
      %1206 = vrot.lane.b32.xlu0 %v441, 24
      %v1207 = vpop.permute.xlu0 %1206
      %1208 = vrot.lane.b32.xlu0 %v443, 24
      %v1209 = vpop.permute.xlu0 %1208
      %1210 = vrot.lane.b32.xlu0 %v444, 24
      %v1211 = vpop.permute.xlu0 %1210
      %1212 = vrot.lane.b32.xlu0 %v446, 24
      %v1213 = vpop.permute.xlu0 %1212
      %1214 = vrot.lane.b32.xlu0 %v447, 24
      %v1215 = vpop.permute.xlu0 %1214
      %1216 = vrot.lane.b32.xlu0 %v449, 24
      %v1217 = vpop.permute.xlu0 %1216
      %1218 = vrot.lane.b32.xlu0 %v450, 24
      %v1219 = vpop.permute.xlu0 %1218
      %1220 = vrot.lane.b32.xlu0 %v452, 24
      %v1221 = vpop.permute.xlu0 %1220
      %1222 = vrot.lane.b32.xlu0 %v453, 24
      %v1223 = vpop.permute.xlu0 %1222
      %v1257 = vrot.slane %v452, 1
      %v1258 = vrot.slane %v453, 1
      %v1259 = vsel %vm503, %v1257, %v1258
      %v1260 = vrot.slane %v454, 1
      %v1261 = vsel %vm503, %v1258, %v1260
      %1262 = vrot.lane.b32.xlu0 %v516, 28
      %v1263 = vpop.permute.xlu0 %1262
      %1264 = vrot.lane.b32.xlu0 %v518, 28
      %v1265 = vpop.permute.xlu0 %1264
      %1266 = vrot.lane.b32.xlu0 %v521, 28
      %v1267 = vpop.permute.xlu0 %1266
      %1268 = vrot.lane.b32.xlu0 %v523, 28
      %v1269 = vpop.permute.xlu0 %1268
      %1270 = vrot.lane.b32.xlu0 %v526, 28
      %v1271 = vpop.permute.xlu0 %1270
      %1272 = vrot.lane.b32.xlu0 %v528, 28
      %v1273 = vpop.permute.xlu0 %1272
      %1274 = vrot.lane.b32.xlu0 %v531, 28
      %v1275 = vpop.permute.xlu0 %1274
      %1276 = vrot.lane.b32.xlu0 %v533, 28
      %v1277 = vpop.permute.xlu0 %1276
      %1278 = vrot.lane.b32.xlu0 %v536, 28
      %v1279 = vpop.permute.xlu0 %1278
      %1280 = vrot.lane.b32.xlu0 %v538, 28
      %v1281 = vpop.permute.xlu0 %1280
      %1282 = vrot.lane.b32.xlu0 %v541, 28
      %v1283 = vpop.permute.xlu0 %1282
      %1284 = vrot.lane.b32.xlu0 %v543, 28
      %v1285 = vpop.permute.xlu0 %1284
      %1286 = vrot.lane.b32.xlu0 %v546, 28
      %v1287 = vpop.permute.xlu0 %1286
      %1288 = vrot.lane.b32.xlu0 %v548, 28
      %v1289 = vpop.permute.xlu0 %1288
      %1290 = vrot.lane.b32.xlu0 %v551, 28
      %v1291 = vpop.permute.xlu0 %1290
      %1292 = vrot.lane.b32.xlu0 %v553, 28
      %v1293 = vpop.permute.xlu0 %1292
      %1294 = vrot.lane.b32.xlu0 %v556, 28
      %v1295 = vpop.permute.xlu0 %1294
      %1296 = vrot.lane.b32.xlu0 %v558, 28
      %v1297 = vpop.permute.xlu0 %1296
      %1298 = vrot.lane.b32.xlu0 %v561, 28
      %v1299 = vpop.permute.xlu0 %1298
      %1300 = vrot.lane.b32.xlu0 %v563, 28
      %v1301 = vpop.permute.xlu0 %1300
      %1302 = vrot.lane.b32.xlu0 %v566, 28
      %v1303 = vpop.permute.xlu0 %1302
      %1304 = vrot.lane.b32.xlu0 %v568, 28
      %v1305 = vpop.permute.xlu0 %1304
      %1306 = vrot.lane.b32.xlu0 %v571, 28
      %v1307 = vpop.permute.xlu0 %1306
      %1308 = vrot.lane.b32.xlu0 %v573, 28
      %v1309 = vpop.permute.xlu0 %1308
      %1310 = vrot.lane.b32.xlu0 %v576, 28
      %v1311 = vpop.permute.xlu0 %1310
      %1312 = vrot.lane.b32.xlu0 %v578, 28
      %v1313 = vpop.permute.xlu0 %1312
      %1314 = vrot.lane.b32.xlu0 %v581, 28
      %v1315 = vpop.permute.xlu0 %1314
      %1316 = vrot.lane.b32.xlu0 %v583, 28
      %v1317 = vpop.permute.xlu0 %1316
      %1318 = vrot.lane.b32.xlu0 %v958, 28
      %v1319 = vpop.permute.xlu0 %1318
      %1320 = vrot.lane.b32.xlu0 %v960, 28
      %v1321 = vpop.permute.xlu0 %1320
      %1322 = vrot.lane.b32.xlu0 %v1259, 28
      %v1323 = vpop.permute.xlu0 %1322
      %1324 = vrot.lane.b32.xlu0 %v1261, 28
      %v1325 = vpop.permute.xlu0 %1324
      %v1358 = vrot.slane %v452, 2
      %v1359 = vrot.slane %v453, 2
      %v1360 = vsel %vm680, %v1358, %v1359
      %v1361 = vrot.slane %v454, 2
      %v1362 = vsel %vm680, %v1359, %v1361
      %1363 = vrot.lane.b32.xlu0 %v693, 32
      %v1364 = vpop.permute.xlu0 %1363
      %1365 = vrot.lane.b32.xlu0 %v695, 32
      %v1366 = vpop.permute.xlu0 %1365
      %1367 = vrot.lane.b32.xlu0 %v698, 32
      %v1368 = vpop.permute.xlu0 %1367
      %1369 = vrot.lane.b32.xlu0 %v700, 32
      %v1370 = vpop.permute.xlu0 %1369
      %1371 = vrot.lane.b32.xlu0 %v703, 32
      %v1372 = vpop.permute.xlu0 %1371
      %1373 = vrot.lane.b32.xlu0 %v705, 32
      %v1374 = vpop.permute.xlu0 %1373
      %1375 = vrot.lane.b32.xlu0 %v708, 32
      %v1376 = vpop.permute.xlu0 %1375
      %1377 = vrot.lane.b32.xlu0 %v710, 32
      %v1378 = vpop.permute.xlu0 %1377
      %1379 = vrot.lane.b32.xlu0 %v713, 32
      %v1380 = vpop.permute.xlu0 %1379
      %1381 = vrot.lane.b32.xlu0 %v715, 32
      %v1382 = vpop.permute.xlu0 %1381
      %1383 = vrot.lane.b32.xlu0 %v718, 32
      %v1384 = vpop.permute.xlu0 %1383
      %1385 = vrot.lane.b32.xlu0 %v720, 32
      %v1386 = vpop.permute.xlu0 %1385
      %1387 = vrot.lane.b32.xlu0 %v723, 32
      %v1388 = vpop.permute.xlu0 %1387
      %1389 = vrot.lane.b32.xlu0 %v725, 32
      %v1390 = vpop.permute.xlu0 %1389
      %1391 = vrot.lane.b32.xlu0 %v728, 32
      %v1392 = vpop.permute.xlu0 %1391
      %1393 = vrot.lane.b32.xlu0 %v730, 32
      %v1394 = vpop.permute.xlu0 %1393
      %1395 = vrot.lane.b32.xlu0 %v733, 32
      %v1396 = vpop.permute.xlu0 %1395
      %1397 = vrot.lane.b32.xlu0 %v735, 32
      %v1398 = vpop.permute.xlu0 %1397
      %1399 = vrot.lane.b32.xlu0 %v738, 32
      %v1400 = vpop.permute.xlu0 %1399
      %1401 = vrot.lane.b32.xlu0 %v740, 32
      %v1402 = vpop.permute.xlu0 %1401
      %1403 = vrot.lane.b32.xlu0 %v743, 32
      %v1404 = vpop.permute.xlu0 %1403
      %1405 = vrot.lane.b32.xlu0 %v745, 32
      %v1406 = vpop.permute.xlu0 %1405
      %1407 = vrot.lane.b32.xlu0 %v748, 32
      %v1408 = vpop.permute.xlu0 %1407
      %1409 = vrot.lane.b32.xlu0 %v750, 32
      %v1410 = vpop.permute.xlu0 %1409
      %1411 = vrot.lane.b32.xlu0 %v753, 32
      %v1412 = vpop.permute.xlu0 %1411
      %1413 = vrot.lane.b32.xlu0 %v755, 32
      %v1414 = vpop.permute.xlu0 %1413
      %1415 = vrot.lane.b32.xlu0 %v758, 32
      %v1416 = vpop.permute.xlu0 %1415
      %1417 = vrot.lane.b32.xlu0 %v760, 32
      %v1418 = vpop.permute.xlu0 %1417
      %1419 = vrot.lane.b32.xlu0 %v1059, 32
      %v1420 = vpop.permute.xlu0 %1419
      %1421 = vrot.lane.b32.xlu0 %v1061, 32
      %v1422 = vpop.permute.xlu0 %1421
      %1423 = vrot.lane.b32.xlu0 %v1360, 32
      %v1424 = vpop.permute.xlu0 %1423
      %1425 = vrot.lane.b32.xlu0 %v1362, 32
      %v1426 = vpop.permute.xlu0 %1425
      %v1459 = vsel %vm280, %v401, %v585
      %v1460 = vsel %vm280, %v402, %v587
      %v1461 = vsel %vm280, %v404, %v589
      %v1462 = vsel %vm280, %v405, %v591
      %v1463 = vsel %vm280, %v407, %v593
      %v1464 = vsel %vm280, %v408, %v595
      %v1465 = vsel %vm280, %v410, %v597
      %v1466 = vsel %vm280, %v411, %v599
      %v1467 = vsel %vm280, %v413, %v601
      %v1468 = vsel %vm280, %v414, %v603
      %v1469 = vsel %vm280, %v416, %v605
      %v1470 = vsel %vm280, %v417, %v607
      %v1471 = vsel %vm280, %v419, %v609
      %v1472 = vsel %vm280, %v420, %v611
      %v1473 = vsel %vm280, %v422, %v613
      %v1474 = vsel %vm280, %v423, %v615
      %v1475 = vsel %vm280, %v425, %v617
      %v1476 = vsel %vm280, %v426, %v619
      %v1477 = vsel %vm280, %v428, %v621
      %v1478 = vsel %vm280, %v429, %v623
      %v1479 = vsel %vm280, %v431, %v625
      %v1480 = vsel %vm280, %v432, %v627
      %v1481 = vsel %vm280, %v434, %v629
      %v1482 = vsel %vm280, %v435, %v631
      %v1483 = vsel %vm280, %v437, %v633
      %v1484 = vsel %vm280, %v438, %v635
      %v1485 = vsel %vm280, %v440, %v637
      %v1486 = vsel %vm280, %v441, %v639
      %v1487 = vsel %vm280, %v443, %v641
      %v1488 = vsel %vm280, %v444, %v643
      %v1489 = vsel %vm280, %v446, %v645
      %v1490 = vsel %vm280, %v447, %v647
      %vm1491 = vcmask 64512
      %v1492 = vsel %vm1491, %v1459, %v762
      %v1493 = vsel %vm1491, %v1460, %v764
      %v1494 = vsel %vm1491, %v1461, %v766
      %v1495 = vsel %vm1491, %v1462, %v768
      %v1496 = vsel %vm1491, %v1463, %v770
      %v1497 = vsel %vm1491, %v1464, %v772
      %v1498 = vsel %vm1491, %v1465, %v774
      %v1499 = vsel %vm1491, %v1466, %v776
      %v1500 = vsel %vm1491, %v1467, %v778
      %v1501 = vsel %vm1491, %v1468, %v780
      %v1502 = vsel %vm1491, %v1469, %v782
      %v1503 = vsel %vm1491, %v1470, %v784
      %v1504 = vsel %vm1491, %v1471, %v786
      %v1505 = vsel %vm1491, %v1472, %v788
      %v1506 = vsel %vm1491, %v1473, %v790
      %v1507 = vsel %vm1491, %v1474, %v792
      %v1508 = vsel %vm1491, %v1475, %v794
      %v1509 = vsel %vm1491, %v1476, %v796
      %v1510 = vsel %vm1491, %v1477, %v798
      %v1511 = vsel %vm1491, %v1478, %v800
      %v1512 = vsel %vm1491, %v1479, %v802
      %v1513 = vsel %vm1491, %v1480, %v804
      %v1514 = vsel %vm1491, %v1481, %v806
      %v1515 = vsel %vm1491, %v1482, %v808
      %v1516 = vsel %vm1491, %v1483, %v810
      %v1517 = vsel %vm1491, %v1484, %v812
      %v1518 = vsel %vm1491, %v1485, %v814
      %v1519 = vsel %vm1491, %v1486, %v816
      %v1520 = vsel %vm1491, %v1487, %v818
      %v1521 = vsel %vm1491, %v1488, %v820
      %v1522 = vsel %vm1491, %v1489, %v822
      %v1523 = vsel %vm1491, %v1490, %v824
      %vm1524 = vcmask 97280
      %v1525 = vsel %vm1524, %v1492, %v860
      %v1526 = vsel %vm1524, %v1493, %v862
      %v1527 = vsel %vm1524, %v1494, %v864
      %v1528 = vsel %vm1524, %v1495, %v866
      %v1529 = vsel %vm1524, %v1496, %v868
      %v1530 = vsel %vm1524, %v1497, %v870
      %v1531 = vsel %vm1524, %v1498, %v872
      %v1532 = vsel %vm1524, %v1499, %v874
      %v1533 = vsel %vm1524, %v1500, %v876
      %v1534 = vsel %vm1524, %v1501, %v878
      %v1535 = vsel %vm1524, %v1502, %v880
      %v1536 = vsel %vm1524, %v1503, %v882
      %v1537 = vsel %vm1524, %v1504, %v884
      %v1538 = vsel %vm1524, %v1505, %v886
      %v1539 = vsel %vm1524, %v1506, %v888
      %v1540 = vsel %vm1524, %v1507, %v890
      %v1541 = vsel %vm1524, %v1508, %v892
      %v1542 = vsel %vm1524, %v1509, %v894
      %v1543 = vsel %vm1524, %v1510, %v896
      %v1544 = vsel %vm1524, %v1511, %v898
      %v1545 = vsel %vm1524, %v1512, %v900
      %v1546 = vsel %vm1524, %v1513, %v902
      %v1547 = vsel %vm1524, %v1514, %v904
      %v1548 = vsel %vm1524, %v1515, %v906
      %v1549 = vsel %vm1524, %v1516, %v908
      %v1550 = vsel %vm1524, %v1517, %v910
      %v1551 = vsel %vm1524, %v1518, %v912
      %v1552 = vsel %vm1524, %v1519, %v914
      %v1553 = vsel %vm1524, %v1520, %v916
      %v1554 = vsel %vm1524, %v1521, %v918
      %v1555 = vsel %vm1524, %v1522, %v920
      %v1556 = vsel %vm1524, %v1523, %v922
      %vm1557 = vcmask 130048
      %v1558 = vsel %vm1557, %v1525, %v962
      %v1559 = vsel %vm1557, %v1526, %v964
      %v1560 = vsel %vm1557, %v1527, %v966
      %v1561 = vsel %vm1557, %v1528, %v968
      %v1562 = vsel %vm1557, %v1529, %v970
      %v1563 = vsel %vm1557, %v1530, %v972
      %v1564 = vsel %vm1557, %v1531, %v974
      %v1565 = vsel %vm1557, %v1532, %v976
      %v1566 = vsel %vm1557, %v1533, %v978
      %v1567 = vsel %vm1557, %v1534, %v980
      %v1568 = vsel %vm1557, %v1535, %v982
      %v1569 = vsel %vm1557, %v1536, %v984
      %v1570 = vsel %vm1557, %v1537, %v986
      %v1571 = vsel %vm1557, %v1538, %v988
      %v1572 = vsel %vm1557, %v1539, %v990
      %v1573 = vsel %vm1557, %v1540, %v992
      %v1574 = vsel %vm1557, %v1541, %v994
      %v1575 = vsel %vm1557, %v1542, %v996
      %v1576 = vsel %vm1557, %v1543, %v998
      %v1577 = vsel %vm1557, %v1544, %v1000
      %v1578 = vsel %vm1557, %v1545, %v1002
      %v1579 = vsel %vm1557, %v1546, %v1004
      %v1580 = vsel %vm1557, %v1547, %v1006
      %v1581 = vsel %vm1557, %v1548, %v1008
      %v1582 = vsel %vm1557, %v1549, %v1010
      %v1583 = vsel %vm1557, %v1550, %v1012
      %v1584 = vsel %vm1557, %v1551, %v1014
      %v1585 = vsel %vm1557, %v1552, %v1016
      %v1586 = vsel %vm1557, %v1553, %v1018
      %v1587 = vsel %vm1557, %v1554, %v1020
      %v1588 = vsel %vm1557, %v1555, %v1022
      %v1589 = vsel %vm1557, %v1556, %v1024
      %vm1590 = vcmask 162816
      %v1591 = vsel %vm1590, %v1558, %v1063
      %v1592 = vsel %vm1590, %v1559, %v1065
      %v1593 = vsel %vm1590, %v1560, %v1067
      %v1594 = vsel %vm1590, %v1561, %v1069
      %v1595 = vsel %vm1590, %v1562, %v1071
      %v1596 = vsel %vm1590, %v1563, %v1073
      %v1597 = vsel %vm1590, %v1564, %v1075
      %v1598 = vsel %vm1590, %v1565, %v1077
      %v1599 = vsel %vm1590, %v1566, %v1079
      %v1600 = vsel %vm1590, %v1567, %v1081
      %v1601 = vsel %vm1590, %v1568, %v1083
      %v1602 = vsel %vm1590, %v1569, %v1085
      %v1603 = vsel %vm1590, %v1570, %v1087
      %v1604 = vsel %vm1590, %v1571, %v1089
      %v1605 = vsel %vm1590, %v1572, %v1091
      %v1606 = vsel %vm1590, %v1573, %v1093
      %v1607 = vsel %vm1590, %v1574, %v1095
      %v1608 = vsel %vm1590, %v1575, %v1097
      %v1609 = vsel %vm1590, %v1576, %v1099
      %v1610 = vsel %vm1590, %v1577, %v1101
      %v1611 = vsel %vm1590, %v1578, %v1103
      %v1612 = vsel %vm1590, %v1579, %v1105
      %v1613 = vsel %vm1590, %v1580, %v1107
      %v1614 = vsel %vm1590, %v1581, %v1109
      %v1615 = vsel %vm1590, %v1582, %v1111
      %v1616 = vsel %vm1590, %v1583, %v1113
      %v1617 = vsel %vm1590, %v1584, %v1115
      %v1618 = vsel %vm1590, %v1585, %v1117
      %v1619 = vsel %vm1590, %v1586, %v1119
      %v1620 = vsel %vm1590, %v1587, %v1121
      %v1621 = vsel %vm1590, %v1588, %v1123
      %v1622 = vsel %vm1590, %v1589, %v1125
      %vm1623 = vcmask 195584
      %v1624 = vsel %vm1623, %v1591, %v1161
      %v1625 = vsel %vm1623, %v1592, %v1163
      %v1626 = vsel %vm1623, %v1593, %v1165
      %v1627 = vsel %vm1623, %v1594, %v1167
      %v1628 = vsel %vm1623, %v1595, %v1169
      %v1629 = vsel %vm1623, %v1596, %v1171
      %v1630 = vsel %vm1623, %v1597, %v1173
      %v1631 = vsel %vm1623, %v1598, %v1175
      %v1632 = vsel %vm1623, %v1599, %v1177
      %v1633 = vsel %vm1623, %v1600, %v1179
      %v1634 = vsel %vm1623, %v1601, %v1181
      %v1635 = vsel %vm1623, %v1602, %v1183
      %v1636 = vsel %vm1623, %v1603, %v1185
      %v1637 = vsel %vm1623, %v1604, %v1187
      %v1638 = vsel %vm1623, %v1605, %v1189
      %v1639 = vsel %vm1623, %v1606, %v1191
      %v1640 = vsel %vm1623, %v1607, %v1193
      %v1641 = vsel %vm1623, %v1608, %v1195
      %v1642 = vsel %vm1623, %v1609, %v1197
      %v1643 = vsel %vm1623, %v1610, %v1199
      %v1644 = vsel %vm1623, %v1611, %v1201
      %v1645 = vsel %vm1623, %v1612, %v1203
      %v1646 = vsel %vm1623, %v1613, %v1205
      %v1647 = vsel %vm1623, %v1614, %v1207
      %v1648 = vsel %vm1623, %v1615, %v1209
      %v1649 = vsel %vm1623, %v1616, %v1211
      %v1650 = vsel %vm1623, %v1617, %v1213
      %v1651 = vsel %vm1623, %v1618, %v1215
      %v1652 = vsel %vm1623, %v1619, %v1217
      %v1653 = vsel %vm1623, %v1620, %v1219
      %v1654 = vsel %vm1623, %v1621, %v1221
      %v1655 = vsel %vm1623, %v1622, %v1223
      %vm1656 = vcmask 228352
      %v1657 = vsel %vm1656, %v1624, %v1263
      %v1658 = vsel %vm1656, %v1625, %v1265
      %v1659 = vsel %vm1656, %v1626, %v1267
      %v1660 = vsel %vm1656, %v1627, %v1269
      %v1661 = vsel %vm1656, %v1628, %v1271
      %v1662 = vsel %vm1656, %v1629, %v1273
      %v1663 = vsel %vm1656, %v1630, %v1275
      %v1664 = vsel %vm1656, %v1631, %v1277
      %v1665 = vsel %vm1656, %v1632, %v1279
      %v1666 = vsel %vm1656, %v1633, %v1281
      %v1667 = vsel %vm1656, %v1634, %v1283
      %v1668 = vsel %vm1656, %v1635, %v1285
      %v1669 = vsel %vm1656, %v1636, %v1287
      %v1670 = vsel %vm1656, %v1637, %v1289
      %v1671 = vsel %vm1656, %v1638, %v1291
      %v1672 = vsel %vm1656, %v1639, %v1293
      %v1673 = vsel %vm1656, %v1640, %v1295
      %v1674 = vsel %vm1656, %v1641, %v1297
      %v1675 = vsel %vm1656, %v1642, %v1299
      %v1676 = vsel %vm1656, %v1643, %v1301
      %v1677 = vsel %vm1656, %v1644, %v1303
      %v1678 = vsel %vm1656, %v1645, %v1305
      %v1679 = vsel %vm1656, %v1646, %v1307
      %v1680 = vsel %vm1656, %v1647, %v1309
      %v1681 = vsel %vm1656, %v1648, %v1311
      %v1682 = vsel %vm1656, %v1649, %v1313
      %v1683 = vsel %vm1656, %v1650, %v1315
      %v1684 = vsel %vm1656, %v1651, %v1317
      %v1685 = vsel %vm1656, %v1652, %v1319
      %v1686 = vsel %vm1656, %v1653, %v1321
      %v1687 = vsel %vm1656, %v1654, %v1323
      %v1688 = vsel %vm1656, %v1655, %v1325
      %vm1689 = vcmask 261120
      %v1690 = vsel %vm1689, %v1657, %v1364
      %v1691 = vsel %vm1689, %v1658, %v1366
      %v1692 = vsel %vm1689, %v1659, %v1368
      %v1693 = vsel %vm1689, %v1660, %v1370
      %v1694 = vsel %vm1689, %v1661, %v1372
      %v1695 = vsel %vm1689, %v1662, %v1374
      %v1696 = vsel %vm1689, %v1663, %v1376
      %v1697 = vsel %vm1689, %v1664, %v1378
      %v1698 = vsel %vm1689, %v1665, %v1380
      %v1699 = vsel %vm1689, %v1666, %v1382
      %v1700 = vsel %vm1689, %v1667, %v1384
      %v1701 = vsel %vm1689, %v1668, %v1386
      %v1702 = vsel %vm1689, %v1669, %v1388
      %v1703 = vsel %vm1689, %v1670, %v1390
      %v1704 = vsel %vm1689, %v1671, %v1392
      %v1705 = vsel %vm1689, %v1672, %v1394
      %v1706 = vsel %vm1689, %v1673, %v1396
      %v1707 = vsel %vm1689, %v1674, %v1398
      %v1708 = vsel %vm1689, %v1675, %v1400
      %v1709 = vsel %vm1689, %v1676, %v1402
      %v1710 = vsel %vm1689, %v1677, %v1404
      %v1711 = vsel %vm1689, %v1678, %v1406
      %v1712 = vsel %vm1689, %v1679, %v1408
      %v1713 = vsel %vm1689, %v1680, %v1410
      %v1714 = vsel %vm1689, %v1681, %v1412
      %v1715 = vsel %vm1689, %v1682, %v1414
      %v1716 = vsel %vm1689, %v1683, %v1416
      %v1717 = vsel %vm1689, %v1684, %v1418
      %v1718 = vsel %vm1689, %v1685, %v1420
      %v1719 = vsel %vm1689, %v1686, %v1422
      %v1720 = vsel %vm1689, %v1687, %v1424
      %v1721 = vsel %vm1689, %v1688, %v1426
      %v1722 = vpack.c.bf16 %v1691, %v1690
      %v1723 = vpack.c.bf16 %v1693, %v1692
      %v1724 = vpack.c.bf16 %v1695, %v1694
      %v1725 = vpack.c.bf16 %v1697, %v1696
      %v1726 = vpack.c.bf16 %v1699, %v1698
      %v1727 = vpack.c.bf16 %v1701, %v1700
      %v1728 = vpack.c.bf16 %v1703, %v1702
      %v1729 = vpack.c.bf16 %v1705, %v1704
      %v1730 = vpack.c.bf16 %v1707, %v1706
      %v1731 = vpack.c.bf16 %v1709, %v1708
      %v1732 = vpack.c.bf16 %v1711, %v1710
      %v1733 = vpack.c.bf16 %v1713, %v1712
      %v1734 = vpack.c.bf16 %v1715, %v1714
      %v1735 = vpack.c.bf16 %v1717, %v1716
      %v1736 = vpack.c.bf16 %v1719, %v1718
      %v1737 = vpack.c.bf16 %v1721, %v1720
      %v1738 = vld [vmem:[%s1] sm:$0xf]
      %v1739 = vld [vmem:[%s1 + $0x4] sm:$0xf]
      %v1740 = vld [vmem:[%s1 + $0x8] sm:$0xf]
      %v1741 = vld [vmem:[%s1 + $0xc] sm:$0xf]
      %v1742 = vld [vmem:[%s1 + $0x10] sm:$0x3]
      %v1743 = vld [vmem:[%s2] sm:$0x1]
      %v1745 = vperm.slane %v1743, 0
      %v1752 = vunpack.c.l.b16 %v1738
      %v1753 = vunpack.c.l.b16 %v1739
      %v1754 = vunpack.c.l.b16 %v1740
      %v1755 = vunpack.c.l.b16 %v1741
      %v1756 = vunpack.c.l.b16 %v1742
      %v1757 = vpack.c.b16 %v1753, %v1752
      %v1758 = vpack.c.b16 %v1755, %v1754
      %v1759 = vpack.c.b16 %v1756, %v1756
      %vm1762 = vcmask 293888
      %v1764 = vsel %vm1762, %v1722, 0
      %v1767 = vsel %vm1762, %v1723, 0
      %v1770 = vsel %vm1762, %v1724, 0
      %v1773 = vsel %vm1762, %v1725, 0
      %v1776 = vsel %vm1762, %v1726, 0
      %v1779 = vsel %vm1762, %v1727, 0
      %v1782 = vsel %vm1762, %v1728, 0
      %v1785 = vsel %vm1762, %v1729, 0
      %v1788 = vsel %vm1762, %v1730, 0
      %v1791 = vsel %vm1762, %v1731, 0
      %v1794 = vsel %vm1762, %v1732, 0
      %v1797 = vsel %vm1762, %v1733, 0
      %v1800 = vsel %vm1762, %v1734, 0
      %v1803 = vsel %vm1762, %v1735, 0
      %v1806 = vsel %vm1762, %v1736, 0
      %v1809 = vsel %vm1762, %v1737, 0
      %vm1811 = vcmask 1041408
      %v1813 = vsel %vm1811, %v1759, 0
      %1815 = vmatpush.bf16.msra.mxu0 0
      %1816 = vmatpush.bf16.msra.mxu0 0
      %1817 = vmatpush.bf16.msra.mxu0 0
      %1818 = vmatpush.bf16.msra.mxu0 0
      %1819 = vmatpush.bf16.msra.mxu0 0
      %1820 = vmatpush.bf16.msra.mxu0 %v1813
      %1821 = vmatpush.bf16.msra.mxu0 %v1758
      %1822 = vmatpush.bf16.msra.mxu0 %v1757
      %1823 = vmatmul.bf16.gmra.mxu0 %v1764
      %v1824 = vpop.f32.mrf.mxu0
      %v1825 = vadd.f32 %v1745, %v1824
      %v1826 = vpop.f32.mrf.mxu0
      %v1827 = vadd.f32 %v1745, %v1826
      %1828 = vmatmul.bf16.gmra.mxu0 %v1767
      %v1829 = vpop.f32.mrf.mxu0
      %v1830 = vadd.f32 %v1745, %v1829
      %v1831 = vpop.f32.mrf.mxu0
      %v1832 = vadd.f32 %v1745, %v1831
      %1833 = vmatmul.bf16.gmra.mxu0 %v1770
      %v1834 = vpop.f32.mrf.mxu0
      %v1835 = vadd.f32 %v1745, %v1834
      %v1836 = vpop.f32.mrf.mxu0
      %v1837 = vadd.f32 %v1745, %v1836
      %1838 = vmatmul.bf16.gmra.mxu0 %v1773
      %v1839 = vpop.f32.mrf.mxu0
      %v1840 = vadd.f32 %v1745, %v1839
      %v1841 = vpop.f32.mrf.mxu0
      %v1842 = vadd.f32 %v1745, %v1841
      %1843 = vmatmul.bf16.gmra.mxu0 %v1776
      %v1844 = vpop.f32.mrf.mxu0
      %v1845 = vadd.f32 %v1745, %v1844
      %v1846 = vpop.f32.mrf.mxu0
      %v1847 = vadd.f32 %v1745, %v1846
      %1848 = vmatmul.bf16.gmra.mxu0 %v1779
      %v1849 = vpop.f32.mrf.mxu0
      %v1850 = vadd.f32 %v1745, %v1849
      %v1851 = vpop.f32.mrf.mxu0
      %v1852 = vadd.f32 %v1745, %v1851
      %1853 = vmatmul.bf16.gmra.mxu0 %v1782
      %v1854 = vpop.f32.mrf.mxu0
      %v1855 = vadd.f32 %v1745, %v1854
      %v1856 = vpop.f32.mrf.mxu0
      %v1857 = vadd.f32 %v1745, %v1856
      %1858 = vmatmul.bf16.gmra.mxu0 %v1785
      %v1859 = vpop.f32.mrf.mxu0
      %v1860 = vadd.f32 %v1745, %v1859
      %v1861 = vpop.f32.mrf.mxu0
      %v1862 = vadd.f32 %v1745, %v1861
      %1863 = vmatmul.bf16.gmra.mxu0 %v1788
      %v1864 = vpop.f32.mrf.mxu0
      %v1865 = vadd.f32 %v1745, %v1864
      %v1866 = vpop.f32.mrf.mxu0
      %v1867 = vadd.f32 %v1745, %v1866
      %1868 = vmatmul.bf16.gmra.mxu0 %v1791
      %v1869 = vpop.f32.mrf.mxu0
      %v1870 = vadd.f32 %v1745, %v1869
      %v1871 = vpop.f32.mrf.mxu0
      %v1872 = vadd.f32 %v1745, %v1871
      %1873 = vmatmul.bf16.gmra.mxu0 %v1794
      %v1874 = vpop.f32.mrf.mxu0
      %v1875 = vadd.f32 %v1745, %v1874
      %v1876 = vpop.f32.mrf.mxu0
      %v1877 = vadd.f32 %v1745, %v1876
      %1878 = vmatmul.bf16.gmra.mxu0 %v1797
      %v1879 = vpop.f32.mrf.mxu0
      %v1880 = vadd.f32 %v1745, %v1879
      %v1881 = vpop.f32.mrf.mxu0
      %v1882 = vadd.f32 %v1745, %v1881
      %1883 = vmatmul.bf16.gmra.mxu0 %v1800
      %v1884 = vpop.f32.mrf.mxu0
      %v1885 = vadd.f32 %v1745, %v1884
      %v1886 = vpop.f32.mrf.mxu0
      %v1887 = vadd.f32 %v1745, %v1886
      %1888 = vmatmul.bf16.gmra.mxu0 %v1803
      %v1889 = vpop.f32.mrf.mxu0
      %v1890 = vadd.f32 %v1745, %v1889
      %v1891 = vpop.f32.mrf.mxu0
      %v1892 = vadd.f32 %v1745, %v1891
      %1893 = vmatmul.bf16.gmra.mxu0 %v1806
      %v1894 = vpop.f32.mrf.mxu0
      %v1895 = vadd.f32 %v1745, %v1894
      %v1896 = vpop.f32.mrf.mxu0
      %v1897 = vadd.f32 %v1745, %v1896
      %1898 = vmatmul.bf16.gmra.mxu0 %v1809
      %v1899 = vpop.f32.mrf.mxu0
      %v1900 = vadd.f32 %v1745, %v1899
      %v1901 = vpop.f32.mrf.mxu0
      %v1902 = vadd.f32 %v1745, %v1901
      %1903 = vdwg.mxu0
      %v1904 = vmax.f32 %v1825, 0.0
      %v1905 = vmax.f32 %v1827, 0.0
      %v1906 = vmax.f32 %v1830, 0.0
      %v1907 = vmax.f32 %v1832, 0.0
      %v1908 = vmax.f32 %v1835, 0.0
      %v1909 = vmax.f32 %v1837, 0.0
      %v1910 = vmax.f32 %v1840, 0.0
      %v1911 = vmax.f32 %v1842, 0.0
      %v1912 = vmax.f32 %v1845, 0.0
      %v1913 = vmax.f32 %v1847, 0.0
      %v1914 = vmax.f32 %v1850, 0.0
      %v1915 = vmax.f32 %v1852, 0.0
      %v1916 = vmax.f32 %v1855, 0.0
      %v1917 = vmax.f32 %v1857, 0.0
      %v1918 = vmax.f32 %v1860, 0.0
      %v1919 = vmax.f32 %v1862, 0.0
      %v1920 = vmax.f32 %v1865, 0.0
      %v1921 = vmax.f32 %v1867, 0.0
      %v1922 = vmax.f32 %v1870, 0.0
      %v1923 = vmax.f32 %v1872, 0.0
      %v1924 = vmax.f32 %v1875, 0.0
      %v1925 = vmax.f32 %v1877, 0.0
      %v1926 = vmax.f32 %v1880, 0.0
      %v1927 = vmax.f32 %v1882, 0.0
      %v1928 = vmax.f32 %v1885, 0.0
      %v1929 = vmax.f32 %v1887, 0.0
      %v1930 = vmax.f32 %v1890, 0.0
      %v1931 = vmax.f32 %v1892, 0.0
      %v1932 = vmax.f32 %v1895, 0.0
      %v1933 = vmax.f32 %v1897, 0.0
      %v1934 = vmax.f32 %v1900, 0.0
      %v1935 = vmax.f32 %v1902, 0.0
      %1936 = vst.msk [vmem:[#allocation3] sm:$0xff] %vm1689, 0.0
      %1937 = vst.msk [vmem:[#allocation3 + $0x8] sm:$0xff] %vm1689, 0.0
      %vm1938 = vcmask 254976
      %1939 = vst.msk [vmem:[#allocation3 + $0x10] sm:$0x3] %vm1938, 0.0
      %1940 = vst.msk [vmem:[#allocation3 + $0x18] sm:$0xff] %vm1689, 0.0
      %1941 = vst.msk [vmem:[#allocation3 + $0x20] sm:$0xff] %vm1689, 0.0
      %1942 = vst.msk [vmem:[#allocation3 + $0x28] sm:$0x3] %vm1938, 0.0
      %1943 = vst.msk [vmem:[#allocation3 + $0x30] sm:$0xff] %vm1689, 0.0
      %1944 = vst.msk [vmem:[#allocation3 + $0x38] sm:$0xff] %vm1689, 0.0
      %1945 = vst.msk [vmem:[#allocation3 + $0x40] sm:$0x3] %vm1938, 0.0
      %1946 = vst.msk [vmem:[#allocation3 + $0x48] sm:$0xff] %vm1689, 0.0
      %1947 = vst.msk [vmem:[#allocation3 + $0x50] sm:$0xff] %vm1689, 0.0
      %1948 = vst.msk [vmem:[#allocation3 + $0x58] sm:$0x3] %vm1938, 0.0
      %1949 = vst.msk [vmem:[#allocation3 + $0x60] sm:$0xff] %vm1689, 0.0
      %1950 = vst.msk [vmem:[#allocation3 + $0x68] sm:$0xff] %vm1689, 0.0
      %1951 = vst.msk [vmem:[#allocation3 + $0x70] sm:$0x3] %vm1938, 0.0
      %1952 = vst.msk [vmem:[#allocation3 + $0x78] sm:$0xff] %vm1689, 0.0
      %1953 = vst.msk [vmem:[#allocation3 + $0x80] sm:$0xff] %vm1689, 0.0
      %1954 = vst.msk [vmem:[#allocation3 + $0x88] sm:$0x3] %vm1938, 0.0
      %1955 = vst.msk [vmem:[#allocation3 + $0x90] sm:$0xff] %vm1689, 0.0
      %1956 = vst.msk [vmem:[#allocation3 + $0x98] sm:$0xff] %vm1689, 0.0
      %1957 = vst.msk [vmem:[#allocation3 + $0xa0] sm:$0x3] %vm1938, 0.0
      %1958 = vst.msk [vmem:[#allocation3 + $0xa8] sm:$0xff] %vm1689, 0.0
      %1959 = vst.msk [vmem:[#allocation3 + $0xb0] sm:$0xff] %vm1689, 0.0
      %1960 = vst.msk [vmem:[#allocation3 + $0xb8] sm:$0x3] %vm1938, 0.0
      %1961 = vst.msk [vmem:[#allocation3 + $0xc0] sm:$0xff] %vm1689, 0.0
      %1962 = vst.msk [vmem:[#allocation3 + $0xc8] sm:$0xff] %vm1689, 0.0
      %1963 = vst.msk [vmem:[#allocation3 + $0xd0] sm:$0x3] %vm1938, 0.0
      %1964 = vst.msk [vmem:[#allocation3 + $0xd8] sm:$0xff] %vm1689, 0.0
      %1965 = vst.msk [vmem:[#allocation3 + $0xe0] sm:$0xff] %vm1689, 0.0
      %1966 = vst.msk [vmem:[#allocation3 + $0xe8] sm:$0x3] %vm1938, 0.0
      %1967 = vst.msk [vmem:[#allocation3 + $0xf0] sm:$0xff] %vm1689, 0.0
      %1968 = vst.msk [vmem:[#allocation3 + $0xf8] sm:$0xff] %vm1689, 0.0
      %1969 = vst.msk [vmem:[#allocation3 + $0x100] sm:$0x3] %vm1938, 0.0
      %1970 = vst.msk [vmem:[#allocation3 + $0x108] sm:$0xff] %vm1689, 0.0
      %1971 = vst.msk [vmem:[#allocation3 + $0x110] sm:$0xff] %vm1689, 0.0
      %1972 = vst.msk [vmem:[#allocation3 + $0x118] sm:$0x3] %vm1938, 0.0
      %1973 = vst.msk [vmem:[#allocation3 + $0x120] sm:$0xff] %vm1689, 0.0
      %1974 = vst.msk [vmem:[#allocation3 + $0x128] sm:$0xff] %vm1689, 0.0
      %1975 = vst.msk [vmem:[#allocation3 + $0x130] sm:$0x3] %vm1938, 0.0
      %1976 = vst.msk [vmem:[#allocation3 + $0x138] sm:$0xff] %vm1689, 0.0
      %1977 = vst.msk [vmem:[#allocation3 + $0x140] sm:$0xff] %vm1689, 0.0
      %1978 = vst.msk [vmem:[#allocation3 + $0x148] sm:$0x3] %vm1938, 0.0
      %1979 = vst.msk [vmem:[#allocation3 + $0x150] sm:$0xff] %vm1689, 0.0
      %1980 = vst.msk [vmem:[#allocation3 + $0x158] sm:$0xff] %vm1689, 0.0
      %1981 = vst.msk [vmem:[#allocation3 + $0x160] sm:$0x3] %vm1938, 0.0
      %1982 = vst.msk [vmem:[#allocation3 + $0x168] sm:$0xff] %vm1689, 0.0
      %1983 = vst.msk [vmem:[#allocation3 + $0x170] sm:$0xff] %vm1689, 0.0
      %1984 = vst.msk [vmem:[#allocation3 + $0x178] sm:$0x3] %vm1938, 0.0
      %1985 = vst.msk [vmem:[#allocation3 + $0x180] sm:$0xff] %vm1689, 0.0
      %1986 = vst.msk [vmem:[#allocation3 + $0x188] sm:$0xff] %vm1689, 0.0
      %1987 = vst.msk [vmem:[#allocation3 + $0x190] sm:$0x3] %vm1938, 0.0
      %1988 = vst.msk [vmem:[#allocation3 + $0x198] sm:$0xff] %vm1689, 0.0
      %1989 = vst.msk [vmem:[#allocation3 + $0x1a0] sm:$0xff] %vm1689, 0.0
      %1990 = vst.msk [vmem:[#allocation3 + $0x1a8] sm:$0x3] %vm1938, 0.0
      %s1991 = scalar_lea.vmem [#allocation3], 24
      %1992 = vst.msk [vmem:[%s1991 + $0x1] sm:$0xff] %vm1689, %v1904
      %1993 = vst.msk [vmem:[%s1991 + $0x9] sm:$0xff] %vm1689, %v1905
      %1994 = vst.msk [vmem:[%s1991 + $0x19] sm:$0xff] %vm1689, %v1906
      %1995 = vst.msk [vmem:[%s1991 + $0x21] sm:$0xff] %vm1689, %v1907
      %1996 = vst.msk [vmem:[%s1991 + $0x31] sm:$0xff] %vm1689, %v1908
      %1997 = vst.msk [vmem:[%s1991 + $0x39] sm:$0xff] %vm1689, %v1909
      %1998 = vst.msk [vmem:[%s1991 + $0x49] sm:$0xff] %vm1689, %v1910
      %1999 = vst.msk [vmem:[%s1991 + $0x51] sm:$0xff] %vm1689, %v1911
      %2000 = vst.msk [vmem:[%s1991 + $0x61] sm:$0xff] %vm1689, %v1912
      %2001 = vst.msk [vmem:[%s1991 + $0x69] sm:$0xff] %vm1689, %v1913
      %2002 = vst.msk [vmem:[%s1991 + $0x79] sm:$0xff] %vm1689, %v1914
      %2003 = vst.msk [vmem:[%s1991 + $0x81] sm:$0xff] %vm1689, %v1915
      %2004 = vst.msk [vmem:[%s1991 + $0x91] sm:$0xff] %vm1689, %v1916
      %2005 = vst.msk [vmem:[%s1991 + $0x99] sm:$0xff] %vm1689, %v1917
      %2006 = vst.msk [vmem:[%s1991 + $0xa9] sm:$0xff] %vm1689, %v1918
      %2007 = vst.msk [vmem:[%s1991 + $0xb1] sm:$0xff] %vm1689, %v1919
      %2008 = vst.msk [vmem:[%s1991 + $0xc1] sm:$0xff] %vm1689, %v1920
      %2009 = vst.msk [vmem:[%s1991 + $0xc9] sm:$0xff] %vm1689, %v1921
      %2010 = vst.msk [vmem:[%s1991 + $0xd9] sm:$0xff] %vm1689, %v1922
      %2011 = vst.msk [vmem:[%s1991 + $0xe1] sm:$0xff] %vm1689, %v1923
      %2012 = vst.msk [vmem:[%s1991 + $0xf1] sm:$0xff] %vm1689, %v1924
      %2013 = vst.msk [vmem:[%s1991 + $0xf9] sm:$0xff] %vm1689, %v1925
      %2014 = vst.msk [vmem:[%s1991 + $0x109] sm:$0xff] %vm1689, %v1926
      %2015 = vst.msk [vmem:[%s1991 + $0x111] sm:$0xff] %vm1689, %v1927
      %2016 = vst.msk [vmem:[%s1991 + $0x121] sm:$0xff] %vm1689, %v1928
      %2017 = vst.msk [vmem:[%s1991 + $0x129] sm:$0xff] %vm1689, %v1929
      %2018 = vst.msk [vmem:[%s1991 + $0x139] sm:$0xff] %vm1689, %v1930
      %2019 = vst.msk [vmem:[%s1991 + $0x141] sm:$0xff] %vm1689, %v1931
      %2020 = vst.msk [vmem:[%s1991 + $0x151] sm:$0xff] %vm1689, %v1932
      %2021 = vst.msk [vmem:[%s1991 + $0x159] sm:$0xff] %vm1689, %v1933
      %2022 = vst.msk [vmem:[%s1991 + $0x169] sm:$0xff] %vm1689, %v1934
      %2023 = vst.msk [vmem:[%s1991 + $0x171] sm:$0xff] %vm1689, %v1935
      %v2024 = vld [vmem:[#allocation3] sm:$0xff]
      %v2025 = vld [vmem:[#allocation3 + $0x8] sm:$0xff]
      %v2026 = vld [vmem:[#allocation3 + $0x10] sm:$0x3]
      %v2027 = vld [vmem:[#allocation3 + $0x18] sm:$0xff]
      %v2028 = vld [vmem:[#allocation3 + $0x20] sm:$0xff]
      %v2029 = vld [vmem:[#allocation3 + $0x28] sm:$0x3]
      %v2030 = vld [vmem:[#allocation3 + $0x30] sm:$0xff]
      %v2031 = vld [vmem:[#allocation3 + $0x38] sm:$0xff]
      %v2032 = vld [vmem:[#allocation3 + $0x40] sm:$0x3]
      %v2033 = vld [vmem:[#allocation3 + $0x48] sm:$0xff]
      %v2034 = vld [vmem:[#allocation3 + $0x50] sm:$0xff]
      %v2035 = vld [vmem:[#allocation3 + $0x58] sm:$0x3]
      %v2036 = vld [vmem:[#allocation3 + $0x60] sm:$0xff]
      %v2037 = vld [vmem:[#allocation3 + $0x68] sm:$0xff]
      %v2038 = vld [vmem:[#allocation3 + $0x70] sm:$0x3]
      %v2039 = vld [vmem:[#allocation3 + $0x78] sm:$0xff]
      %v2040 = vld [vmem:[#allocation3 + $0x80] sm:$0xff]
      %v2041 = vld [vmem:[#allocation3 + $0x88] sm:$0x3]
      %v2042 = vld [vmem:[#allocation3 + $0x90] sm:$0xff]
      %v2043 = vld [vmem:[#allocation3 + $0x98] sm:$0xff]
      %v2044 = vld [vmem:[#allocation3 + $0xa0] sm:$0x3]
      %v2045 = vld [vmem:[#allocation3 + $0xa8] sm:$0xff]
      %v2046 = vld [vmem:[#allocation3 + $0xb0] sm:$0xff]
      %v2047 = vld [vmem:[#allocation3 + $0xb8] sm:$0x3]
      %v2048 = vld [vmem:[#allocation3 + $0xc0] sm:$0xff]
      %v2049 = vld [vmem:[#allocation3 + $0xc8] sm:$0xff]
      %v2050 = vld [vmem:[#allocation3 + $0xd0] sm:$0x3]
      %v2051 = vld [vmem:[#allocation3 + $0xd8] sm:$0xff]
      %v2052 = vld [vmem:[#allocation3 + $0xe0] sm:$0xff]
      %v2053 = vld [vmem:[#allocation3 + $0xe8] sm:$0x3]
      %v2054 = vld [vmem:[#allocation3 + $0xf0] sm:$0xff]
      %v2055 = vld [vmem:[#allocation3 + $0xf8] sm:$0xff]
      %v2056 = vld [vmem:[#allocation3 + $0x100] sm:$0x3]
      %v2057 = vld [vmem:[#allocation3 + $0x108] sm:$0xff]
      %v2058 = vld [vmem:[#allocation3 + $0x110] sm:$0xff]
      %v2059 = vld [vmem:[#allocation3 + $0x118] sm:$0x3]
      %v2060 = vld [vmem:[#allocation3 + $0x120] sm:$0xff]
      %v2061 = vld [vmem:[#allocation3 + $0x128] sm:$0xff]
      %v2062 = vld [vmem:[#allocation3 + $0x130] sm:$0x3]
      %v2063 = vld [vmem:[#allocation3 + $0x138] sm:$0xff]
      %v2064 = vld [vmem:[#allocation3 + $0x140] sm:$0xff]
      %v2065 = vld [vmem:[#allocation3 + $0x148] sm:$0x3]
      %v2066 = vld [vmem:[#allocation3 + $0x150] sm:$0xff]
      %v2067 = vld [vmem:[#allocation3 + $0x158] sm:$0xff]
      %v2068 = vld [vmem:[#allocation3 + $0x160] sm:$0x3]
      %v2069 = vld [vmem:[#allocation3 + $0x168] sm:$0xff]
      %v2070 = vld [vmem:[#allocation3 + $0x170] sm:$0xff]
      %v2071 = vld [vmem:[#allocation3 + $0x178] sm:$0x3]
      %v2072 = vld [vmem:[#allocation3 + $0x180] sm:$0xff]
      %v2073 = vld [vmem:[#allocation3 + $0x188] sm:$0xff]
      %v2074 = vld [vmem:[#allocation3 + $0x190] sm:$0x3]
      %v2075 = vld [vmem:[#allocation3 + $0x198] sm:$0xff]
      %v2076 = vld [vmem:[#allocation3 + $0x1a0] sm:$0xff]
      %v2077 = vld [vmem:[#allocation3 + $0x1a8] sm:$0x3]
      %v2126 = vrot.slane %v2024, 1
      %v2127 = vrot.slane %v2025, 1
      %v2128 = vsel %vm503, %v2126, %v2127
      %v2129 = vrot.slane %v2026, 1
      %v2130 = vsel %vm503, %v2127, %v2129
      %v2131 = vrot.slane %v2027, 1
      %v2132 = vrot.slane %v2028, 1
      %v2133 = vsel %vm503, %v2131, %v2132
      %v2134 = vrot.slane %v2029, 1
      %v2135 = vsel %vm503, %v2132, %v2134
      %v2136 = vrot.slane %v2030, 1
      %v2137 = vrot.slane %v2031, 1
      %v2138 = vsel %vm503, %v2136, %v2137
      %v2139 = vrot.slane %v2032, 1
      %v2140 = vsel %vm503, %v2137, %v2139
      %v2141 = vrot.slane %v2033, 1
      %v2142 = vrot.slane %v2034, 1
      %v2143 = vsel %vm503, %v2141, %v2142
      %v2144 = vrot.slane %v2035, 1
      %v2145 = vsel %vm503, %v2142, %v2144
      %v2146 = vrot.slane %v2036, 1
      %v2147 = vrot.slane %v2037, 1
      %v2148 = vsel %vm503, %v2146, %v2147
      %v2149 = vrot.slane %v2038, 1
      %v2150 = vsel %vm503, %v2147, %v2149
      %v2151 = vrot.slane %v2039, 1
      %v2152 = vrot.slane %v2040, 1
      %v2153 = vsel %vm503, %v2151, %v2152
      %v2154 = vrot.slane %v2041, 1
      %v2155 = vsel %vm503, %v2152, %v2154
      %v2156 = vrot.slane %v2042, 1
      %v2157 = vrot.slane %v2043, 1
      %v2158 = vsel %vm503, %v2156, %v2157
      %v2159 = vrot.slane %v2044, 1
      %v2160 = vsel %vm503, %v2157, %v2159
      %v2161 = vrot.slane %v2045, 1
      %v2162 = vrot.slane %v2046, 1
      %v2163 = vsel %vm503, %v2161, %v2162
      %v2164 = vrot.slane %v2047, 1
      %v2165 = vsel %vm503, %v2162, %v2164
      %v2166 = vrot.slane %v2048, 1
      %v2167 = vrot.slane %v2049, 1
      %v2168 = vsel %vm503, %v2166, %v2167
      %v2169 = vrot.slane %v2050, 1
      %v2170 = vsel %vm503, %v2167, %v2169
      %v2171 = vrot.slane %v2051, 1
      %v2172 = vrot.slane %v2052, 1
      %v2173 = vsel %vm503, %v2171, %v2172
      %v2174 = vrot.slane %v2053, 1
      %v2175 = vsel %vm503, %v2172, %v2174
      %v2176 = vrot.slane %v2054, 1
      %v2177 = vrot.slane %v2055, 1
      %v2178 = vsel %vm503, %v2176, %v2177
      %v2179 = vrot.slane %v2056, 1
      %v2180 = vsel %vm503, %v2177, %v2179
      %v2181 = vrot.slane %v2057, 1
      %v2182 = vrot.slane %v2058, 1
      %v2183 = vsel %vm503, %v2181, %v2182
      %v2184 = vrot.slane %v2059, 1
      %v2185 = vsel %vm503, %v2182, %v2184
      %v2186 = vrot.slane %v2060, 1
      %v2187 = vrot.slane %v2061, 1
      %v2188 = vsel %vm503, %v2186, %v2187
      %v2189 = vrot.slane %v2062, 1
      %v2190 = vsel %vm503, %v2187, %v2189
      %v2191 = vrot.slane %v2063, 1
      %v2192 = vrot.slane %v2064, 1
      %v2193 = vsel %vm503, %v2191, %v2192
      %v2194 = vrot.slane %v2065, 1
      %v2195 = vsel %vm503, %v2192, %v2194
      %v2196 = vrot.slane %v2066, 1
      %v2197 = vrot.slane %v2067, 1
      %v2198 = vsel %vm503, %v2196, %v2197
      %v2199 = vrot.slane %v2068, 1
      %v2200 = vsel %vm503, %v2197, %v2199
      %v2201 = vrot.slane %v2069, 1
      %v2202 = vrot.slane %v2070, 1
      %v2203 = vsel %vm503, %v2201, %v2202
      %v2204 = vrot.slane %v2071, 1
      %v2205 = vsel %vm503, %v2202, %v2204
      %2206 = vrot.lane.b32.xlu0 %v2128, 32
      %v2207 = vpop.permute.xlu0 %2206
      %2208 = vrot.lane.b32.xlu0 %v2130, 32
      %v2209 = vpop.permute.xlu0 %2208
      %2210 = vrot.lane.b32.xlu0 %v2133, 32
      %v2211 = vpop.permute.xlu0 %2210
      %2212 = vrot.lane.b32.xlu0 %v2135, 32
      %v2213 = vpop.permute.xlu0 %2212
      %2214 = vrot.lane.b32.xlu0 %v2138, 32
      %v2215 = vpop.permute.xlu0 %2214
      %2216 = vrot.lane.b32.xlu0 %v2140, 32
      %v2217 = vpop.permute.xlu0 %2216
      %2218 = vrot.lane.b32.xlu0 %v2143, 32
      %v2219 = vpop.permute.xlu0 %2218
      %2220 = vrot.lane.b32.xlu0 %v2145, 32
      %v2221 = vpop.permute.xlu0 %2220
      %2222 = vrot.lane.b32.xlu0 %v2148, 32
      %v2223 = vpop.permute.xlu0 %2222
      %2224 = vrot.lane.b32.xlu0 %v2150, 32
      %v2225 = vpop.permute.xlu0 %2224
      %2226 = vrot.lane.b32.xlu0 %v2153, 32
      %v2227 = vpop.permute.xlu0 %2226
      %2228 = vrot.lane.b32.xlu0 %v2155, 32
      %v2229 = vpop.permute.xlu0 %2228
      %2230 = vrot.lane.b32.xlu0 %v2158, 32
      %v2231 = vpop.permute.xlu0 %2230
      %2232 = vrot.lane.b32.xlu0 %v2160, 32
      %v2233 = vpop.permute.xlu0 %2232
      %2234 = vrot.lane.b32.xlu0 %v2163, 32
      %v2235 = vpop.permute.xlu0 %2234
      %2236 = vrot.lane.b32.xlu0 %v2165, 32
      %v2237 = vpop.permute.xlu0 %2236
      %2238 = vrot.lane.b32.xlu0 %v2168, 32
      %v2239 = vpop.permute.xlu0 %2238
      %2240 = vrot.lane.b32.xlu0 %v2170, 32
      %v2241 = vpop.permute.xlu0 %2240
      %2242 = vrot.lane.b32.xlu0 %v2173, 32
      %v2243 = vpop.permute.xlu0 %2242
      %2244 = vrot.lane.b32.xlu0 %v2175, 32
      %v2245 = vpop.permute.xlu0 %2244
      %2246 = vrot.lane.b32.xlu0 %v2178, 32
      %v2247 = vpop.permute.xlu0 %2246
      %2248 = vrot.lane.b32.xlu0 %v2180, 32
      %v2249 = vpop.permute.xlu0 %2248
      %2250 = vrot.lane.b32.xlu0 %v2183, 32
      %v2251 = vpop.permute.xlu0 %2250
      %2252 = vrot.lane.b32.xlu0 %v2185, 32
      %v2253 = vpop.permute.xlu0 %2252
      %2254 = vrot.lane.b32.xlu0 %v2188, 32
      %v2255 = vpop.permute.xlu0 %2254
      %2256 = vrot.lane.b32.xlu0 %v2190, 32
      %v2257 = vpop.permute.xlu0 %2256
      %2258 = vrot.lane.b32.xlu0 %v2193, 32
      %v2259 = vpop.permute.xlu0 %2258
      %2260 = vrot.lane.b32.xlu0 %v2195, 32
      %v2261 = vpop.permute.xlu0 %2260
      %2262 = vrot.lane.b32.xlu0 %v2198, 32
      %v2263 = vpop.permute.xlu0 %2262
      %2264 = vrot.lane.b32.xlu0 %v2200, 32
      %v2265 = vpop.permute.xlu0 %2264
      %2266 = vrot.lane.b32.xlu0 %v2203, 32
      %v2267 = vpop.permute.xlu0 %2266
      %2268 = vrot.lane.b32.xlu0 %v2205, 32
      %v2269 = vpop.permute.xlu0 %2268
      %v2302 = vrot.slane %v2024, 2
      %v2303 = vrot.slane %v2025, 2
      %v2304 = vsel %vm680, %v2302, %v2303
      %v2305 = vrot.slane %v2026, 2
      %v2306 = vsel %vm680, %v2303, %v2305
      %v2307 = vrot.slane %v2027, 2
      %v2308 = vrot.slane %v2028, 2
      %v2309 = vsel %vm680, %v2307, %v2308
      %v2310 = vrot.slane %v2029, 2
      %v2311 = vsel %vm680, %v2308, %v2310
      %v2312 = vrot.slane %v2030, 2
      %v2313 = vrot.slane %v2031, 2
      %v2314 = vsel %vm680, %v2312, %v2313
      %v2315 = vrot.slane %v2032, 2
      %v2316 = vsel %vm680, %v2313, %v2315
      %v2317 = vrot.slane %v2033, 2
      %v2318 = vrot.slane %v2034, 2
      %v2319 = vsel %vm680, %v2317, %v2318
      %v2320 = vrot.slane %v2035, 2
      %v2321 = vsel %vm680, %v2318, %v2320
      %v2322 = vrot.slane %v2036, 2
      %v2323 = vrot.slane %v2037, 2
      %v2324 = vsel %vm680, %v2322, %v2323
      %v2325 = vrot.slane %v2038, 2
      %v2326 = vsel %vm680, %v2323, %v2325
      %v2327 = vrot.slane %v2039, 2
      %v2328 = vrot.slane %v2040, 2
      %v2329 = vsel %vm680, %v2327, %v2328
      %v2330 = vrot.slane %v2041, 2
      %v2331 = vsel %vm680, %v2328, %v2330
      %v2332 = vrot.slane %v2042, 2
      %v2333 = vrot.slane %v2043, 2
      %v2334 = vsel %vm680, %v2332, %v2333
      %v2335 = vrot.slane %v2044, 2
      %v2336 = vsel %vm680, %v2333, %v2335
      %v2337 = vrot.slane %v2045, 2
      %v2338 = vrot.slane %v2046, 2
      %v2339 = vsel %vm680, %v2337, %v2338
      %v2340 = vrot.slane %v2047, 2
      %v2341 = vsel %vm680, %v2338, %v2340
      %v2342 = vrot.slane %v2048, 2
      %v2343 = vrot.slane %v2049, 2
      %v2344 = vsel %vm680, %v2342, %v2343
      %v2345 = vrot.slane %v2050, 2
      %v2346 = vsel %vm680, %v2343, %v2345
      %v2347 = vrot.slane %v2051, 2
      %v2348 = vrot.slane %v2052, 2
      %v2349 = vsel %vm680, %v2347, %v2348
      %v2350 = vrot.slane %v2053, 2
      %v2351 = vsel %vm680, %v2348, %v2350
      %v2352 = vrot.slane %v2054, 2
      %v2353 = vrot.slane %v2055, 2
      %v2354 = vsel %vm680, %v2352, %v2353
      %v2355 = vrot.slane %v2056, 2
      %v2356 = vsel %vm680, %v2353, %v2355
      %v2357 = vrot.slane %v2057, 2
      %v2358 = vrot.slane %v2058, 2
      %v2359 = vsel %vm680, %v2357, %v2358
      %v2360 = vrot.slane %v2059, 2
      %v2361 = vsel %vm680, %v2358, %v2360
      %v2362 = vrot.slane %v2060, 2
      %v2363 = vrot.slane %v2061, 2
      %v2364 = vsel %vm680, %v2362, %v2363
      %v2365 = vrot.slane %v2062, 2
      %v2366 = vsel %vm680, %v2363, %v2365
      %v2367 = vrot.slane %v2063, 2
      %v2368 = vrot.slane %v2064, 2
      %v2369 = vsel %vm680, %v2367, %v2368
      %v2370 = vrot.slane %v2065, 2
      %v2371 = vsel %vm680, %v2368, %v2370
      %v2372 = vrot.slane %v2066, 2
      %v2373 = vrot.slane %v2067, 2
      %v2374 = vsel %vm680, %v2372, %v2373
      %v2375 = vrot.slane %v2068, 2
      %v2376 = vsel %vm680, %v2373, %v2375
      %v2377 = vrot.slane %v2069, 2
      %v2378 = vrot.slane %v2070, 2
      %v2379 = vsel %vm680, %v2377, %v2378
      %v2380 = vrot.slane %v2071, 2
      %v2381 = vsel %vm680, %v2378, %v2380
      %2382 = vrot.lane.b32.xlu0 %v2304, 64
      %v2383 = vpop.permute.xlu0 %2382
      %2384 = vrot.lane.b32.xlu0 %v2306, 64
      %v2385 = vpop.permute.xlu0 %2384
      %2386 = vrot.lane.b32.xlu0 %v2309, 64
      %v2387 = vpop.permute.xlu0 %2386
      %2388 = vrot.lane.b32.xlu0 %v2311, 64
      %v2389 = vpop.permute.xlu0 %2388
      %2390 = vrot.lane.b32.xlu0 %v2314, 64
      %v2391 = vpop.permute.xlu0 %2390
      %2392 = vrot.lane.b32.xlu0 %v2316, 64
      %v2393 = vpop.permute.xlu0 %2392
      %2394 = vrot.lane.b32.xlu0 %v2319, 64
      %v2395 = vpop.permute.xlu0 %2394
      %2396 = vrot.lane.b32.xlu0 %v2321, 64
      %v2397 = vpop.permute.xlu0 %2396
      %2398 = vrot.lane.b32.xlu0 %v2324, 64
      %v2399 = vpop.permute.xlu0 %2398
      %2400 = vrot.lane.b32.xlu0 %v2326, 64
      %v2401 = vpop.permute.xlu0 %2400
      %2402 = vrot.lane.b32.xlu0 %v2329, 64
      %v2403 = vpop.permute.xlu0 %2402
      %2404 = vrot.lane.b32.xlu0 %v2331, 64
      %v2405 = vpop.permute.xlu0 %2404
      %2406 = vrot.lane.b32.xlu0 %v2334, 64
      %v2407 = vpop.permute.xlu0 %2406
      %2408 = vrot.lane.b32.xlu0 %v2336, 64
      %v2409 = vpop.permute.xlu0 %2408
      %2410 = vrot.lane.b32.xlu0 %v2339, 64
      %v2411 = vpop.permute.xlu0 %2410
      %2412 = vrot.lane.b32.xlu0 %v2341, 64
      %v2413 = vpop.permute.xlu0 %2412
      %2414 = vrot.lane.b32.xlu0 %v2344, 64
      %v2415 = vpop.permute.xlu0 %2414
      %2416 = vrot.lane.b32.xlu0 %v2346, 64
      %v2417 = vpop.permute.xlu0 %2416
      %2418 = vrot.lane.b32.xlu0 %v2349, 64
      %v2419 = vpop.permute.xlu0 %2418
      %2420 = vrot.lane.b32.xlu0 %v2351, 64
      %v2421 = vpop.permute.xlu0 %2420
      %2422 = vrot.lane.b32.xlu0 %v2354, 64
      %v2423 = vpop.permute.xlu0 %2422
      %2424 = vrot.lane.b32.xlu0 %v2356, 64
      %v2425 = vpop.permute.xlu0 %2424
      %2426 = vrot.lane.b32.xlu0 %v2359, 64
      %v2427 = vpop.permute.xlu0 %2426
      %2428 = vrot.lane.b32.xlu0 %v2361, 64
      %v2429 = vpop.permute.xlu0 %2428
      %2430 = vrot.lane.b32.xlu0 %v2364, 64
      %v2431 = vpop.permute.xlu0 %2430
      %2432 = vrot.lane.b32.xlu0 %v2366, 64
      %v2433 = vpop.permute.xlu0 %2432
      %2434 = vrot.lane.b32.xlu0 %v2369, 64
      %v2435 = vpop.permute.xlu0 %2434
      %2436 = vrot.lane.b32.xlu0 %v2371, 64
      %v2437 = vpop.permute.xlu0 %2436
      %2438 = vrot.lane.b32.xlu0 %v2374, 64
      %v2439 = vpop.permute.xlu0 %2438
      %2440 = vrot.lane.b32.xlu0 %v2376, 64
      %v2441 = vpop.permute.xlu0 %2440
      %2442 = vrot.lane.b32.xlu0 %v2379, 64
      %v2443 = vpop.permute.xlu0 %2442
      %2444 = vrot.lane.b32.xlu0 %v2381, 64
      %v2445 = vpop.permute.xlu0 %2444
      %2480 = vrot.lane.b32.xlu0 %v2027, 96
      %v2481 = vpop.permute.xlu0 %2480
      %2482 = vrot.lane.b32.xlu0 %v2028, 96
      %v2483 = vpop.permute.xlu0 %2482
      %2484 = vrot.lane.b32.xlu0 %v2030, 96
      %v2485 = vpop.permute.xlu0 %2484
      %2486 = vrot.lane.b32.xlu0 %v2031, 96
      %v2487 = vpop.permute.xlu0 %2486
      %2488 = vrot.lane.b32.xlu0 %v2033, 96
      %v2489 = vpop.permute.xlu0 %2488
      %2490 = vrot.lane.b32.xlu0 %v2034, 96
      %v2491 = vpop.permute.xlu0 %2490
      %2492 = vrot.lane.b32.xlu0 %v2036, 96
      %v2493 = vpop.permute.xlu0 %2492
      %2494 = vrot.lane.b32.xlu0 %v2037, 96
      %v2495 = vpop.permute.xlu0 %2494
      %2496 = vrot.lane.b32.xlu0 %v2039, 96
      %v2497 = vpop.permute.xlu0 %2496
      %2498 = vrot.lane.b32.xlu0 %v2040, 96
      %v2499 = vpop.permute.xlu0 %2498
      %2500 = vrot.lane.b32.xlu0 %v2042, 96
      %v2501 = vpop.permute.xlu0 %2500
      %2502 = vrot.lane.b32.xlu0 %v2043, 96
      %v2503 = vpop.permute.xlu0 %2502
      %2504 = vrot.lane.b32.xlu0 %v2045, 96
      %v2505 = vpop.permute.xlu0 %2504
      %2506 = vrot.lane.b32.xlu0 %v2046, 96
      %v2507 = vpop.permute.xlu0 %2506
      %2508 = vrot.lane.b32.xlu0 %v2048, 96
      %v2509 = vpop.permute.xlu0 %2508
      %2510 = vrot.lane.b32.xlu0 %v2049, 96
      %v2511 = vpop.permute.xlu0 %2510
      %2512 = vrot.lane.b32.xlu0 %v2051, 96
      %v2513 = vpop.permute.xlu0 %2512
      %2514 = vrot.lane.b32.xlu0 %v2052, 96
      %v2515 = vpop.permute.xlu0 %2514
      %2516 = vrot.lane.b32.xlu0 %v2054, 96
      %v2517 = vpop.permute.xlu0 %2516
      %2518 = vrot.lane.b32.xlu0 %v2055, 96
      %v2519 = vpop.permute.xlu0 %2518
      %2520 = vrot.lane.b32.xlu0 %v2057, 96
      %v2521 = vpop.permute.xlu0 %2520
      %2522 = vrot.lane.b32.xlu0 %v2058, 96
      %v2523 = vpop.permute.xlu0 %2522
      %2524 = vrot.lane.b32.xlu0 %v2060, 96
      %v2525 = vpop.permute.xlu0 %2524
      %2526 = vrot.lane.b32.xlu0 %v2061, 96
      %v2527 = vpop.permute.xlu0 %2526
      %2528 = vrot.lane.b32.xlu0 %v2063, 96
      %v2529 = vpop.permute.xlu0 %2528
      %2530 = vrot.lane.b32.xlu0 %v2064, 96
      %v2531 = vpop.permute.xlu0 %2530
      %2532 = vrot.lane.b32.xlu0 %v2066, 96
      %v2533 = vpop.permute.xlu0 %2532
      %2534 = vrot.lane.b32.xlu0 %v2067, 96
      %v2535 = vpop.permute.xlu0 %2534
      %2536 = vrot.lane.b32.xlu0 %v2069, 96
      %v2537 = vpop.permute.xlu0 %2536
      %2538 = vrot.lane.b32.xlu0 %v2070, 96
      %v2539 = vpop.permute.xlu0 %2538
      %2540 = vrot.lane.b32.xlu0 %v2072, 96
      %v2541 = vpop.permute.xlu0 %2540
      %2542 = vrot.lane.b32.xlu0 %v2073, 96
      %v2543 = vpop.permute.xlu0 %2542
      %v2577 = vrot.slane %v2072, 1
      %v2578 = vrot.slane %v2073, 1
      %v2579 = vsel %vm503, %v2577, %v2578
      %v2580 = vrot.slane %v2074, 1
      %v2581 = vsel %vm503, %v2578, %v2580
      %v2614 = vrot.slane %v2072, 2
      %v2615 = vrot.slane %v2073, 2
      %v2616 = vsel %vm680, %v2614, %v2615
      %v2617 = vrot.slane %v2074, 2
      %v2618 = vsel %vm680, %v2615, %v2617
      %2619 = vrot.lane.b32.xlu0 %v2309, 32
      %v2620 = vpop.permute.xlu0 %2619
      %2621 = vrot.lane.b32.xlu0 %v2311, 32
      %v2622 = vpop.permute.xlu0 %2621
      %2623 = vrot.lane.b32.xlu0 %v2314, 32
      %v2624 = vpop.permute.xlu0 %2623
      %2625 = vrot.lane.b32.xlu0 %v2316, 32
      %v2626 = vpop.permute.xlu0 %2625
      %2627 = vrot.lane.b32.xlu0 %v2319, 32
      %v2628 = vpop.permute.xlu0 %2627
      %2629 = vrot.lane.b32.xlu0 %v2321, 32
      %v2630 = vpop.permute.xlu0 %2629
      %2631 = vrot.lane.b32.xlu0 %v2324, 32
      %v2632 = vpop.permute.xlu0 %2631
      %2633 = vrot.lane.b32.xlu0 %v2326, 32
      %v2634 = vpop.permute.xlu0 %2633
      %2635 = vrot.lane.b32.xlu0 %v2329, 32
      %v2636 = vpop.permute.xlu0 %2635
      %2637 = vrot.lane.b32.xlu0 %v2331, 32
      %v2638 = vpop.permute.xlu0 %2637
      %2639 = vrot.lane.b32.xlu0 %v2334, 32
      %v2640 = vpop.permute.xlu0 %2639
      %2641 = vrot.lane.b32.xlu0 %v2336, 32
      %v2642 = vpop.permute.xlu0 %2641
      %2643 = vrot.lane.b32.xlu0 %v2339, 32
      %v2644 = vpop.permute.xlu0 %2643
      %2645 = vrot.lane.b32.xlu0 %v2341, 32
      %v2646 = vpop.permute.xlu0 %2645
      %2647 = vrot.lane.b32.xlu0 %v2344, 32
      %v2648 = vpop.permute.xlu0 %2647
      %2649 = vrot.lane.b32.xlu0 %v2346, 32
      %v2650 = vpop.permute.xlu0 %2649
      %2651 = vrot.lane.b32.xlu0 %v2349, 32
      %v2652 = vpop.permute.xlu0 %2651
      %2653 = vrot.lane.b32.xlu0 %v2351, 32
      %v2654 = vpop.permute.xlu0 %2653
      %2655 = vrot.lane.b32.xlu0 %v2354, 32
      %v2656 = vpop.permute.xlu0 %2655
      %2657 = vrot.lane.b32.xlu0 %v2356, 32
      %v2658 = vpop.permute.xlu0 %2657
      %2659 = vrot.lane.b32.xlu0 %v2359, 32
      %v2660 = vpop.permute.xlu0 %2659
      %2661 = vrot.lane.b32.xlu0 %v2361, 32
      %v2662 = vpop.permute.xlu0 %2661
      %2663 = vrot.lane.b32.xlu0 %v2364, 32
      %v2664 = vpop.permute.xlu0 %2663
      %2665 = vrot.lane.b32.xlu0 %v2366, 32
      %v2666 = vpop.permute.xlu0 %2665
      %2667 = vrot.lane.b32.xlu0 %v2369, 32
      %v2668 = vpop.permute.xlu0 %2667
      %2669 = vrot.lane.b32.xlu0 %v2371, 32
      %v2670 = vpop.permute.xlu0 %2669
      %2671 = vrot.lane.b32.xlu0 %v2374, 32
      %v2672 = vpop.permute.xlu0 %2671
      %2673 = vrot.lane.b32.xlu0 %v2376, 32
      %v2674 = vpop.permute.xlu0 %2673
      %2675 = vrot.lane.b32.xlu0 %v2379, 32
      %v2676 = vpop.permute.xlu0 %2675
      %2677 = vrot.lane.b32.xlu0 %v2381, 32
      %v2678 = vpop.permute.xlu0 %2677
      %2679 = vrot.lane.b32.xlu0 %v2616, 32
      %v2680 = vpop.permute.xlu0 %2679
      %2681 = vrot.lane.b32.xlu0 %v2618, 32
      %v2682 = vpop.permute.xlu0 %2681
      %2717 = vrot.lane.b32.xlu0 %v2030, 64
      %v2718 = vpop.permute.xlu0 %2717
      %2719 = vrot.lane.b32.xlu0 %v2031, 64
      %v2720 = vpop.permute.xlu0 %2719
      %2721 = vrot.lane.b32.xlu0 %v2033, 64
      %v2722 = vpop.permute.xlu0 %2721
      %2723 = vrot.lane.b32.xlu0 %v2034, 64
      %v2724 = vpop.permute.xlu0 %2723
      %2725 = vrot.lane.b32.xlu0 %v2036, 64
      %v2726 = vpop.permute.xlu0 %2725
      %2727 = vrot.lane.b32.xlu0 %v2037, 64
      %v2728 = vpop.permute.xlu0 %2727
      %2729 = vrot.lane.b32.xlu0 %v2039, 64
      %v2730 = vpop.permute.xlu0 %2729
      %2731 = vrot.lane.b32.xlu0 %v2040, 64
      %v2732 = vpop.permute.xlu0 %2731
      %2733 = vrot.lane.b32.xlu0 %v2042, 64
      %v2734 = vpop.permute.xlu0 %2733
      %2735 = vrot.lane.b32.xlu0 %v2043, 64
      %v2736 = vpop.permute.xlu0 %2735
      %2737 = vrot.lane.b32.xlu0 %v2045, 64
      %v2738 = vpop.permute.xlu0 %2737
      %2739 = vrot.lane.b32.xlu0 %v2046, 64
      %v2740 = vpop.permute.xlu0 %2739
      %2741 = vrot.lane.b32.xlu0 %v2048, 64
      %v2742 = vpop.permute.xlu0 %2741
      %2743 = vrot.lane.b32.xlu0 %v2049, 64
      %v2744 = vpop.permute.xlu0 %2743
      %2745 = vrot.lane.b32.xlu0 %v2051, 64
      %v2746 = vpop.permute.xlu0 %2745
      %2747 = vrot.lane.b32.xlu0 %v2052, 64
      %v2748 = vpop.permute.xlu0 %2747
      %2749 = vrot.lane.b32.xlu0 %v2054, 64
      %v2750 = vpop.permute.xlu0 %2749
      %2751 = vrot.lane.b32.xlu0 %v2055, 64
      %v2752 = vpop.permute.xlu0 %2751
      %2753 = vrot.lane.b32.xlu0 %v2057, 64
      %v2754 = vpop.permute.xlu0 %2753
      %2755 = vrot.lane.b32.xlu0 %v2058, 64
      %v2756 = vpop.permute.xlu0 %2755
      %2757 = vrot.lane.b32.xlu0 %v2060, 64
      %v2758 = vpop.permute.xlu0 %2757
      %2759 = vrot.lane.b32.xlu0 %v2061, 64
      %v2760 = vpop.permute.xlu0 %2759
      %2761 = vrot.lane.b32.xlu0 %v2063, 64
      %v2762 = vpop.permute.xlu0 %2761
      %2763 = vrot.lane.b32.xlu0 %v2064, 64
      %v2764 = vpop.permute.xlu0 %2763
      %2765 = vrot.lane.b32.xlu0 %v2066, 64
      %v2766 = vpop.permute.xlu0 %2765
      %2767 = vrot.lane.b32.xlu0 %v2067, 64
      %v2768 = vpop.permute.xlu0 %2767
      %2769 = vrot.lane.b32.xlu0 %v2069, 64
      %v2770 = vpop.permute.xlu0 %2769
      %2771 = vrot.lane.b32.xlu0 %v2070, 64
      %v2772 = vpop.permute.xlu0 %2771
      %2773 = vrot.lane.b32.xlu0 %v2072, 64
      %v2774 = vpop.permute.xlu0 %2773
      %2775 = vrot.lane.b32.xlu0 %v2073, 64
      %v2776 = vpop.permute.xlu0 %2775
      %2777 = vrot.lane.b32.xlu0 %v2075, 64
      %v2778 = vpop.permute.xlu0 %2777
      %2779 = vrot.lane.b32.xlu0 %v2076, 64
      %v2780 = vpop.permute.xlu0 %2779
      %v2814 = vrot.slane %v2075, 1
      %v2815 = vrot.slane %v2076, 1
      %v2816 = vsel %vm503, %v2814, %v2815
      %v2817 = vrot.slane %v2077, 1
      %v2818 = vsel %vm503, %v2815, %v2817
      %2819 = vrot.lane.b32.xlu0 %v2138, 96
      %v2820 = vpop.permute.xlu0 %2819
      %2821 = vrot.lane.b32.xlu0 %v2140, 96
      %v2822 = vpop.permute.xlu0 %2821
      %2823 = vrot.lane.b32.xlu0 %v2143, 96
      %v2824 = vpop.permute.xlu0 %2823
      %2825 = vrot.lane.b32.xlu0 %v2145, 96
      %v2826 = vpop.permute.xlu0 %2825
      %2827 = vrot.lane.b32.xlu0 %v2148, 96
      %v2828 = vpop.permute.xlu0 %2827
      %2829 = vrot.lane.b32.xlu0 %v2150, 96
      %v2830 = vpop.permute.xlu0 %2829
      %2831 = vrot.lane.b32.xlu0 %v2153, 96
      %v2832 = vpop.permute.xlu0 %2831
      %2833 = vrot.lane.b32.xlu0 %v2155, 96
      %v2834 = vpop.permute.xlu0 %2833
      %2835 = vrot.lane.b32.xlu0 %v2158, 96
      %v2836 = vpop.permute.xlu0 %2835
      %2837 = vrot.lane.b32.xlu0 %v2160, 96
      %v2838 = vpop.permute.xlu0 %2837
      %2839 = vrot.lane.b32.xlu0 %v2163, 96
      %v2840 = vpop.permute.xlu0 %2839
      %2841 = vrot.lane.b32.xlu0 %v2165, 96
      %v2842 = vpop.permute.xlu0 %2841
      %2843 = vrot.lane.b32.xlu0 %v2168, 96
      %v2844 = vpop.permute.xlu0 %2843
      %2845 = vrot.lane.b32.xlu0 %v2170, 96
      %v2846 = vpop.permute.xlu0 %2845
      %2847 = vrot.lane.b32.xlu0 %v2173, 96
      %v2848 = vpop.permute.xlu0 %2847
      %2849 = vrot.lane.b32.xlu0 %v2175, 96
      %v2850 = vpop.permute.xlu0 %2849
      %2851 = vrot.lane.b32.xlu0 %v2178, 96
      %v2852 = vpop.permute.xlu0 %2851
      %2853 = vrot.lane.b32.xlu0 %v2180, 96
      %v2854 = vpop.permute.xlu0 %2853
      %2855 = vrot.lane.b32.xlu0 %v2183, 96
      %v2856 = vpop.permute.xlu0 %2855
      %2857 = vrot.lane.b32.xlu0 %v2185, 96
      %v2858 = vpop.permute.xlu0 %2857
      %2859 = vrot.lane.b32.xlu0 %v2188, 96
      %v2860 = vpop.permute.xlu0 %2859
      %2861 = vrot.lane.b32.xlu0 %v2190, 96
      %v2862 = vpop.permute.xlu0 %2861
      %2863 = vrot.lane.b32.xlu0 %v2193, 96
      %v2864 = vpop.permute.xlu0 %2863
      %2865 = vrot.lane.b32.xlu0 %v2195, 96
      %v2866 = vpop.permute.xlu0 %2865
      %2867 = vrot.lane.b32.xlu0 %v2198, 96
      %v2868 = vpop.permute.xlu0 %2867
      %2869 = vrot.lane.b32.xlu0 %v2200, 96
      %v2870 = vpop.permute.xlu0 %2869
      %2871 = vrot.lane.b32.xlu0 %v2203, 96
      %v2872 = vpop.permute.xlu0 %2871
      %2873 = vrot.lane.b32.xlu0 %v2205, 96
      %v2874 = vpop.permute.xlu0 %2873
      %2875 = vrot.lane.b32.xlu0 %v2579, 96
      %v2876 = vpop.permute.xlu0 %2875
      %2877 = vrot.lane.b32.xlu0 %v2581, 96
      %v2878 = vpop.permute.xlu0 %2877
      %2879 = vrot.lane.b32.xlu0 %v2816, 96
      %v2880 = vpop.permute.xlu0 %2879
      %2881 = vrot.lane.b32.xlu0 %v2818, 96
      %v2882 = vpop.permute.xlu0 %2881
      %v2915 = vrot.slane %v2075, 2
      %v2916 = vrot.slane %v2076, 2
      %v2917 = vsel %vm680, %v2915, %v2916
      %v2918 = vrot.slane %v2077, 2
      %v2919 = vsel %vm680, %v2916, %v2918
      %v2952 = vsel %vm1689, %v2024, %v2207
      %v2953 = vsel %vm1689, %v2025, %v2209
      %v2954 = vsel %vm1689, %v2027, %v2211
      %v2955 = vsel %vm1689, %v2028, %v2213
      %v2956 = vsel %vm1689, %v2030, %v2215
      %v2957 = vsel %vm1689, %v2031, %v2217
      %v2958 = vsel %vm1689, %v2033, %v2219
      %v2959 = vsel %vm1689, %v2034, %v2221
      %v2960 = vsel %vm1689, %v2036, %v2223
      %v2961 = vsel %vm1689, %v2037, %v2225
      %v2962 = vsel %vm1689, %v2039, %v2227
      %v2963 = vsel %vm1689, %v2040, %v2229
      %v2964 = vsel %vm1689, %v2042, %v2231
      %v2965 = vsel %vm1689, %v2043, %v2233
      %v2966 = vsel %vm1689, %v2045, %v2235
      %v2967 = vsel %vm1689, %v2046, %v2237
      %v2968 = vsel %vm1689, %v2048, %v2239
      %v2969 = vsel %vm1689, %v2049, %v2241
      %v2970 = vsel %vm1689, %v2051, %v2243
      %v2971 = vsel %vm1689, %v2052, %v2245
      %v2972 = vsel %vm1689, %v2054, %v2247
      %v2973 = vsel %vm1689, %v2055, %v2249
      %v2974 = vsel %vm1689, %v2057, %v2251
      %v2975 = vsel %vm1689, %v2058, %v2253
      %v2976 = vsel %vm1689, %v2060, %v2255
      %v2977 = vsel %vm1689, %v2061, %v2257
      %v2978 = vsel %vm1689, %v2063, %v2259
      %v2979 = vsel %vm1689, %v2064, %v2261
      %v2980 = vsel %vm1689, %v2066, %v2263
      %v2981 = vsel %vm1689, %v2067, %v2265
      %v2982 = vsel %vm1689, %v2069, %v2267
      %v2983 = vsel %vm1689, %v2070, %v2269
      %vm2984 = vcmask 523264
      %v2985 = vsel %vm2984, %v2952, %v2383
      %v2986 = vsel %vm2984, %v2953, %v2385
      %v2987 = vsel %vm2984, %v2954, %v2387
      %v2988 = vsel %vm2984, %v2955, %v2389
      %v2989 = vsel %vm2984, %v2956, %v2391
      %v2990 = vsel %vm2984, %v2957, %v2393
      %v2991 = vsel %vm2984, %v2958, %v2395
      %v2992 = vsel %vm2984, %v2959, %v2397
      %v2993 = vsel %vm2984, %v2960, %v2399
      %v2994 = vsel %vm2984, %v2961, %v2401
      %v2995 = vsel %vm2984, %v2962, %v2403
      %v2996 = vsel %vm2984, %v2963, %v2405
      %v2997 = vsel %vm2984, %v2964, %v2407
      %v2998 = vsel %vm2984, %v2965, %v2409
      %v2999 = vsel %vm2984, %v2966, %v2411
      %v3000 = vsel %vm2984, %v2967, %v2413
      %v3001 = vsel %vm2984, %v2968, %v2415
      %v3002 = vsel %vm2984, %v2969, %v2417
      %v3003 = vsel %vm2984, %v2970, %v2419
      %v3004 = vsel %vm2984, %v2971, %v2421
      %v3005 = vsel %vm2984, %v2972, %v2423
      %v3006 = vsel %vm2984, %v2973, %v2425
      %v3007 = vsel %vm2984, %v2974, %v2427
      %v3008 = vsel %vm2984, %v2975, %v2429
      %v3009 = vsel %vm2984, %v2976, %v2431
      %v3010 = vsel %vm2984, %v2977, %v2433
      %v3011 = vsel %vm2984, %v2978, %v2435
      %v3012 = vsel %vm2984, %v2979, %v2437
      %v3013 = vsel %vm2984, %v2980, %v2439
      %v3014 = vsel %vm2984, %v2981, %v2441
      %v3015 = vsel %vm2984, %v2982, %v2443
      %v3016 = vsel %vm2984, %v2983, %v2445
      %vm3017 = vcmask 785408
      %v3018 = vsel %vm3017, %v2985, %v2481
      %v3019 = vsel %vm3017, %v2986, %v2483
      %v3020 = vsel %vm3017, %v2987, %v2485
      %v3021 = vsel %vm3017, %v2988, %v2487
      %v3022 = vsel %vm3017, %v2989, %v2489
      %v3023 = vsel %vm3017, %v2990, %v2491
      %v3024 = vsel %vm3017, %v2991, %v2493
      %v3025 = vsel %vm3017, %v2992, %v2495
      %v3026 = vsel %vm3017, %v2993, %v2497
      %v3027 = vsel %vm3017, %v2994, %v2499
      %v3028 = vsel %vm3017, %v2995, %v2501
      %v3029 = vsel %vm3017, %v2996, %v2503
      %v3030 = vsel %vm3017, %v2997, %v2505
      %v3031 = vsel %vm3017, %v2998, %v2507
      %v3032 = vsel %vm3017, %v2999, %v2509
      %v3033 = vsel %vm3017, %v3000, %v2511
      %v3034 = vsel %vm3017, %v3001, %v2513
      %v3035 = vsel %vm3017, %v3002, %v2515
      %v3036 = vsel %vm3017, %v3003, %v2517
      %v3037 = vsel %vm3017, %v3004, %v2519
      %v3038 = vsel %vm3017, %v3005, %v2521
      %v3039 = vsel %vm3017, %v3006, %v2523
      %v3040 = vsel %vm3017, %v3007, %v2525
      %v3041 = vsel %vm3017, %v3008, %v2527
      %v3042 = vsel %vm3017, %v3009, %v2529
      %v3043 = vsel %vm3017, %v3010, %v2531
      %v3044 = vsel %vm3017, %v3011, %v2533
      %v3045 = vsel %vm3017, %v3012, %v2535
      %v3046 = vsel %vm3017, %v3013, %v2537
      %v3047 = vsel %vm3017, %v3014, %v2539
      %v3048 = vsel %vm3017, %v3015, %v2541
      %v3049 = vsel %vm3017, %v3016, %v2543
      %v3050 = vsel %vm1689, %v2133, %v2620
      %v3051 = vsel %vm1689, %v2135, %v2622
      %v3052 = vsel %vm1689, %v2138, %v2624
      %v3053 = vsel %vm1689, %v2140, %v2626
      %v3054 = vsel %vm1689, %v2143, %v2628
      %v3055 = vsel %vm1689, %v2145, %v2630
      %v3056 = vsel %vm1689, %v2148, %v2632
      %v3057 = vsel %vm1689, %v2150, %v2634
      %v3058 = vsel %vm1689, %v2153, %v2636
      %v3059 = vsel %vm1689, %v2155, %v2638
      %v3060 = vsel %vm1689, %v2158, %v2640
      %v3061 = vsel %vm1689, %v2160, %v2642
      %v3062 = vsel %vm1689, %v2163, %v2644
      %v3063 = vsel %vm1689, %v2165, %v2646
      %v3064 = vsel %vm1689, %v2168, %v2648
      %v3065 = vsel %vm1689, %v2170, %v2650
      %v3066 = vsel %vm1689, %v2173, %v2652
      %v3067 = vsel %vm1689, %v2175, %v2654
      %v3068 = vsel %vm1689, %v2178, %v2656
      %v3069 = vsel %vm1689, %v2180, %v2658
      %v3070 = vsel %vm1689, %v2183, %v2660
      %v3071 = vsel %vm1689, %v2185, %v2662
      %v3072 = vsel %vm1689, %v2188, %v2664
      %v3073 = vsel %vm1689, %v2190, %v2666
      %v3074 = vsel %vm1689, %v2193, %v2668
      %v3075 = vsel %vm1689, %v2195, %v2670
      %v3076 = vsel %vm1689, %v2198, %v2672
      %v3077 = vsel %vm1689, %v2200, %v2674
      %v3078 = vsel %vm1689, %v2203, %v2676
      %v3079 = vsel %vm1689, %v2205, %v2678
      %v3080 = vsel %vm1689, %v2579, %v2680
      %v3081 = vsel %vm1689, %v2581, %v2682
      %v3082 = vsel %vm2984, %v3050, %v2718
      %v3083 = vsel %vm2984, %v3051, %v2720
      %v3084 = vsel %vm2984, %v3052, %v2722
      %v3085 = vsel %vm2984, %v3053, %v2724
      %v3086 = vsel %vm2984, %v3054, %v2726
      %v3087 = vsel %vm2984, %v3055, %v2728
      %v3088 = vsel %vm2984, %v3056, %v2730
      %v3089 = vsel %vm2984, %v3057, %v2732
      %v3090 = vsel %vm2984, %v3058, %v2734
      %v3091 = vsel %vm2984, %v3059, %v2736
      %v3092 = vsel %vm2984, %v3060, %v2738
      %v3093 = vsel %vm2984, %v3061, %v2740
      %v3094 = vsel %vm2984, %v3062, %v2742
      %v3095 = vsel %vm2984, %v3063, %v2744
      %v3096 = vsel %vm2984, %v3064, %v2746
      %v3097 = vsel %vm2984, %v3065, %v2748
      %v3098 = vsel %vm2984, %v3066, %v2750
      %v3099 = vsel %vm2984, %v3067, %v2752
      %v3100 = vsel %vm2984, %v3068, %v2754
      %v3101 = vsel %vm2984, %v3069, %v2756
      %v3102 = vsel %vm2984, %v3070, %v2758
      %v3103 = vsel %vm2984, %v3071, %v2760
      %v3104 = vsel %vm2984, %v3072, %v2762
      %v3105 = vsel %vm2984, %v3073, %v2764
      %v3106 = vsel %vm2984, %v3074, %v2766
      %v3107 = vsel %vm2984, %v3075, %v2768
      %v3108 = vsel %vm2984, %v3076, %v2770
      %v3109 = vsel %vm2984, %v3077, %v2772
      %v3110 = vsel %vm2984, %v3078, %v2774
      %v3111 = vsel %vm2984, %v3079, %v2776
      %v3112 = vsel %vm2984, %v3080, %v2778
      %v3113 = vsel %vm2984, %v3081, %v2780
      %v3114 = vsel %vm3017, %v3082, %v2820
      %v3115 = vsel %vm3017, %v3083, %v2822
      %v3116 = vsel %vm3017, %v3084, %v2824
      %v3117 = vsel %vm3017, %v3085, %v2826
      %v3118 = vsel %vm3017, %v3086, %v2828
      %v3119 = vsel %vm3017, %v3087, %v2830
      %v3120 = vsel %vm3017, %v3088, %v2832
      %v3121 = vsel %vm3017, %v3089, %v2834
      %v3122 = vsel %vm3017, %v3090, %v2836
      %v3123 = vsel %vm3017, %v3091, %v2838
      %v3124 = vsel %vm3017, %v3092, %v2840
      %v3125 = vsel %vm3017, %v3093, %v2842
      %v3126 = vsel %vm3017, %v3094, %v2844
      %v3127 = vsel %vm3017, %v3095, %v2846
      %v3128 = vsel %vm3017, %v3096, %v2848
      %v3129 = vsel %vm3017, %v3097, %v2850
      %v3130 = vsel %vm3017, %v3098, %v2852
      %v3131 = vsel %vm3017, %v3099, %v2854
      %v3132 = vsel %vm3017, %v3100, %v2856
      %v3133 = vsel %vm3017, %v3101, %v2858
      %v3134 = vsel %vm3017, %v3102, %v2860
      %v3135 = vsel %vm3017, %v3103, %v2862
      %v3136 = vsel %vm3017, %v3104, %v2864
      %v3137 = vsel %vm3017, %v3105, %v2866
      %v3138 = vsel %vm3017, %v3106, %v2868
      %v3139 = vsel %vm3017, %v3107, %v2870
      %v3140 = vsel %vm3017, %v3108, %v2872
      %v3141 = vsel %vm3017, %v3109, %v2874
      %v3142 = vsel %vm3017, %v3110, %v2876
      %v3143 = vsel %vm3017, %v3111, %v2878
      %v3144 = vsel %vm3017, %v3112, %v2880
      %v3145 = vsel %vm3017, %v3113, %v2882
      %v3146 = vpack.c.bf16 %v3019, %v3018
      %v3147 = vpack.c.bf16 %v3115, %v3114
      %v3148 = vpack.c.bf16 %v2316, %v2314
      %v3149 = vpack.c.bf16 %v3021, %v3020
      %v3150 = vpack.c.bf16 %v3117, %v3116
      %v3151 = vpack.c.bf16 %v2321, %v2319
      %v3152 = vpack.c.bf16 %v3023, %v3022
      %v3153 = vpack.c.bf16 %v3119, %v3118
      %v3154 = vpack.c.bf16 %v2326, %v2324
      %v3155 = vpack.c.bf16 %v3025, %v3024
      %v3156 = vpack.c.bf16 %v3121, %v3120
      %v3157 = vpack.c.bf16 %v2331, %v2329
      %v3158 = vpack.c.bf16 %v3027, %v3026
      %v3159 = vpack.c.bf16 %v3123, %v3122
      %v3160 = vpack.c.bf16 %v2336, %v2334
      %v3161 = vpack.c.bf16 %v3029, %v3028
      %v3162 = vpack.c.bf16 %v3125, %v3124
      %v3163 = vpack.c.bf16 %v2341, %v2339
      %v3164 = vpack.c.bf16 %v3031, %v3030
      %v3165 = vpack.c.bf16 %v3127, %v3126
      %v3166 = vpack.c.bf16 %v2346, %v2344
      %v3167 = vpack.c.bf16 %v3033, %v3032
      %v3168 = vpack.c.bf16 %v3129, %v3128
      %v3169 = vpack.c.bf16 %v2351, %v2349
      %v3170 = vpack.c.bf16 %v3035, %v3034
      %v3171 = vpack.c.bf16 %v3131, %v3130
      %v3172 = vpack.c.bf16 %v2356, %v2354
      %v3173 = vpack.c.bf16 %v3037, %v3036
      %v3174 = vpack.c.bf16 %v3133, %v3132
      %v3175 = vpack.c.bf16 %v2361, %v2359
      %v3176 = vpack.c.bf16 %v3039, %v3038
      %v3177 = vpack.c.bf16 %v3135, %v3134
      %v3178 = vpack.c.bf16 %v2366, %v2364
      %v3179 = vpack.c.bf16 %v3041, %v3040
      %v3180 = vpack.c.bf16 %v3137, %v3136
      %v3181 = vpack.c.bf16 %v2371, %v2369
      %v3182 = vpack.c.bf16 %v3043, %v3042
      %v3183 = vpack.c.bf16 %v3139, %v3138
      %v3184 = vpack.c.bf16 %v2376, %v2374
      %v3185 = vpack.c.bf16 %v3045, %v3044
      %v3186 = vpack.c.bf16 %v3141, %v3140
      %v3187 = vpack.c.bf16 %v2381, %v2379
      %v3188 = vpack.c.bf16 %v3047, %v3046
      %v3189 = vpack.c.bf16 %v3143, %v3142
      %v3190 = vpack.c.bf16 %v2618, %v2616
      %v3191 = vpack.c.bf16 %v3049, %v3048
      %v3192 = vpack.c.bf16 %v3145, %v3144
      %v3193 = vpack.c.bf16 %v2919, %v2917
      %v3194 = vld [vmem:[%s3] sm:$0xf]
      %v3195 = vld [vmem:[%s3 + $0x4] sm:$0xf]
      %v3196 = vld [vmem:[%s3 + $0x8] sm:$0xf]
      %v3197 = vld [vmem:[%s3 + $0xc] sm:$0xf]
      %v3198 = vld [vmem:[%s3 + $0x10] sm:$0xf]
      %v3199 = vld [vmem:[%s3 + $0x14] sm:$0xf]
      %v3200 = vld [vmem:[%s3 + $0x18] sm:$0xf]
      %v3201 = vld [vmem:[%s3 + $0x1c] sm:$0xf]
      %v3202 = vld [vmem:[%s3 + $0x20] sm:$0xf]
      %v3203 = vld [vmem:[%s3 + $0x24] sm:$0xf]
      %v3204 = vld [vmem:[%s3 + $0x28] sm:$0xf]
      %v3205 = vld [vmem:[%s3 + $0x2c] sm:$0xf]
      %v3206 = vld [vmem:[%s3 + $0x30] sm:$0xf]
      %v3207 = vld [vmem:[%s3 + $0x34] sm:$0xf]
      %v3208 = vld [vmem:[%s3 + $0x38] sm:$0xf]
      %v3209 = vld [vmem:[%s3 + $0x3c] sm:$0xf]
      %v3210 = vld [vmem:[%s3 + $0x40] sm:$0xf]
      %v3211 = vld [vmem:[%s3 + $0x44] sm:$0xf]
      %v3212 = vld [vmem:[%s3 + $0x48] sm:$0xf]
      %v3213 = vld [vmem:[%s3 + $0x4c] sm:$0xf]
      %v3214 = vld [vmem:[%s3 + $0x50] sm:$0xf]
      %v3215 = vld [vmem:[%s3 + $0x54] sm:$0xf]
      %v3216 = vld [vmem:[%s3 + $0x58] sm:$0xf]
      %v3217 = vld [vmem:[%s3 + $0x5c] sm:$0xf]
      %v3218 = vld [vmem:[%s3 + $0x60] sm:$0xf]
      %v3219 = vld [vmem:[%s3 + $0x64] sm:$0xf]
      %v3220 = vld [vmem:[%s3 + $0x68] sm:$0xf]
      %v3221 = vld [vmem:[%s3 + $0x6c] sm:$0xf]
      %v3222 = vld [vmem:[%s3 + $0x70] sm:$0xf]
      %v3223 = vld [vmem:[%s3 + $0x74] sm:$0xf]
      %v3224 = vld [vmem:[%s3 + $0x78] sm:$0xf]
      %v3225 = vld [vmem:[%s3 + $0x7c] sm:$0xf]
      %v3226 = vld [vmem:[%s3 + $0x80] sm:$0xf]
      %v3227 = vld [vmem:[%s3 + $0x84] sm:$0xf]
      %v3228 = vld [vmem:[%s3 + $0x88] sm:$0xf]
      %v3229 = vld [vmem:[%s3 + $0x8c] sm:$0xf]
      %v3230 = vld [vmem:[%s4] sm:$0x1]
      %v3232 = vperm.slane %v3230, 0
      %v3270 = vunpack.c.l.b16 %v3194
      %v3271 = vunpack.c.l.b16 %v3195
      %v3272 = vunpack.c.l.b16 %v3196
      %v3273 = vunpack.c.l.b16 %v3197
      %v3274 = vunpack.c.l.b16 %v3198
      %v3275 = vunpack.c.l.b16 %v3199
      %v3276 = vunpack.c.l.b16 %v3200
      %v3277 = vunpack.c.l.b16 %v3201
      %v3278 = vunpack.c.l.b16 %v3202
      %v3279 = vunpack.c.l.b16 %v3203
      %v3280 = vunpack.c.l.b16 %v3204
      %v3281 = vunpack.c.l.b16 %v3205
      %v3282 = vunpack.c.l.b16 %v3206
      %v3283 = vunpack.c.l.b16 %v3207
      %v3284 = vunpack.c.l.b16 %v3208
      %v3285 = vunpack.c.l.b16 %v3209
      %v3286 = vunpack.c.l.b16 %v3210
      %v3287 = vunpack.c.l.b16 %v3211
      %v3288 = vunpack.c.l.b16 %v3212
      %v3289 = vunpack.c.l.b16 %v3213
      %v3290 = vunpack.c.l.b16 %v3214
      %v3291 = vunpack.c.l.b16 %v3215
      %v3292 = vunpack.c.l.b16 %v3216
      %v3293 = vunpack.c.l.b16 %v3217
      %v3294 = vunpack.c.l.b16 %v3218
      %v3295 = vunpack.c.l.b16 %v3219
      %v3296 = vunpack.c.l.b16 %v3220
      %v3297 = vunpack.c.l.b16 %v3221
      %v3298 = vunpack.c.l.b16 %v3222
      %v3299 = vunpack.c.l.b16 %v3223
      %v3300 = vunpack.c.l.b16 %v3224
      %v3301 = vunpack.c.l.b16 %v3225
      %v3302 = vunpack.c.l.b16 %v3226
      %v3303 = vunpack.c.l.b16 %v3227
      %v3304 = vunpack.c.l.b16 %v3228
      %v3305 = vunpack.c.l.b16 %v3229
      %v3306 = vpack.c.b16 %v3271, %v3270
      %v3307 = vpack.c.b16 %v3273, %v3272
      %v3308 = vpack.c.b16 %v3275, %v3274
      %v3309 = vpack.c.b16 %v3277, %v3276
      %v3310 = vpack.c.b16 %v3279, %v3278
      %v3311 = vpack.c.b16 %v3281, %v3280
      %v3312 = vpack.c.b16 %v3283, %v3282
      %v3313 = vpack.c.b16 %v3285, %v3284
      %v3314 = vpack.c.b16 %v3287, %v3286
      %v3315 = vpack.c.b16 %v3289, %v3288
      %v3316 = vpack.c.b16 %v3291, %v3290
      %v3317 = vpack.c.b16 %v3293, %v3292
      %v3318 = vpack.c.b16 %v3295, %v3294
      %v3319 = vpack.c.b16 %v3297, %v3296
      %v3320 = vpack.c.b16 %v3299, %v3298
      %v3321 = vpack.c.b16 %v3301, %v3300
      %v3322 = vpack.c.b16 %v3303, %v3302
      %v3323 = vpack.c.b16 %v3305, %v3304
      %v3343 = vsel %vm1689, %v3148, 0
      %v3346 = vsel %vm1689, %v3151, 0
      %v3349 = vsel %vm1689, %v3154, 0
      %v3352 = vsel %vm1689, %v3157, 0
      %v3355 = vsel %vm1689, %v3160, 0
      %v3358 = vsel %vm1689, %v3163, 0
      %v3361 = vsel %vm1689, %v3166, 0
      %v3364 = vsel %vm1689, %v3169, 0
      %v3367 = vsel %vm1689, %v3172, 0
      %v3370 = vsel %vm1689, %v3175, 0
      %v3373 = vsel %vm1689, %v3178, 0
      %v3376 = vsel %vm1689, %v3181, 0
      %v3379 = vsel %vm1689, %v3184, 0
      %v3382 = vsel %vm1689, %v3187, 0
      %v3385 = vsel %vm1689, %v3190, 0
      %v3388 = vsel %vm1689, %v3193, 0
      %3390 = vmatpush.bf16.msra.mxu0 %v3313
      %3391 = vmatpush.bf16.msra.mxu0 %v3312
      %3392 = vmatpush.bf16.msra.mxu0 %v3311
      %3393 = vmatpush.bf16.msra.mxu0 %v3310
      %3394 = vmatpush.bf16.msra.mxu0 %v3309
      %3395 = vmatpush.bf16.msra.mxu0 %v3308
      %3396 = vmatpush.bf16.msra.mxu0 %v3307
      %3397 = vmatpush.bf16.msra.mxu0 %v3306
      %3398 = vmatmul.bf16.gmra.mxu0 %v3146
      %v3399 = vpop.f32.mrf.mxu0
      %v3400 = vadd.f32 %v3232, %v3399
      %v3401 = vpop.f32.mrf.mxu0
      %v3402 = vadd.f32 %v3232, %v3401
      %3403 = vmatmul.bf16.gmra.mxu0 %v3149
      %v3404 = vpop.f32.mrf.mxu0
      %v3405 = vadd.f32 %v3232, %v3404
      %v3406 = vpop.f32.mrf.mxu0
      %v3407 = vadd.f32 %v3232, %v3406
      %3408 = vmatmul.bf16.gmra.mxu0 %v3152
      %v3409 = vpop.f32.mrf.mxu0
      %v3410 = vadd.f32 %v3232, %v3409
      %v3411 = vpop.f32.mrf.mxu0
      %v3412 = vadd.f32 %v3232, %v3411
      %3413 = vmatmul.bf16.gmra.mxu0 %v3155
      %v3414 = vpop.f32.mrf.mxu0
      %v3415 = vadd.f32 %v3232, %v3414
      %v3416 = vpop.f32.mrf.mxu0
      %v3417 = vadd.f32 %v3232, %v3416
      %3418 = vmatmul.bf16.gmra.mxu0 %v3158
      %v3419 = vpop.f32.mrf.mxu0
      %v3420 = vadd.f32 %v3232, %v3419
      %v3421 = vpop.f32.mrf.mxu0
      %v3422 = vadd.f32 %v3232, %v3421
      %3423 = vmatmul.bf16.gmra.mxu0 %v3161
      %v3424 = vpop.f32.mrf.mxu0
      %v3425 = vadd.f32 %v3232, %v3424
      %v3426 = vpop.f32.mrf.mxu0
      %v3427 = vadd.f32 %v3232, %v3426
      %3428 = vmatmul.bf16.gmra.mxu0 %v3164
      %v3429 = vpop.f32.mrf.mxu0
      %v3430 = vadd.f32 %v3232, %v3429
      %v3431 = vpop.f32.mrf.mxu0
      %v3432 = vadd.f32 %v3232, %v3431
      %3433 = vmatmul.bf16.gmra.mxu0 %v3167
      %v3434 = vpop.f32.mrf.mxu0
      %v3435 = vadd.f32 %v3232, %v3434
      %v3436 = vpop.f32.mrf.mxu0
      %v3437 = vadd.f32 %v3232, %v3436
      %3438 = vmatmul.bf16.gmra.mxu0 %v3170
      %v3439 = vpop.f32.mrf.mxu0
      %v3440 = vadd.f32 %v3232, %v3439
      %v3441 = vpop.f32.mrf.mxu0
      %v3442 = vadd.f32 %v3232, %v3441
      %3443 = vmatmul.bf16.gmra.mxu0 %v3173
      %v3444 = vpop.f32.mrf.mxu0
      %v3445 = vadd.f32 %v3232, %v3444
      %v3446 = vpop.f32.mrf.mxu0
      %v3447 = vadd.f32 %v3232, %v3446
      %3448 = vmatmul.bf16.gmra.mxu0 %v3176
      %v3449 = vpop.f32.mrf.mxu0
      %v3450 = vadd.f32 %v3232, %v3449
      %v3451 = vpop.f32.mrf.mxu0
      %v3452 = vadd.f32 %v3232, %v3451
      %3453 = vmatmul.bf16.gmra.mxu0 %v3179
      %v3454 = vpop.f32.mrf.mxu0
      %v3455 = vadd.f32 %v3232, %v3454
      %v3456 = vpop.f32.mrf.mxu0
      %v3457 = vadd.f32 %v3232, %v3456
      %3458 = vmatmul.bf16.gmra.mxu0 %v3182
      %v3459 = vpop.f32.mrf.mxu0
      %v3460 = vadd.f32 %v3232, %v3459
      %v3461 = vpop.f32.mrf.mxu0
      %v3462 = vadd.f32 %v3232, %v3461
      %3463 = vmatmul.bf16.gmra.mxu0 %v3185
      %v3464 = vpop.f32.mrf.mxu0
      %v3465 = vadd.f32 %v3232, %v3464
      %v3466 = vpop.f32.mrf.mxu0
      %v3467 = vadd.f32 %v3232, %v3466
      %3468 = vmatmul.bf16.gmra.mxu0 %v3188
      %v3469 = vpop.f32.mrf.mxu0
      %v3470 = vadd.f32 %v3232, %v3469
      %v3471 = vpop.f32.mrf.mxu0
      %v3472 = vadd.f32 %v3232, %v3471
      %3473 = vmatmul.bf16.gmra.mxu0 %v3191
      %v3474 = vpop.f32.mrf.mxu0
      %v3475 = vadd.f32 %v3232, %v3474
      %v3476 = vpop.f32.mrf.mxu0
      %v3477 = vadd.f32 %v3232, %v3476
      %3478 = vdwg.mxu0
      %3479 = vmatpush.bf16.msra.mxu0 %v3321
      %3480 = vmatpush.bf16.msra.mxu0 %v3320
      %3481 = vmatpush.bf16.msra.mxu0 %v3319
      %3482 = vmatpush.bf16.msra.mxu0 %v3318
      %3483 = vmatpush.bf16.msra.mxu0 %v3317
      %3484 = vmatpush.bf16.msra.mxu0 %v3316
      %3485 = vmatpush.bf16.msra.mxu0 %v3315
      %3486 = vmatpush.bf16.msra.mxu0 %v3314
      %3487 = vmatmul.bf16.gmra.mxu0 %v3147
      %v3488 = vpop.f32.mrf.mxu0
      %v3489 = vadd.f32 %v3400, %v3488
      %v3490 = vpop.f32.mrf.mxu0
      %v3491 = vadd.f32 %v3402, %v3490
      %3492 = vmatmul.bf16.gmra.mxu0 %v3150
      %v3493 = vpop.f32.mrf.mxu0
      %v3494 = vadd.f32 %v3405, %v3493
      %v3495 = vpop.f32.mrf.mxu0
      %v3496 = vadd.f32 %v3407, %v3495
      %3497 = vmatmul.bf16.gmra.mxu0 %v3153
      %v3498 = vpop.f32.mrf.mxu0
      %v3499 = vadd.f32 %v3410, %v3498
      %v3500 = vpop.f32.mrf.mxu0
      %v3501 = vadd.f32 %v3412, %v3500
      %3502 = vmatmul.bf16.gmra.mxu0 %v3156
      %v3503 = vpop.f32.mrf.mxu0
      %v3504 = vadd.f32 %v3415, %v3503
      %v3505 = vpop.f32.mrf.mxu0
      %v3506 = vadd.f32 %v3417, %v3505
      %3507 = vmatmul.bf16.gmra.mxu0 %v3159
      %v3508 = vpop.f32.mrf.mxu0
      %v3509 = vadd.f32 %v3420, %v3508
      %v3510 = vpop.f32.mrf.mxu0
      %v3511 = vadd.f32 %v3422, %v3510
      %3512 = vmatmul.bf16.gmra.mxu0 %v3162
      %v3513 = vpop.f32.mrf.mxu0
      %v3514 = vadd.f32 %v3425, %v3513
      %v3515 = vpop.f32.mrf.mxu0
      %v3516 = vadd.f32 %v3427, %v3515
      %3517 = vmatmul.bf16.gmra.mxu0 %v3165
      %v3518 = vpop.f32.mrf.mxu0
      %v3519 = vadd.f32 %v3430, %v3518
      %v3520 = vpop.f32.mrf.mxu0
      %v3521 = vadd.f32 %v3432, %v3520
      %3522 = vmatmul.bf16.gmra.mxu0 %v3168
      %v3523 = vpop.f32.mrf.mxu0
      %v3524 = vadd.f32 %v3435, %v3523
      %v3525 = vpop.f32.mrf.mxu0
      %v3526 = vadd.f32 %v3437, %v3525
      %3527 = vmatmul.bf16.gmra.mxu0 %v3171
      %v3528 = vpop.f32.mrf.mxu0
      %v3529 = vadd.f32 %v3440, %v3528
      %v3530 = vpop.f32.mrf.mxu0
      %v3531 = vadd.f32 %v3442, %v3530
      %3532 = vmatmul.bf16.gmra.mxu0 %v3174
      %v3533 = vpop.f32.mrf.mxu0
      %v3534 = vadd.f32 %v3445, %v3533
      %v3535 = vpop.f32.mrf.mxu0
      %v3536 = vadd.f32 %v3447, %v3535
      %3537 = vmatmul.bf16.gmra.mxu0 %v3177
      %v3538 = vpop.f32.mrf.mxu0
      %v3539 = vadd.f32 %v3450, %v3538
      %v3540 = vpop.f32.mrf.mxu0
      %v3541 = vadd.f32 %v3452, %v3540
      %3542 = vmatmul.bf16.gmra.mxu0 %v3180
      %v3543 = vpop.f32.mrf.mxu0
      %v3544 = vadd.f32 %v3455, %v3543
      %v3545 = vpop.f32.mrf.mxu0
      %v3546 = vadd.f32 %v3457, %v3545
      %3547 = vmatmul.bf16.gmra.mxu0 %v3183
      %v3548 = vpop.f32.mrf.mxu0
      %v3549 = vadd.f32 %v3460, %v3548
      %v3550 = vpop.f32.mrf.mxu0
      %v3551 = vadd.f32 %v3462, %v3550
      %3552 = vmatmul.bf16.gmra.mxu0 %v3186
      %v3553 = vpop.f32.mrf.mxu0
      %v3554 = vadd.f32 %v3465, %v3553
      %v3555 = vpop.f32.mrf.mxu0
      %v3556 = vadd.f32 %v3467, %v3555
      %3557 = vmatmul.bf16.gmra.mxu0 %v3189
      %v3558 = vpop.f32.mrf.mxu0
      %v3559 = vadd.f32 %v3470, %v3558
      %v3560 = vpop.f32.mrf.mxu0
      %v3561 = vadd.f32 %v3472, %v3560
      %3562 = vmatmul.bf16.gmra.mxu0 %v3192
      %v3563 = vpop.f32.mrf.mxu0
      %v3564 = vadd.f32 %v3475, %v3563
      %v3565 = vpop.f32.mrf.mxu0
      %v3566 = vadd.f32 %v3477, %v3565
      %3567 = vdwg.mxu0
      %3568 = vmatpush.bf16.msra.mxu0 0
      %3569 = vmatpush.bf16.msra.mxu0 0
      %3570 = vmatpush.bf16.msra.mxu0 0
      %3571 = vmatpush.bf16.msra.mxu0 0
      %3572 = vmatpush.bf16.msra.mxu0 0
      %3573 = vmatpush.bf16.msra.mxu0 0
      %3574 = vmatpush.bf16.msra.mxu0 %v3323
      %3575 = vmatpush.bf16.msra.mxu0 %v3322
      %3576 = vmatmul.bf16.gmra.mxu0 %v3343
      %v3577 = vpop.f32.mrf.mxu0
      %v3578 = vadd.f32 %v3489, %v3577
      %v3579 = vpop.f32.mrf.mxu0
      %v3580 = vadd.f32 %v3491, %v3579
      %3581 = vmatmul.bf16.gmra.mxu0 %v3346
      %v3582 = vpop.f32.mrf.mxu0
      %v3583 = vadd.f32 %v3494, %v3582
      %v3584 = vpop.f32.mrf.mxu0
      %v3585 = vadd.f32 %v3496, %v3584
      %3586 = vmatmul.bf16.gmra.mxu0 %v3349
      %v3587 = vpop.f32.mrf.mxu0
      %v3588 = vadd.f32 %v3499, %v3587
      %v3589 = vpop.f32.mrf.mxu0
      %v3590 = vadd.f32 %v3501, %v3589
      %3591 = vmatmul.bf16.gmra.mxu0 %v3352
      %v3592 = vpop.f32.mrf.mxu0
      %v3593 = vadd.f32 %v3504, %v3592
      %v3594 = vpop.f32.mrf.mxu0
      %v3595 = vadd.f32 %v3506, %v3594
      %3596 = vmatmul.bf16.gmra.mxu0 %v3355
      %v3597 = vpop.f32.mrf.mxu0
      %v3598 = vadd.f32 %v3509, %v3597
      %v3599 = vpop.f32.mrf.mxu0
      %v3600 = vadd.f32 %v3511, %v3599
      %3601 = vmatmul.bf16.gmra.mxu0 %v3358
      %v3602 = vpop.f32.mrf.mxu0
      %v3603 = vadd.f32 %v3514, %v3602
      %v3604 = vpop.f32.mrf.mxu0
      %v3605 = vadd.f32 %v3516, %v3604
      %3606 = vmatmul.bf16.gmra.mxu0 %v3361
      %v3607 = vpop.f32.mrf.mxu0
      %v3608 = vadd.f32 %v3519, %v3607
      %v3609 = vpop.f32.mrf.mxu0
      %v3610 = vadd.f32 %v3521, %v3609
      %3611 = vmatmul.bf16.gmra.mxu0 %v3364
      %v3612 = vpop.f32.mrf.mxu0
      %v3613 = vadd.f32 %v3524, %v3612
      %v3614 = vpop.f32.mrf.mxu0
      %v3615 = vadd.f32 %v3526, %v3614
      %3616 = vmatmul.bf16.gmra.mxu0 %v3367
      %v3617 = vpop.f32.mrf.mxu0
      %v3618 = vadd.f32 %v3529, %v3617
      %v3619 = vpop.f32.mrf.mxu0
      %v3620 = vadd.f32 %v3531, %v3619
      %3621 = vmatmul.bf16.gmra.mxu0 %v3370
      %v3622 = vpop.f32.mrf.mxu0
      %v3623 = vadd.f32 %v3534, %v3622
      %v3624 = vpop.f32.mrf.mxu0
      %v3625 = vadd.f32 %v3536, %v3624
      %3626 = vmatmul.bf16.gmra.mxu0 %v3373
      %v3627 = vpop.f32.mrf.mxu0
      %v3628 = vadd.f32 %v3539, %v3627
      %v3629 = vpop.f32.mrf.mxu0
      %v3630 = vadd.f32 %v3541, %v3629
      %3631 = vmatmul.bf16.gmra.mxu0 %v3376
      %v3632 = vpop.f32.mrf.mxu0
      %v3633 = vadd.f32 %v3544, %v3632
      %v3634 = vpop.f32.mrf.mxu0
      %v3635 = vadd.f32 %v3546, %v3634
      %3636 = vmatmul.bf16.gmra.mxu0 %v3379
      %v3637 = vpop.f32.mrf.mxu0
      %v3638 = vadd.f32 %v3549, %v3637
      %v3639 = vpop.f32.mrf.mxu0
      %v3640 = vadd.f32 %v3551, %v3639
      %3641 = vmatmul.bf16.gmra.mxu0 %v3382
      %v3642 = vpop.f32.mrf.mxu0
      %v3643 = vadd.f32 %v3554, %v3642
      %v3644 = vpop.f32.mrf.mxu0
      %v3645 = vadd.f32 %v3556, %v3644
      %3646 = vmatmul.bf16.gmra.mxu0 %v3385
      %v3647 = vpop.f32.mrf.mxu0
      %v3648 = vadd.f32 %v3559, %v3647
      %v3649 = vpop.f32.mrf.mxu0
      %v3650 = vadd.f32 %v3561, %v3649
      %3651 = vmatmul.bf16.gmra.mxu0 %v3388
      %v3652 = vpop.f32.mrf.mxu0
      %v3653 = vadd.f32 %v3564, %v3652
      %v3654 = vpop.f32.mrf.mxu0
      %v3655 = vadd.f32 %v3566, %v3654
      %3656 = vdwg.mxu0
      %v3657 = vmax.f32 %v3578, 0.0
      %v3658 = vmax.f32 %v3580, 0.0
      %v3659 = vmax.f32 %v3583, 0.0
      %v3660 = vmax.f32 %v3585, 0.0
      %v3661 = vmax.f32 %v3588, 0.0
      %v3662 = vmax.f32 %v3590, 0.0
      %v3663 = vmax.f32 %v3593, 0.0
      %v3664 = vmax.f32 %v3595, 0.0
      %v3665 = vmax.f32 %v3598, 0.0
      %v3666 = vmax.f32 %v3600, 0.0
      %v3667 = vmax.f32 %v3603, 0.0
      %v3668 = vmax.f32 %v3605, 0.0
      %v3669 = vmax.f32 %v3608, 0.0
      %v3670 = vmax.f32 %v3610, 0.0
      %v3671 = vmax.f32 %v3613, 0.0
      %v3672 = vmax.f32 %v3615, 0.0
      %v3673 = vmax.f32 %v3618, 0.0
      %v3674 = vmax.f32 %v3620, 0.0
      %v3675 = vmax.f32 %v3623, 0.0
      %v3676 = vmax.f32 %v3625, 0.0
      %v3677 = vmax.f32 %v3628, 0.0
      %v3678 = vmax.f32 %v3630, 0.0
      %v3679 = vmax.f32 %v3633, 0.0
      %v3680 = vmax.f32 %v3635, 0.0
      %v3681 = vmax.f32 %v3638, 0.0
      %v3682 = vmax.f32 %v3640, 0.0
      %v3683 = vmax.f32 %v3643, 0.0
      %v3684 = vmax.f32 %v3645, 0.0
      %v3685 = vmax.f32 %v3648, 0.0
      %v3686 = vmax.f32 %v3650, 0.0
      %v3687 = vmax.f32 %v3653, 0.0
      %v3688 = vmax.f32 %v3655, 0.0
      %v3689 = vpack.c.bf16 %v3658, %v3657
      %v3690 = vpack.c.bf16 %v3660, %v3659
      %v3691 = vpack.c.bf16 %v3662, %v3661
      %v3692 = vpack.c.bf16 %v3664, %v3663
      %v3693 = vpack.c.bf16 %v3666, %v3665
      %v3694 = vpack.c.bf16 %v3668, %v3667
      %v3695 = vpack.c.bf16 %v3670, %v3669
      %v3696 = vpack.c.bf16 %v3672, %v3671
      %v3697 = vpack.c.bf16 %v3674, %v3673
      %v3698 = vpack.c.bf16 %v3676, %v3675
      %v3699 = vpack.c.bf16 %v3678, %v3677
      %v3700 = vpack.c.bf16 %v3680, %v3679
      %v3701 = vpack.c.bf16 %v3682, %v3681
      %v3702 = vpack.c.bf16 %v3684, %v3683
      %v3703 = vpack.c.bf16 %v3686, %v3685
      %v3704 = vpack.c.bf16 %v3688, %v3687
      %v3705 = vld [vmem:[%s5] sm:$0xf]
      %v3706 = vld [vmem:[%s5 + $0x4] sm:$0xf]
      %v3707 = vld [vmem:[%s5 + $0x8] sm:$0xf]
      %v3708 = vld [vmem:[%s5 + $0xc] sm:$0xf]
      %v3709 = vld [vmem:[%s6] sm:$0x1]
      %v3711 = vperm.slane %v3709, 0
      %v3717 = vunpack.c.l.b16 %v3705
      %v3718 = vunpack.c.l.b16 %v3706
      %v3719 = vunpack.c.l.b16 %v3707
      %v3720 = vunpack.c.l.b16 %v3708
      %v3721 = vpack.c.b16 %v3718, %v3717
      %v3722 = vpack.c.b16 %v3720, %v3719
      %v3726 = vsel %vm1689, %v3689, 0
      %v3729 = vsel %vm1689, %v3690, 0
      %v3732 = vsel %vm1689, %v3691, 0
      %v3735 = vsel %vm1689, %v3692, 0
      %v3738 = vsel %vm1689, %v3693, 0
      %v3741 = vsel %vm1689, %v3694, 0
      %v3744 = vsel %vm1689, %v3695, 0
      %v3747 = vsel %vm1689, %v3696, 0
      %v3750 = vsel %vm1689, %v3697, 0
      %v3753 = vsel %vm1689, %v3698, 0
      %v3756 = vsel %vm1689, %v3699, 0
      %v3759 = vsel %vm1689, %v3700, 0
      %v3762 = vsel %vm1689, %v3701, 0
      %v3765 = vsel %vm1689, %v3702, 0
      %v3768 = vsel %vm1689, %v3703, 0
      %v3771 = vsel %vm1689, %v3704, 0
      %3773 = vmatpush.bf16.msra.mxu0 0
      %3774 = vmatpush.bf16.msra.mxu0 0
      %3775 = vmatpush.bf16.msra.mxu0 0
      %3776 = vmatpush.bf16.msra.mxu0 0
      %3777 = vmatpush.bf16.msra.mxu0 0
      %3778 = vmatpush.bf16.msra.mxu0 0
      %3779 = vmatpush.bf16.msra.mxu0 %v3722
      %3780 = vmatpush.bf16.msra.mxu0 %v3721
      %3781 = vmatmul.bf16.gmra.mxu0 %v3726
      %v3782 = vpop.f32.mrf.mxu0
      %v3783 = vadd.f32 %v3711, %v3782
      %v3784 = vpop.f32.mrf.mxu0
      %v3785 = vadd.f32 %v3711, %v3784
      %3786 = vmatmul.bf16.gmra.mxu0 %v3729
      %v3787 = vpop.f32.mrf.mxu0
      %v3788 = vadd.f32 %v3711, %v3787
      %v3789 = vpop.f32.mrf.mxu0
      %v3790 = vadd.f32 %v3711, %v3789
      %3791 = vmatmul.bf16.gmra.mxu0 %v3732
      %v3792 = vpop.f32.mrf.mxu0
      %v3793 = vadd.f32 %v3711, %v3792
      %v3794 = vpop.f32.mrf.mxu0
      %v3795 = vadd.f32 %v3711, %v3794
      %3796 = vmatmul.bf16.gmra.mxu0 %v3735
      %v3797 = vpop.f32.mrf.mxu0
      %v3798 = vadd.f32 %v3711, %v3797
      %v3799 = vpop.f32.mrf.mxu0
      %v3800 = vadd.f32 %v3711, %v3799
      %3801 = vmatmul.bf16.gmra.mxu0 %v3738
      %v3802 = vpop.f32.mrf.mxu0
      %v3803 = vadd.f32 %v3711, %v3802
      %v3804 = vpop.f32.mrf.mxu0
      %v3805 = vadd.f32 %v3711, %v3804
      %3806 = vmatmul.bf16.gmra.mxu0 %v3741
      %v3807 = vpop.f32.mrf.mxu0
      %v3808 = vadd.f32 %v3711, %v3807
      %v3809 = vpop.f32.mrf.mxu0
      %v3810 = vadd.f32 %v3711, %v3809
      %3811 = vmatmul.bf16.gmra.mxu0 %v3744
      %v3812 = vpop.f32.mrf.mxu0
      %v3813 = vadd.f32 %v3711, %v3812
      %v3814 = vpop.f32.mrf.mxu0
      %v3815 = vadd.f32 %v3711, %v3814
      %3816 = vmatmul.bf16.gmra.mxu0 %v3747
      %v3817 = vpop.f32.mrf.mxu0
      %v3818 = vadd.f32 %v3711, %v3817
      %v3819 = vpop.f32.mrf.mxu0
      %v3820 = vadd.f32 %v3711, %v3819
      %3821 = vmatmul.bf16.gmra.mxu0 %v3750
      %v3822 = vpop.f32.mrf.mxu0
      %v3823 = vadd.f32 %v3711, %v3822
      %v3824 = vpop.f32.mrf.mxu0
      %v3825 = vadd.f32 %v3711, %v3824
      %3826 = vmatmul.bf16.gmra.mxu0 %v3753
      %v3827 = vpop.f32.mrf.mxu0
      %v3828 = vadd.f32 %v3711, %v3827
      %v3829 = vpop.f32.mrf.mxu0
      %v3830 = vadd.f32 %v3711, %v3829
      %3831 = vmatmul.bf16.gmra.mxu0 %v3756
      %v3832 = vpop.f32.mrf.mxu0
      %v3833 = vadd.f32 %v3711, %v3832
      %v3834 = vpop.f32.mrf.mxu0
      %v3835 = vadd.f32 %v3711, %v3834
      %3836 = vmatmul.bf16.gmra.mxu0 %v3759
      %v3837 = vpop.f32.mrf.mxu0
      %v3838 = vadd.f32 %v3711, %v3837
      %v3839 = vpop.f32.mrf.mxu0
      %v3840 = vadd.f32 %v3711, %v3839
      %3841 = vmatmul.bf16.gmra.mxu0 %v3762
      %v3842 = vpop.f32.mrf.mxu0
      %v3843 = vadd.f32 %v3711, %v3842
      %v3844 = vpop.f32.mrf.mxu0
      %v3845 = vadd.f32 %v3711, %v3844
      %3846 = vmatmul.bf16.gmra.mxu0 %v3765
      %v3847 = vpop.f32.mrf.mxu0
      %v3848 = vadd.f32 %v3711, %v3847
      %v3849 = vpop.f32.mrf.mxu0
      %v3850 = vadd.f32 %v3711, %v3849
      %3851 = vmatmul.bf16.gmra.mxu0 %v3768
      %v3852 = vpop.f32.mrf.mxu0
      %v3853 = vadd.f32 %v3711, %v3852
      %v3854 = vpop.f32.mrf.mxu0
      %v3855 = vadd.f32 %v3711, %v3854
      %3856 = vmatmul.bf16.gmra.mxu0 %v3771
      %v3857 = vpop.f32.mrf.mxu0
      %v3858 = vadd.f32 %v3711, %v3857
      %v3859 = vpop.f32.mrf.mxu0
      %v3860 = vadd.f32 %v3711, %v3859
      %3861 = vdwg.mxu0
      %v3862 = vxor.u32 %v3783, 2147483648
      %v3863 = vxor.u32 %v3785, 2147483648
      %v3864 = vxor.u32 %v3788, 2147483648
      %v3865 = vxor.u32 %v3790, 2147483648
      %v3866 = vxor.u32 %v3793, 2147483648
      %v3867 = vxor.u32 %v3795, 2147483648
      %v3868 = vxor.u32 %v3798, 2147483648
      %v3869 = vxor.u32 %v3800, 2147483648
      %v3870 = vxor.u32 %v3803, 2147483648
      %v3871 = vxor.u32 %v3805, 2147483648
      %v3872 = vxor.u32 %v3808, 2147483648
      %v3873 = vxor.u32 %v3810, 2147483648
      %v3874 = vxor.u32 %v3813, 2147483648
      %v3875 = vxor.u32 %v3815, 2147483648
      %v3876 = vxor.u32 %v3818, 2147483648
      %v3877 = vxor.u32 %v3820, 2147483648
      %v3878 = vxor.u32 %v3823, 2147483648
      %v3879 = vxor.u32 %v3825, 2147483648
      %v3880 = vxor.u32 %v3828, 2147483648
      %v3881 = vxor.u32 %v3830, 2147483648
      %v3882 = vxor.u32 %v3833, 2147483648
      %v3883 = vxor.u32 %v3835, 2147483648
      %v3884 = vxor.u32 %v3838, 2147483648
      %v3885 = vxor.u32 %v3840, 2147483648
      %v3886 = vxor.u32 %v3843, 2147483648
      %v3887 = vxor.u32 %v3845, 2147483648
      %v3888 = vxor.u32 %v3848, 2147483648
      %v3889 = vxor.u32 %v3850, 2147483648
      %v3890 = vxor.u32 %v3853, 2147483648
      %v3891 = vxor.u32 %v3855, 2147483648
      %v3892 = vxor.u32 %v3858, 2147483648
      %v3893 = vxor.u32 %v3860, 2147483648
      %v3894 = vmul.f32 %v3862, 1.442695
      %v3895 = vpow.pop %v3894
      %v3896 = vmul.f32 %v3863, 1.442695
      %v3897 = vpow.pop %v3896
      %v3898 = vmul.f32 %v3864, 1.442695
      %v3899 = vpow.pop %v3898
      %v3900 = vmul.f32 %v3865, 1.442695
      %v3901 = vpow.pop %v3900
      %v3902 = vmul.f32 %v3866, 1.442695
      %v3903 = vpow.pop %v3902
      %v3904 = vmul.f32 %v3867, 1.442695
      %v3905 = vpow.pop %v3904
      %v3906 = vmul.f32 %v3868, 1.442695
      %v3907 = vpow.pop %v3906
      %v3908 = vmul.f32 %v3869, 1.442695
      %v3909 = vpow.pop %v3908
      %v3910 = vmul.f32 %v3870, 1.442695
      %v3911 = vpow.pop %v3910
      %v3912 = vmul.f32 %v3871, 1.442695
      %v3913 = vpow.pop %v3912
      %v3914 = vmul.f32 %v3872, 1.442695
      %v3915 = vpow.pop %v3914
      %v3916 = vmul.f32 %v3873, 1.442695
      %v3917 = vpow.pop %v3916
      %v3918 = vmul.f32 %v3874, 1.442695
      %v3919 = vpow.pop %v3918
      %v3920 = vmul.f32 %v3875, 1.442695
      %v3921 = vpow.pop %v3920
      %v3922 = vmul.f32 %v3876, 1.442695
      %v3923 = vpow.pop %v3922
      %v3924 = vmul.f32 %v3877, 1.442695
      %v3925 = vpow.pop %v3924
      %v3926 = vmul.f32 %v3878, 1.442695
      %v3927 = vpow.pop %v3926
      %v3928 = vmul.f32 %v3879, 1.442695
      %v3929 = vpow.pop %v3928
      %v3930 = vmul.f32 %v3880, 1.442695
      %v3931 = vpow.pop %v3930
      %v3932 = vmul.f32 %v3881, 1.442695
      %v3933 = vpow.pop %v3932
      %v3934 = vmul.f32 %v3882, 1.442695
      %v3935 = vpow.pop %v3934
      %v3936 = vmul.f32 %v3883, 1.442695
      %v3937 = vpow.pop %v3936
      %v3938 = vmul.f32 %v3884, 1.442695
      %v3939 = vpow.pop %v3938
      %v3940 = vmul.f32 %v3885, 1.442695
      %v3941 = vpow.pop %v3940
      %v3942 = vmul.f32 %v3886, 1.442695
      %v3943 = vpow.pop %v3942
      %v3944 = vmul.f32 %v3887, 1.442695
      %v3945 = vpow.pop %v3944
      %v3946 = vmul.f32 %v3888, 1.442695
      %v3947 = vpow.pop %v3946
      %v3948 = vmul.f32 %v3889, 1.442695
      %v3949 = vpow.pop %v3948
      %v3950 = vmul.f32 %v3890, 1.442695
      %v3951 = vpow.pop %v3950
      %v3952 = vmul.f32 %v3891, 1.442695
      %v3953 = vpow.pop %v3952
      %v3954 = vmul.f32 %v3892, 1.442695
      %v3955 = vpow.pop %v3954
      %v3956 = vmul.f32 %v3893, 1.442695
      %v3957 = vpow.pop %v3956
      %v3958 = vadd.f32 %v3895, 1.0
      %v3959 = vadd.f32 %v3897, 1.0
      %v3960 = vadd.f32 %v3899, 1.0
      %v3961 = vadd.f32 %v3901, 1.0
      %v3962 = vadd.f32 %v3903, 1.0
      %v3963 = vadd.f32 %v3905, 1.0
      %v3964 = vadd.f32 %v3907, 1.0
      %v3965 = vadd.f32 %v3909, 1.0
      %v3966 = vadd.f32 %v3911, 1.0
      %v3967 = vadd.f32 %v3913, 1.0
      %v3968 = vadd.f32 %v3915, 1.0
      %v3969 = vadd.f32 %v3917, 1.0
      %v3970 = vadd.f32 %v3919, 1.0
      %v3971 = vadd.f32 %v3921, 1.0
      %v3972 = vadd.f32 %v3923, 1.0
      %v3973 = vadd.f32 %v3925, 1.0
      %v3974 = vadd.f32 %v3927, 1.0
      %v3975 = vadd.f32 %v3929, 1.0
      %v3976 = vadd.f32 %v3931, 1.0
      %v3977 = vadd.f32 %v3933, 1.0
      %v3978 = vadd.f32 %v3935, 1.0
      %v3979 = vadd.f32 %v3937, 1.0
      %v3980 = vadd.f32 %v3939, 1.0
      %v3981 = vadd.f32 %v3941, 1.0
      %v3982 = vadd.f32 %v3943, 1.0
      %v3983 = vadd.f32 %v3945, 1.0
      %v3984 = vadd.f32 %v3947, 1.0
      %v3985 = vadd.f32 %v3949, 1.0
      %v3986 = vadd.f32 %v3951, 1.0
      %v3987 = vadd.f32 %v3953, 1.0
      %v3988 = vadd.f32 %v3955, 1.0
      %v3989 = vadd.f32 %v3957, 1.0
      %v3990 = vrcp.pop %v3958
      %v3991 = vmul.f32 %v3958, %v3990
      %v3992 = vsub.f32 1.0, %v3991
      %v3993 = vmul.f32 %v3990, %v3992
      %v3994 = vadd.f32 %v3990, %v3993
      %vm3995 = vweird.f32 %v3958
      %vm3996 = vweird.f32 %v3990
      %vm3997 = vmor %vm3995, %vm3996
      %v3998 = vsel %vm3997, %v3990, %v3994
      %v3999 = vand.u32 2147483647, %v3958
      %vm4000 = vcmp.eq.f32.partialorder %v3999, 8.507059e+37
      %v4001 = vand.u32 %v3958, 2147483648
      %v4002 = vor.u32 1.1754944e-38, %v4001
      %v4003 = vsel %vm4000, %v4002, %v3998
      %v4004 = vmul.f32 1.0, %v4003
      %v4005 = vrcp.pop %v3959
      %v4006 = vmul.f32 %v3959, %v4005
      %v4007 = vsub.f32 1.0, %v4006
      %v4008 = vmul.f32 %v4005, %v4007
      %v4009 = vadd.f32 %v4005, %v4008
      %vm4010 = vweird.f32 %v3959
      %vm4011 = vweird.f32 %v4005
      %vm4012 = vmor %vm4010, %vm4011
      %v4013 = vsel %vm4012, %v4005, %v4009
      %v4014 = vand.u32 2147483647, %v3959
      %vm4015 = vcmp.eq.f32.partialorder %v4014, 8.507059e+37
      %v4016 = vand.u32 %v3959, 2147483648
      %v4017 = vor.u32 1.1754944e-38, %v4016
      %v4018 = vsel %vm4015, %v4017, %v4013
      %v4019 = vmul.f32 1.0, %v4018
      %v4020 = vrcp.pop %v3960
      %v4021 = vmul.f32 %v3960, %v4020
      %v4022 = vsub.f32 1.0, %v4021
      %v4023 = vmul.f32 %v4020, %v4022
      %v4024 = vadd.f32 %v4020, %v4023
      %vm4025 = vweird.f32 %v3960
      %vm4026 = vweird.f32 %v4020
      %vm4027 = vmor %vm4025, %vm4026
      %v4028 = vsel %vm4027, %v4020, %v4024
      %v4029 = vand.u32 2147483647, %v3960
      %vm4030 = vcmp.eq.f32.partialorder %v4029, 8.507059e+37
      %v4031 = vand.u32 %v3960, 2147483648
      %v4032 = vor.u32 1.1754944e-38, %v4031
      %v4033 = vsel %vm4030, %v4032, %v4028
      %v4034 = vmul.f32 1.0, %v4033
      %v4035 = vrcp.pop %v3961
      %v4036 = vmul.f32 %v3961, %v4035
      %v4037 = vsub.f32 1.0, %v4036
      %v4038 = vmul.f32 %v4035, %v4037
      %v4039 = vadd.f32 %v4035, %v4038
      %vm4040 = vweird.f32 %v3961
      %vm4041 = vweird.f32 %v4035
      %vm4042 = vmor %vm4040, %vm4041
      %v4043 = vsel %vm4042, %v4035, %v4039
      %v4044 = vand.u32 2147483647, %v3961
      %vm4045 = vcmp.eq.f32.partialorder %v4044, 8.507059e+37
      %v4046 = vand.u32 %v3961, 2147483648
      %v4047 = vor.u32 1.1754944e-38, %v4046
      %v4048 = vsel %vm4045, %v4047, %v4043
      %v4049 = vmul.f32 1.0, %v4048
      %v4050 = vrcp.pop %v3962
      %v4051 = vmul.f32 %v3962, %v4050
      %v4052 = vsub.f32 1.0, %v4051
      %v4053 = vmul.f32 %v4050, %v4052
      %v4054 = vadd.f32 %v4050, %v4053
      %vm4055 = vweird.f32 %v3962
      %vm4056 = vweird.f32 %v4050
      %vm4057 = vmor %vm4055, %vm4056
      %v4058 = vsel %vm4057, %v4050, %v4054
      %v4059 = vand.u32 2147483647, %v3962
      %vm4060 = vcmp.eq.f32.partialorder %v4059, 8.507059e+37
      %v4061 = vand.u32 %v3962, 2147483648
      %v4062 = vor.u32 1.1754944e-38, %v4061
      %v4063 = vsel %vm4060, %v4062, %v4058
      %v4064 = vmul.f32 1.0, %v4063
      %v4065 = vrcp.pop %v3963
      %v4066 = vmul.f32 %v3963, %v4065
      %v4067 = vsub.f32 1.0, %v4066
      %v4068 = vmul.f32 %v4065, %v4067
      %v4069 = vadd.f32 %v4065, %v4068
      %vm4070 = vweird.f32 %v3963
      %vm4071 = vweird.f32 %v4065
      %vm4072 = vmor %vm4070, %vm4071
      %v4073 = vsel %vm4072, %v4065, %v4069
      %v4074 = vand.u32 2147483647, %v3963
      %vm4075 = vcmp.eq.f32.partialorder %v4074, 8.507059e+37
      %v4076 = vand.u32 %v3963, 2147483648
      %v4077 = vor.u32 1.1754944e-38, %v4076
      %v4078 = vsel %vm4075, %v4077, %v4073
      %v4079 = vmul.f32 1.0, %v4078
      %v4080 = vrcp.pop %v3964
      %v4081 = vmul.f32 %v3964, %v4080
      %v4082 = vsub.f32 1.0, %v4081
      %v4083 = vmul.f32 %v4080, %v4082
      %v4084 = vadd.f32 %v4080, %v4083
      %vm4085 = vweird.f32 %v3964
      %vm4086 = vweird.f32 %v4080
      %vm4087 = vmor %vm4085, %vm4086
      %v4088 = vsel %vm4087, %v4080, %v4084
      %v4089 = vand.u32 2147483647, %v3964
      %vm4090 = vcmp.eq.f32.partialorder %v4089, 8.507059e+37
      %v4091 = vand.u32 %v3964, 2147483648
      %v4092 = vor.u32 1.1754944e-38, %v4091
      %v4093 = vsel %vm4090, %v4092, %v4088
      %v4094 = vmul.f32 1.0, %v4093
      %v4095 = vrcp.pop %v3965
      %v4096 = vmul.f32 %v3965, %v4095
      %v4097 = vsub.f32 1.0, %v4096
      %v4098 = vmul.f32 %v4095, %v4097
      %v4099 = vadd.f32 %v4095, %v4098
      %vm4100 = vweird.f32 %v3965
      %vm4101 = vweird.f32 %v4095
      %vm4102 = vmor %vm4100, %vm4101
      %v4103 = vsel %vm4102, %v4095, %v4099
      %v4104 = vand.u32 2147483647, %v3965
      %vm4105 = vcmp.eq.f32.partialorder %v4104, 8.507059e+37
      %v4106 = vand.u32 %v3965, 2147483648
      %v4107 = vor.u32 1.1754944e-38, %v4106
      %v4108 = vsel %vm4105, %v4107, %v4103
      %v4109 = vmul.f32 1.0, %v4108
      %v4110 = vrcp.pop %v3966
      %v4111 = vmul.f32 %v3966, %v4110
      %v4112 = vsub.f32 1.0, %v4111
      %v4113 = vmul.f32 %v4110, %v4112
      %v4114 = vadd.f32 %v4110, %v4113
      %vm4115 = vweird.f32 %v3966
      %vm4116 = vweird.f32 %v4110
      %vm4117 = vmor %vm4115, %vm4116
      %v4118 = vsel %vm4117, %v4110, %v4114
      %v4119 = vand.u32 2147483647, %v3966
      %vm4120 = vcmp.eq.f32.partialorder %v4119, 8.507059e+37
      %v4121 = vand.u32 %v3966, 2147483648
      %v4122 = vor.u32 1.1754944e-38, %v4121
      %v4123 = vsel %vm4120, %v4122, %v4118
      %v4124 = vmul.f32 1.0, %v4123
      %v4125 = vrcp.pop %v3967
      %v4126 = vmul.f32 %v3967, %v4125
      %v4127 = vsub.f32 1.0, %v4126
      %v4128 = vmul.f32 %v4125, %v4127
      %v4129 = vadd.f32 %v4125, %v4128
      %vm4130 = vweird.f32 %v3967
      %vm4131 = vweird.f32 %v4125
      %vm4132 = vmor %vm4130, %vm4131
      %v4133 = vsel %vm4132, %v4125, %v4129
      %v4134 = vand.u32 2147483647, %v3967
      %vm4135 = vcmp.eq.f32.partialorder %v4134, 8.507059e+37
      %v4136 = vand.u32 %v3967, 2147483648
      %v4137 = vor.u32 1.1754944e-38, %v4136
      %v4138 = vsel %vm4135, %v4137, %v4133
      %v4139 = vmul.f32 1.0, %v4138
      %v4140 = vrcp.pop %v3968
      %v4141 = vmul.f32 %v3968, %v4140
      %v4142 = vsub.f32 1.0, %v4141
      %v4143 = vmul.f32 %v4140, %v4142
      %v4144 = vadd.f32 %v4140, %v4143
      %vm4145 = vweird.f32 %v3968
      %vm4146 = vweird.f32 %v4140
      %vm4147 = vmor %vm4145, %vm4146
      %v4148 = vsel %vm4147, %v4140, %v4144
      %v4149 = vand.u32 2147483647, %v3968
      %vm4150 = vcmp.eq.f32.partialorder %v4149, 8.507059e+37
      %v4151 = vand.u32 %v3968, 2147483648
      %v4152 = vor.u32 1.1754944e-38, %v4151
      %v4153 = vsel %vm4150, %v4152, %v4148
      %v4154 = vmul.f32 1.0, %v4153
      %v4155 = vrcp.pop %v3969
      %v4156 = vmul.f32 %v3969, %v4155
      %v4157 = vsub.f32 1.0, %v4156
      %v4158 = vmul.f32 %v4155, %v4157
      %v4159 = vadd.f32 %v4155, %v4158
      %vm4160 = vweird.f32 %v3969
      %vm4161 = vweird.f32 %v4155
      %vm4162 = vmor %vm4160, %vm4161
      %v4163 = vsel %vm4162, %v4155, %v4159
      %v4164 = vand.u32 2147483647, %v3969
      %vm4165 = vcmp.eq.f32.partialorder %v4164, 8.507059e+37
      %v4166 = vand.u32 %v3969, 2147483648
      %v4167 = vor.u32 1.1754944e-38, %v4166
      %v4168 = vsel %vm4165, %v4167, %v4163
      %v4169 = vmul.f32 1.0, %v4168
      %v4170 = vrcp.pop %v3970
      %v4171 = vmul.f32 %v3970, %v4170
      %v4172 = vsub.f32 1.0, %v4171
      %v4173 = vmul.f32 %v4170, %v4172
      %v4174 = vadd.f32 %v4170, %v4173
      %vm4175 = vweird.f32 %v3970
      %vm4176 = vweird.f32 %v4170
      %vm4177 = vmor %vm4175, %vm4176
      %v4178 = vsel %vm4177, %v4170, %v4174
      %v4179 = vand.u32 2147483647, %v3970
      %vm4180 = vcmp.eq.f32.partialorder %v4179, 8.507059e+37
      %v4181 = vand.u32 %v3970, 2147483648
      %v4182 = vor.u32 1.1754944e-38, %v4181
      %v4183 = vsel %vm4180, %v4182, %v4178
      %v4184 = vmul.f32 1.0, %v4183
      %v4185 = vrcp.pop %v3971
      %v4186 = vmul.f32 %v3971, %v4185
      %v4187 = vsub.f32 1.0, %v4186
      %v4188 = vmul.f32 %v4185, %v4187
      %v4189 = vadd.f32 %v4185, %v4188
      %vm4190 = vweird.f32 %v3971
      %vm4191 = vweird.f32 %v4185
      %vm4192 = vmor %vm4190, %vm4191
      %v4193 = vsel %vm4192, %v4185, %v4189
      %v4194 = vand.u32 2147483647, %v3971
      %vm4195 = vcmp.eq.f32.partialorder %v4194, 8.507059e+37
      %v4196 = vand.u32 %v3971, 2147483648
      %v4197 = vor.u32 1.1754944e-38, %v4196
      %v4198 = vsel %vm4195, %v4197, %v4193
      %v4199 = vmul.f32 1.0, %v4198
      %v4200 = vrcp.pop %v3972
      %v4201 = vmul.f32 %v3972, %v4200
      %v4202 = vsub.f32 1.0, %v4201
      %v4203 = vmul.f32 %v4200, %v4202
      %v4204 = vadd.f32 %v4200, %v4203
      %vm4205 = vweird.f32 %v3972
      %vm4206 = vweird.f32 %v4200
      %vm4207 = vmor %vm4205, %vm4206
      %v4208 = vsel %vm4207, %v4200, %v4204
      %v4209 = vand.u32 2147483647, %v3972
      %vm4210 = vcmp.eq.f32.partialorder %v4209, 8.507059e+37
      %v4211 = vand.u32 %v3972, 2147483648
      %v4212 = vor.u32 1.1754944e-38, %v4211
      %v4213 = vsel %vm4210, %v4212, %v4208
      %v4214 = vmul.f32 1.0, %v4213
      %v4215 = vrcp.pop %v3973
      %v4216 = vmul.f32 %v3973, %v4215
      %v4217 = vsub.f32 1.0, %v4216
      %v4218 = vmul.f32 %v4215, %v4217
      %v4219 = vadd.f32 %v4215, %v4218
      %vm4220 = vweird.f32 %v3973
      %vm4221 = vweird.f32 %v4215
      %vm4222 = vmor %vm4220, %vm4221
      %v4223 = vsel %vm4222, %v4215, %v4219
      %v4224 = vand.u32 2147483647, %v3973
      %vm4225 = vcmp.eq.f32.partialorder %v4224, 8.507059e+37
      %v4226 = vand.u32 %v3973, 2147483648
      %v4227 = vor.u32 1.1754944e-38, %v4226
      %v4228 = vsel %vm4225, %v4227, %v4223
      %v4229 = vmul.f32 1.0, %v4228
      %v4230 = vrcp.pop %v3974
      %v4231 = vmul.f32 %v3974, %v4230
      %v4232 = vsub.f32 1.0, %v4231
      %v4233 = vmul.f32 %v4230, %v4232
      %v4234 = vadd.f32 %v4230, %v4233
      %vm4235 = vweird.f32 %v3974
      %vm4236 = vweird.f32 %v4230
      %vm4237 = vmor %vm4235, %vm4236
      %v4238 = vsel %vm4237, %v4230, %v4234
      %v4239 = vand.u32 2147483647, %v3974
      %vm4240 = vcmp.eq.f32.partialorder %v4239, 8.507059e+37
      %v4241 = vand.u32 %v3974, 2147483648
      %v4242 = vor.u32 1.1754944e-38, %v4241
      %v4243 = vsel %vm4240, %v4242, %v4238
      %v4244 = vmul.f32 1.0, %v4243
      %v4245 = vrcp.pop %v3975
      %v4246 = vmul.f32 %v3975, %v4245
      %v4247 = vsub.f32 1.0, %v4246
      %v4248 = vmul.f32 %v4245, %v4247
      %v4249 = vadd.f32 %v4245, %v4248
      %vm4250 = vweird.f32 %v3975
      %vm4251 = vweird.f32 %v4245
      %vm4252 = vmor %vm4250, %vm4251
      %v4253 = vsel %vm4252, %v4245, %v4249
      %v4254 = vand.u32 2147483647, %v3975
      %vm4255 = vcmp.eq.f32.partialorder %v4254, 8.507059e+37
      %v4256 = vand.u32 %v3975, 2147483648
      %v4257 = vor.u32 1.1754944e-38, %v4256
      %v4258 = vsel %vm4255, %v4257, %v4253
      %v4259 = vmul.f32 1.0, %v4258
      %v4260 = vrcp.pop %v3976
      %v4261 = vmul.f32 %v3976, %v4260
      %v4262 = vsub.f32 1.0, %v4261
      %v4263 = vmul.f32 %v4260, %v4262
      %v4264 = vadd.f32 %v4260, %v4263
      %vm4265 = vweird.f32 %v3976
      %vm4266 = vweird.f32 %v4260
      %vm4267 = vmor %vm4265, %vm4266
      %v4268 = vsel %vm4267, %v4260, %v4264
      %v4269 = vand.u32 2147483647, %v3976
      %vm4270 = vcmp.eq.f32.partialorder %v4269, 8.507059e+37
      %v4271 = vand.u32 %v3976, 2147483648
      %v4272 = vor.u32 1.1754944e-38, %v4271
      %v4273 = vsel %vm4270, %v4272, %v4268
      %v4274 = vmul.f32 1.0, %v4273
      %v4275 = vrcp.pop %v3977
      %v4276 = vmul.f32 %v3977, %v4275
      %v4277 = vsub.f32 1.0, %v4276
      %v4278 = vmul.f32 %v4275, %v4277
      %v4279 = vadd.f32 %v4275, %v4278
      %vm4280 = vweird.f32 %v3977
      %vm4281 = vweird.f32 %v4275
      %vm4282 = vmor %vm4280, %vm4281
      %v4283 = vsel %vm4282, %v4275, %v4279
      %v4284 = vand.u32 2147483647, %v3977
      %vm4285 = vcmp.eq.f32.partialorder %v4284, 8.507059e+37
      %v4286 = vand.u32 %v3977, 2147483648
      %v4287 = vor.u32 1.1754944e-38, %v4286
      %v4288 = vsel %vm4285, %v4287, %v4283
      %v4289 = vmul.f32 1.0, %v4288
      %v4290 = vrcp.pop %v3978
      %v4291 = vmul.f32 %v3978, %v4290
      %v4292 = vsub.f32 1.0, %v4291
      %v4293 = vmul.f32 %v4290, %v4292
      %v4294 = vadd.f32 %v4290, %v4293
      %vm4295 = vweird.f32 %v3978
      %vm4296 = vweird.f32 %v4290
      %vm4297 = vmor %vm4295, %vm4296
      %v4298 = vsel %vm4297, %v4290, %v4294
      %v4299 = vand.u32 2147483647, %v3978
      %vm4300 = vcmp.eq.f32.partialorder %v4299, 8.507059e+37
      %v4301 = vand.u32 %v3978, 2147483648
      %v4302 = vor.u32 1.1754944e-38, %v4301
      %v4303 = vsel %vm4300, %v4302, %v4298
      %v4304 = vmul.f32 1.0, %v4303
      %v4305 = vrcp.pop %v3979
      %v4306 = vmul.f32 %v3979, %v4305
      %v4307 = vsub.f32 1.0, %v4306
      %v4308 = vmul.f32 %v4305, %v4307
      %v4309 = vadd.f32 %v4305, %v4308
      %vm4310 = vweird.f32 %v3979
      %vm4311 = vweird.f32 %v4305
      %vm4312 = vmor %vm4310, %vm4311
      %v4313 = vsel %vm4312, %v4305, %v4309
      %v4314 = vand.u32 2147483647, %v3979
      %vm4315 = vcmp.eq.f32.partialorder %v4314, 8.507059e+37
      %v4316 = vand.u32 %v3979, 2147483648
      %v4317 = vor.u32 1.1754944e-38, %v4316
      %v4318 = vsel %vm4315, %v4317, %v4313
      %v4319 = vmul.f32 1.0, %v4318
      %v4320 = vrcp.pop %v3980
      %v4321 = vmul.f32 %v3980, %v4320
      %v4322 = vsub.f32 1.0, %v4321
      %v4323 = vmul.f32 %v4320, %v4322
      %v4324 = vadd.f32 %v4320, %v4323
      %vm4325 = vweird.f32 %v3980
      %vm4326 = vweird.f32 %v4320
      %vm4327 = vmor %vm4325, %vm4326
      %v4328 = vsel %vm4327, %v4320, %v4324
      %v4329 = vand.u32 2147483647, %v3980
      %vm4330 = vcmp.eq.f32.partialorder %v4329, 8.507059e+37
      %v4331 = vand.u32 %v3980, 2147483648
      %v4332 = vor.u32 1.1754944e-38, %v4331
      %v4333 = vsel %vm4330, %v4332, %v4328
      %v4334 = vmul.f32 1.0, %v4333
      %v4335 = vrcp.pop %v3981
      %v4336 = vmul.f32 %v3981, %v4335
      %v4337 = vsub.f32 1.0, %v4336
      %v4338 = vmul.f32 %v4335, %v4337
      %v4339 = vadd.f32 %v4335, %v4338
      %vm4340 = vweird.f32 %v3981
      %vm4341 = vweird.f32 %v4335
      %vm4342 = vmor %vm4340, %vm4341
      %v4343 = vsel %vm4342, %v4335, %v4339
      %v4344 = vand.u32 2147483647, %v3981
      %vm4345 = vcmp.eq.f32.partialorder %v4344, 8.507059e+37
      %v4346 = vand.u32 %v3981, 2147483648
      %v4347 = vor.u32 1.1754944e-38, %v4346
      %v4348 = vsel %vm4345, %v4347, %v4343
      %v4349 = vmul.f32 1.0, %v4348
      %v4350 = vrcp.pop %v3982
      %v4351 = vmul.f32 %v3982, %v4350
      %v4352 = vsub.f32 1.0, %v4351
      %v4353 = vmul.f32 %v4350, %v4352
      %v4354 = vadd.f32 %v4350, %v4353
      %vm4355 = vweird.f32 %v3982
      %vm4356 = vweird.f32 %v4350
      %vm4357 = vmor %vm4355, %vm4356
      %v4358 = vsel %vm4357, %v4350, %v4354
      %v4359 = vand.u32 2147483647, %v3982
      %vm4360 = vcmp.eq.f32.partialorder %v4359, 8.507059e+37
      %v4361 = vand.u32 %v3982, 2147483648
      %v4362 = vor.u32 1.1754944e-38, %v4361
      %v4363 = vsel %vm4360, %v4362, %v4358
      %v4364 = vmul.f32 1.0, %v4363
      %v4365 = vrcp.pop %v3983
      %v4366 = vmul.f32 %v3983, %v4365
      %v4367 = vsub.f32 1.0, %v4366
      %v4368 = vmul.f32 %v4365, %v4367
      %v4369 = vadd.f32 %v4365, %v4368
      %vm4370 = vweird.f32 %v3983
      %vm4371 = vweird.f32 %v4365
      %vm4372 = vmor %vm4370, %vm4371
      %v4373 = vsel %vm4372, %v4365, %v4369
      %v4374 = vand.u32 2147483647, %v3983
      %vm4375 = vcmp.eq.f32.partialorder %v4374, 8.507059e+37
      %v4376 = vand.u32 %v3983, 2147483648
      %v4377 = vor.u32 1.1754944e-38, %v4376
      %v4378 = vsel %vm4375, %v4377, %v4373
      %v4379 = vmul.f32 1.0, %v4378
      %v4380 = vrcp.pop %v3984
      %v4381 = vmul.f32 %v3984, %v4380
      %v4382 = vsub.f32 1.0, %v4381
      %v4383 = vmul.f32 %v4380, %v4382
      %v4384 = vadd.f32 %v4380, %v4383
      %vm4385 = vweird.f32 %v3984
      %vm4386 = vweird.f32 %v4380
      %vm4387 = vmor %vm4385, %vm4386
      %v4388 = vsel %vm4387, %v4380, %v4384
      %v4389 = vand.u32 2147483647, %v3984
      %vm4390 = vcmp.eq.f32.partialorder %v4389, 8.507059e+37
      %v4391 = vand.u32 %v3984, 2147483648
      %v4392 = vor.u32 1.1754944e-38, %v4391
      %v4393 = vsel %vm4390, %v4392, %v4388
      %v4394 = vmul.f32 1.0, %v4393
      %v4395 = vrcp.pop %v3985
      %v4396 = vmul.f32 %v3985, %v4395
      %v4397 = vsub.f32 1.0, %v4396
      %v4398 = vmul.f32 %v4395, %v4397
      %v4399 = vadd.f32 %v4395, %v4398
      %vm4400 = vweird.f32 %v3985
      %vm4401 = vweird.f32 %v4395
      %vm4402 = vmor %vm4400, %vm4401
      %v4403 = vsel %vm4402, %v4395, %v4399
      %v4404 = vand.u32 2147483647, %v3985
      %vm4405 = vcmp.eq.f32.partialorder %v4404, 8.507059e+37
      %v4406 = vand.u32 %v3985, 2147483648
      %v4407 = vor.u32 1.1754944e-38, %v4406
      %v4408 = vsel %vm4405, %v4407, %v4403
      %v4409 = vmul.f32 1.0, %v4408
      %v4410 = vrcp.pop %v3986
      %v4411 = vmul.f32 %v3986, %v4410
      %v4412 = vsub.f32 1.0, %v4411
      %v4413 = vmul.f32 %v4410, %v4412
      %v4414 = vadd.f32 %v4410, %v4413
      %vm4415 = vweird.f32 %v3986
      %vm4416 = vweird.f32 %v4410
      %vm4417 = vmor %vm4415, %vm4416
      %v4418 = vsel %vm4417, %v4410, %v4414
      %v4419 = vand.u32 2147483647, %v3986
      %vm4420 = vcmp.eq.f32.partialorder %v4419, 8.507059e+37
      %v4421 = vand.u32 %v3986, 2147483648
      %v4422 = vor.u32 1.1754944e-38, %v4421
      %v4423 = vsel %vm4420, %v4422, %v4418
      %v4424 = vmul.f32 1.0, %v4423
      %v4425 = vrcp.pop %v3987
      %v4426 = vmul.f32 %v3987, %v4425
      %v4427 = vsub.f32 1.0, %v4426
      %v4428 = vmul.f32 %v4425, %v4427
      %v4429 = vadd.f32 %v4425, %v4428
      %vm4430 = vweird.f32 %v3987
      %vm4431 = vweird.f32 %v4425
      %vm4432 = vmor %vm4430, %vm4431
      %v4433 = vsel %vm4432, %v4425, %v4429
      %v4434 = vand.u32 2147483647, %v3987
      %vm4435 = vcmp.eq.f32.partialorder %v4434, 8.507059e+37
      %v4436 = vand.u32 %v3987, 2147483648
      %v4437 = vor.u32 1.1754944e-38, %v4436
      %v4438 = vsel %vm4435, %v4437, %v4433
      %v4439 = vmul.f32 1.0, %v4438
      %v4440 = vrcp.pop %v3988
      %v4441 = vmul.f32 %v3988, %v4440
      %v4442 = vsub.f32 1.0, %v4441
      %v4443 = vmul.f32 %v4440, %v4442
      %v4444 = vadd.f32 %v4440, %v4443
      %vm4445 = vweird.f32 %v3988
      %vm4446 = vweird.f32 %v4440
      %vm4447 = vmor %vm4445, %vm4446
      %v4448 = vsel %vm4447, %v4440, %v4444
      %v4449 = vand.u32 2147483647, %v3988
      %vm4450 = vcmp.eq.f32.partialorder %v4449, 8.507059e+37
      %v4451 = vand.u32 %v3988, 2147483648
      %v4452 = vor.u32 1.1754944e-38, %v4451
      %v4453 = vsel %vm4450, %v4452, %v4448
      %v4454 = vmul.f32 1.0, %v4453
      %v4455 = vrcp.pop %v3989
      %v4456 = vmul.f32 %v3989, %v4455
      %v4457 = vsub.f32 1.0, %v4456
      %v4458 = vmul.f32 %v4455, %v4457
      %v4459 = vadd.f32 %v4455, %v4458
      %vm4460 = vweird.f32 %v3989
      %vm4461 = vweird.f32 %v4455
      %vm4462 = vmor %vm4460, %vm4461
      %v4463 = vsel %vm4462, %v4455, %v4459
      %v4464 = vand.u32 2147483647, %v3989
      %vm4465 = vcmp.eq.f32.partialorder %v4464, 8.507059e+37
      %v4466 = vand.u32 %v3989, 2147483648
      %v4467 = vor.u32 1.1754944e-38, %v4466
      %v4468 = vsel %vm4465, %v4467, %v4463
      %v4469 = vmul.f32 1.0, %v4468
      %vm4470 = vcmask 23552
      %4471 = vst.msk [vmem:[%s278] sm:$0xff] %vm4470, %v4004
      %4472 = vst.msk [vmem:[%s278 + $0x8] sm:$0xff] %vm4470, %v4019
      %4473 = vst.msk [vmem:[%s278 + $0x10] sm:$0xff] %vm4470, %v4034
      %4474 = vst.msk [vmem:[%s278 + $0x18] sm:$0xff] %vm4470, %v4049
      %4475 = vst.msk [vmem:[%s278 + $0x20] sm:$0xff] %vm4470, %v4064
      %4476 = vst.msk [vmem:[%s278 + $0x28] sm:$0xff] %vm4470, %v4079
      %4477 = vst.msk [vmem:[%s278 + $0x30] sm:$0xff] %vm4470, %v4094
      %4478 = vst.msk [vmem:[%s278 + $0x38] sm:$0xff] %vm4470, %v4109
      %4479 = vst.msk [vmem:[%s278 + $0x40] sm:$0xff] %vm4470, %v4124
      %4480 = vst.msk [vmem:[%s278 + $0x48] sm:$0xff] %vm4470, %v4139
      %4481 = vst.msk [vmem:[%s278 + $0x50] sm:$0xff] %vm4470, %v4154
      %4482 = vst.msk [vmem:[%s278 + $0x58] sm:$0xff] %vm4470, %v4169
      %4483 = vst.msk [vmem:[%s278 + $0x60] sm:$0xff] %vm4470, %v4184
      %4484 = vst.msk [vmem:[%s278 + $0x68] sm:$0xff] %vm4470, %v4199
      %4485 = vst.msk [vmem:[%s278 + $0x70] sm:$0xff] %vm4470, %v4214
      %4486 = vst.msk [vmem:[%s278 + $0x78] sm:$0xff] %vm4470, %v4229
      %4487 = vst.msk [vmem:[%s278 + $0x80] sm:$0xff] %vm4470, %v4244
      %4488 = vst.msk [vmem:[%s278 + $0x88] sm:$0xff] %vm4470, %v4259
      %4489 = vst.msk [vmem:[%s278 + $0x90] sm:$0xff] %vm4470, %v4274
      %4490 = vst.msk [vmem:[%s278 + $0x98] sm:$0xff] %vm4470, %v4289
      %4491 = vst.msk [vmem:[%s278 + $0xa0] sm:$0xff] %vm4470, %v4304
      %4492 = vst.msk [vmem:[%s278 + $0xa8] sm:$0xff] %vm4470, %v4319
      %4493 = vst.msk [vmem:[%s278 + $0xb0] sm:$0xff] %vm4470, %v4334
      %4494 = vst.msk [vmem:[%s278 + $0xb8] sm:$0xff] %vm4470, %v4349
      %4495 = vst.msk [vmem:[%s278 + $0xc0] sm:$0xff] %vm4470, %v4364
      %4496 = vst.msk [vmem:[%s278 + $0xc8] sm:$0xff] %vm4470, %v4379
      %4497 = vst.msk [vmem:[%s278 + $0xd0] sm:$0xff] %vm4470, %v4394
      %4498 = vst.msk [vmem:[%s278 + $0xd8] sm:$0xff] %vm4470, %v4409
      %4499 = vst.msk [vmem:[%s278 + $0xe0] sm:$0xff] %vm4470, %v4424
      %4500 = vst.msk [vmem:[%s278 + $0xe8] sm:$0xff] %vm4470, %v4439
      %4501 = vst.msk [vmem:[%s278 + $0xf0] sm:$0xff] %vm4470, %v4454
      %4502 = vst.msk [vmem:[%s278 + $0xf8] sm:$0xff] %vm4470, %v4469
      %p4503 = scmp.lt.s32.totalorder %s18, 1
      %s4504 = scalar_select %p4503, %s18, 1
      %s4505 = smul.addr %s4504, 32
      %s4506 = smul.addr %s4505, 8
      %s4507 = scalar_lea.vmem %s7, %s4506
      // Predicated region
      $region49: #{my_model_forward.1} parent=47 // pred_check
        %p4508 = pneg %p188
      $region50: #{my_model_forward.1} parent=47 // pred_check_branch
        %4510 = sbr.rel (%p4508) target = $region52
      $region51: #{my_model_forward.1} parent=47 // pred_region
        _
      $region52: #{my_model_forward.1} parent=47 // pred_fallthru
        _
    $region48: #{my_model_forward.1} parent=5 // pred_fallthru
      _
    %p4511 = scmp.le.s32.totalorder 2, %s13
    // Predicated region
    $region53: #{my_model_forward.1} parent=5 // pred_check
      %p4512 = pneg %p4511
    $region54: #{my_model_forward.1} parent=5 // pred_check_branch
      %4514 = sbr.rel (%p4512) target = $region56
    $region55: #{my_model_forward.1} parent=5 // pred_region
      %s4515 = ssub.s32 %s13, 2
      // Predicated region
      $region57: #{my_model_forward.1} parent=55 // pred_check
        %p4516 = pneg %p194
      $region58: #{my_model_forward.1} parent=55 // pred_check_branch
        %4518 = sbr.rel (%p4516) target = $region60
      $region59: #{my_model_forward.1} parent=55 // pred_region
        %p4519 = scmp.lt.s32.totalorder %s19, 1
        %s4520 = scalar_select %p4519, %s19, 1
        %s4521 = smul.addr %s4520, 32
        %s4522 = smul.addr %s4521, 8
        %s4523 = scalar_lea.vmem %s7, %s4522
      $region60: #{my_model_forward.1} parent=55 // pred_fallthru
        _
    $region56: #{my_model_forward.1} parent=5 // pred_fallthru
      _
  $region6: #{my_model_forward.1} parent=0 // loop_footer
    %s17 = sadd.s32 1, %s13
  $region7: #{my_model_forward.1} parent=0 // loop_footer_branch
    %12 = sbr.rel target = $region3
  $region8: #{my_model_forward.1} parent=0 // loop_exit
    _

</llo_original>
